<compile_context>
chip_gen: v6e
topology: v6e:2x2x1
jax: 0.10.0
libtpu: 0.0.40
codegen_flags: <defaults>
</compile_context>

<pallas_src>
import functools

import jax
import jax.numpy as jnp
from jax.experimental import pallas as pl
from jax.experimental.pallas import tpu as pltpu


# --------------------------------------------------------------------------- tiling

_TM = 256           # output row tile
_TN = 256           # output col tile
_TK = 512           # K tile (reduction)
_VMEM_LIMIT = 32 * 1024 * 1024   # explicit; tiles budgeted for v7x (64 MiB physical)


def _pick_tk(K):
    """Largest K tile <= _TK that divides K exactly (multiple of 128), else full K."""
    if K <= _TK:
        return K
    for t in range(_TK, 127, -128):
        if K % t == 0:
            return t
    return K  # single K block (no split) -- always exact


def _row_tile(M):
    return M if M <= _TM else _TM


def _col_tile(N):
    return N if N <= _TN else _TN


# --------------------------------------------------------------------------- kernels

def _ln_matmul_kernel(x_ref, g_ref, b_ref, w_ref, bias_ref, o_ref, *, act):
    """out = act(LayerNorm(x) @ w + bias).  LN in f32, matmul in bf16 on the MXU."""
    x = x_ref[...].astype(jnp.float32)                             # (tm, K)
    mu = jnp.mean(x, axis=-1, keepdims=True)
    var = jnp.mean((x - mu) ** 2, axis=-1, keepdims=True)
    xn = (x - mu) * jax.lax.rsqrt(var + 1e-5)
    xn = xn * g_ref[...].astype(jnp.float32) + b_ref[...].astype(jnp.float32)
    y = jnp.dot(xn.astype(jnp.bfloat16), w_ref[...],
                preferred_element_type=jnp.float32)
    y = y + bias_ref[...].astype(jnp.float32)
    if act == "quickgelu":
        y = y * jax.nn.sigmoid(1.702 * y)
    o_ref[...] = y.astype(o_ref.dtype)


def ln_matmul(x, g, beta, w, bias, act="none"):
    """x: (M, K) bf16, w: (K, N) bf16 -> (M, N) bf16 with fused pre-LayerNorm."""
    M, K = x.shape
    N = w.shape[1]
    tm, tn = _row_tile(M), _col_tile(N)
    return pl.pallas_call(
        functools.partial(_ln_matmul_kernel, act=act),
        out_shape=jax.ShapeDtypeStruct((M, N), x.dtype),
        grid=(pl.cdiv(M, tm), pl.cdiv(N, tn)),
        in_specs=[
            pl.BlockSpec((tm, K), lambda i, j: (i, 0)),
            pl.BlockSpec((1, K), lambda i, j: (0, 0)),
            pl.BlockSpec((1, K), lambda i, j: (0, 0)),
            pl.BlockSpec((K, tn), lambda i, j: (0, j)),
            pl.BlockSpec((1, tn), lambda i, j: (0, j)),
        ],
        out_specs=pl.BlockSpec((tm, tn), lambda i, j: (i, j)),
        compiler_params=pltpu.CompilerParams(
            dimension_semantics=("parallel", "parallel"),
            vmem_limit_bytes=_VMEM_LIMIT),
    )(x, g.reshape(1, K), beta.reshape(1, K), w, bias.reshape(1, N))


def _matmul_kernel(x_ref, w_ref, bias_ref, *rest, act, has_res):
    """K-tiled matmul with f32 accumulator; bias/act/residual fused in finalize."""
    if has_res:
        res_ref, o_ref, acc_ref = rest
    else:
        o_ref, acc_ref = rest
    k = pl.program_id(2)

    @pl.when(k == 0)
    def _():
        acc_ref[...] = jnp.zeros_like(acc_ref)

    acc_ref[...] += jnp.dot(x_ref[...], w_ref[...],
                            preferred_element_type=jnp.float32)

    @pl.when(k == pl.num_programs(2) - 1)
    def _():
        y = acc_ref[...] + bias_ref[...].astype(jnp.float32)
        if act == "quickgelu":
            y = y * jax.nn.sigmoid(1.702 * y)
        if has_res:
            y = y + res_ref[...].astype(jnp.float32)
        o_ref[...] = y.astype(o_ref.dtype)


def matmul(x, w, bias, residual=None, act="none"):
    """out = act(x @ w + bias) [+ residual].  x/w bf16, f32 accumulation."""
    M, K = x.shape
    N = w.shape[1]
    tm, tn, tk = _row_tile(M), _col_tile(N), _pick_tk(K)
    in_specs = [
        pl.BlockSpec((tm, tk), lambda i, j, k: (i, k)),
        pl.BlockSpec((tk, tn), lambda i, j, k: (k, j)),
        pl.BlockSpec((1, tn), lambda i, j, k: (0, j)),
    ]
    args = [x, w, bias.reshape(1, N)]
    if residual is not None:
        in_specs.append(pl.BlockSpec((tm, tn), lambda i, j, k: (i, j)))
        args.append(residual)
    return pl.pallas_call(
        functools.partial(_matmul_kernel, act=act, has_res=residual is not None),
        out_shape=jax.ShapeDtypeStruct((M, N), x.dtype),
        grid=(pl.cdiv(M, tm), pl.cdiv(N, tn), pl.cdiv(K, tk)),
        in_specs=in_specs,
        out_specs=pl.BlockSpec((tm, tn), lambda i, j, k: (i, j)),
        scratch_shapes=[pltpu.VMEM((tm, tn), jnp.float32)],
        compiler_params=pltpu.CompilerParams(
            dimension_semantics=("parallel", "parallel", "arbitrary"),
            vmem_limit_bytes=_VMEM_LIMIT),
    )(*args)


def _attn_kernel(qkv_ref, o_ref, *, n_head, d_model, scale):
    """One batch element per grid step.  Heads are contiguous column blocks of the
    fused (L, 3D) QKV slab; the output is a single lane-dense (L, D) tile."""
    slab = qkv_ref[0]                                               # (L, 3D) bf16
    dh = d_model // n_head
    outs = []
    for h in range(n_head):
        q = slab[:, h * dh:(h + 1) * dh]
        k = slab[:, d_model + h * dh: d_model + (h + 1) * dh]
        v = slab[:, 2 * d_model + h * dh: 2 * d_model + (h + 1) * dh]
        s = jax.lax.dot_general(q, k, (((1,), (1,)), ((), ())),
                                preferred_element_type=jnp.float32) * scale
        s = s - jnp.max(s, axis=-1, keepdims=True)
        p = jnp.exp(s)
        p = p * pl.reciprocal(jnp.sum(p, axis=-1, keepdims=True), approx=True)
        o = jnp.dot(p.astype(slab.dtype), v, preferred_element_type=jnp.float32)
        outs.append(o)
    o_ref[0] = jnp.concatenate(outs, axis=-1).astype(o_ref.dtype)


def attention(qkv, n_head):
    """qkv: (B, L, 3D) bf16 -> (B, L, D) bf16.  softmax((q/sqrt(dh)) k^T) v per head."""
    B, L, threeD = qkv.shape
    D = threeD // 3
    scale = (D // n_head) ** -0.5
    return pl.pallas_call(
        functools.partial(_attn_kernel, n_head=n_head, d_model=D, scale=scale),
        out_shape=jax.ShapeDtypeStruct((B, L, D), qkv.dtype),
        grid=(B,),
        in_specs=[pl.BlockSpec((1, L, threeD), lambda i: (i, 0, 0))],
        out_specs=pl.BlockSpec((1, L, D), lambda i: (i, 0, 0)),
        compiler_params=pltpu.CompilerParams(
            dimension_semantics=("parallel",),
            vmem_limit_bytes=_VMEM_LIMIT),
    )(qkv)


# ---------------------------------------------------------------------- forward pass

def cross_frame_block(x, p, n_head, T):
    """x: (BT, L, D) batch-first bf16 -> (BT, L, D)."""
    BT, L, D = x.shape
    b = BT // T

    # 1) message token from the CLS token of every frame
    cls = x[:, 0, :]                                               # (BT, D)
    msg0 = matmul(cls, p["msg_fc_w"], p["msg_fc_b"])               # (BT, D)
    qkv_m = ln_matmul(msg0, p["msg_ln_g"], p["msg_ln_b"],
                      p["msg_attn"]["qkv_w"], p["msg_attn"]["qkv_b"])      # (BT, 3D)
    attn_m = attention(qkv_m.reshape(b, T, 3 * D), n_head)         # (b, T, D)
    msg = matmul(attn_m.reshape(BT, D), p["msg_attn"]["out_w"],
                 p["msg_attn"]["out_b"], residual=msg0)            # (BT, D)

    # 2) append message token, self-attend over L+1 tokens (residual fused in out-proj)
    x5 = jnp.concatenate([x, msg[:, None, :]], axis=1)             # (BT, L+1, D)
    x5f = x5.reshape(BT * (L + 1), D)
    qkv = ln_matmul(x5f, p["ln1_g"], p["ln1_b"],
                    p["attn"]["qkv_w"], p["attn"]["qkv_b"])        # (M, 3D)
    attn_o = attention(qkv.reshape(BT, L + 1, 3 * D), n_head)      # (BT, L+1, D)
    x5f = matmul(attn_o.reshape(BT * (L + 1), D), p["attn"]["out_w"],
                 p["attn"]["out_b"], residual=x5f)                 # (M, D)
    xo = x5f.reshape(BT, L + 1, D)[:, :L, :]                       # drop message token
    xof = xo.reshape(BT * L, D)

    # 3) MLP: ln_2 + c_fc + QuickGELU fused; residual fused into c_proj
    h = ln_matmul(xof, p["ln2_g"], p["ln2_b"], p["fc_w"], p["fc_b"], act="quickgelu")
    out = matmul(h, p["proj_w"], p["proj_b"], residual=xof)
    return out.reshape(BT, L, D)


def transformer_forward(x, params, *, n_head, T):
    """x: (l, b*T, d) float32 (PyTorch seq-first layout). Returns same shape/dtype."""
    # TODO(synk): attn_mask is None in the X-CLIP visual transformer; masked attention
    # is not implemented.  grad_checkpointing is training-only (no forward effect).
    L, BT, D = x.shape
    xb = x.astype(jnp.bfloat16).transpose(1, 0, 2)                 # (BT, L, D) batch-first
    for lp in params["layers"]:
        xb = cross_frame_block(xb, lp, n_head, T)
    return xb.transpose(1, 0, 2).astype(x.dtype)


# --------------------------------------------------------------------------- params

def _mha_params(key, d, wdtype=jnp.bfloat16):
    k1, k2, k3, k4 = jax.random.split(key, 4)
    return {
        "qkv_w": (0.02 * jax.random.normal(k1, (d, 3 * d), jnp.float32)).astype(wdtype),
        "qkv_b": 0.02 * jax.random.normal(k2, (3 * d,), jnp.float32),
        "out_w": (0.02 * jax.random.normal(k3, (d, d), jnp.float32)).astype(wdtype),
        "out_b": 0.02 * jax.random.normal(k4, (d,), jnp.float32),
    }


def _layer_params(key, d, wdtype=jnp.bfloat16):
    ks = jax.random.split(key, 12)
    return {
        "msg_fc_w": (0.02 * jax.random.normal(ks[0], (d, d), jnp.float32)).astype(wdtype),
        "msg_fc_b": 0.02 * jax.random.normal(ks[1], (d,), jnp.float32),
        "msg_ln_g": 1.0 + 0.1 * jax.random.normal(ks[2], (d,), jnp.float32),
        "msg_ln_b": 0.1 * jax.random.normal(ks[3], (d,), jnp.float32),
        "msg_attn": _mha_params(ks[4], d, wdtype),
        "attn": _mha_params(ks[5], d, wdtype),
        "ln1_g": 1.0 + 0.1 * jax.random.normal(ks[6], (d,), jnp.float32),
        "ln1_b": 0.1 * jax.random.normal(ks[7], (d,), jnp.float32),
        "ln2_g": 1.0 + 0.1 * jax.random.normal(ks[8], (d,), jnp.float32),
        "ln2_b": 0.1 * jax.random.normal(ks[9], (d,), jnp.float32),
        "fc_w": (0.02 * jax.random.normal(ks[10], (d, 4 * d), jnp.float32)).astype(wdtype),
        "fc_b": jnp.zeros((4 * d,), jnp.float32),
        "proj_w": (0.02 * jax.random.normal(ks[11], (4 * d, d), jnp.float32)).astype(wdtype),
        "proj_b": jnp.zeros((d,), jnp.float32),
    }


def init_params(key, *, width, layers):
    keys = jax.random.split(key, layers)
    return {"layers": [_layer_params(k, width) for k in keys]}


# --------------------------------------------------------- pure-JAX f32 reference

def _f32(a):
    return a.astype(jnp.float32)


def _ln_ref(x, g, b):
    mu = x.mean(-1, keepdims=True)
    var = ((x - mu) ** 2).mean(-1, keepdims=True)
    return (x - mu) * jax.lax.rsqrt(var + 1e-5) * g + b


def _mha_ref(x, p, n_head):
    L, N, D = x.shape
    dh = D // n_head
    qkv = x @ _f32(p["qkv_w"]) + p["qkv_b"]
    q, k, v = jnp.split(qkv, 3, axis=-1)

    def heads(t):
        return t.reshape(L, N, n_head, dh).transpose(1, 2, 0, 3)   # (N, H, L, dh)

    q = heads(q) * dh ** -0.5
    k, v = heads(k), heads(v)
    s = jnp.einsum("nhqd,nhkd->nhqk", q, k)
    p_att = jax.nn.softmax(s, axis=-1)
    o = jnp.einsum("nhqk,nhkd->nhqd", p_att, v)
    o = o.transpose(2, 0, 1, 3).reshape(L, N, D)
    return o @ _f32(p["out_w"]) + p["out_b"]


def _block_ref(x, p, n_head, T):
    l, bt, d = x.shape
    b = bt // T
    x4 = x.reshape(l, b, T, d)
    msg = x4[0] @ _f32(p["msg_fc_w"]) + p["msg_fc_b"]              # (b, T, d)
    msg = msg.transpose(1, 0, 2)                                   # (T, b, d)
    mln = _ln_ref(msg, p["msg_ln_g"], p["msg_ln_b"])
    msg = msg + _mha_ref(mln, p["msg_attn"], n_head)
    msg = msg.transpose(1, 0, 2)[None]                             # (1, b, T, d)
    x5 = jnp.concatenate([x4, msg], axis=0).reshape(l + 1, bt, d)
    x5 = x5 + _mha_ref(_ln_ref(x5, p["ln1_g"], p["ln1_b"]), p["attn"], n_head)
    xo = x5[:l]
    h = _ln_ref(xo, p["ln2_g"], p["ln2_b"]) @ _f32(p["fc_w"]) + p["fc_b"]
    h = h * jax.nn.sigmoid(1.702 * h)
    return xo + h @ _f32(p["proj_w"]) + p["proj_b"]


def transformer_reference(x, params, *, n_head, T):
    y = x.astype(jnp.float32)
    for p in params["layers"]:
        y = _block_ref(y, p, n_head, T)
    return y


# --------------------------------------------------------------------------- main

if __name__ == "__main__":
    width, heads, layers = 64, 4, 2
    T, b, seq = 2, 2, 8
    bt = b * T

    key = jax.random.PRNGKey(0)
    kx, kp = jax.random.split(key)
    x = jax.random.normal(kx, (seq, bt, width), jnp.float32)       # (l, b*T, d)
    params = init_params(kp, width=width, layers=layers)

    fwd = jax.jit(functools.partial(transformer_forward, n_head=heads, T=T))
    out = fwd(x, params)
    jax.block_until_ready(out)

    assert out.shape == (seq, bt, width)
    assert bool(jnp.isfinite(out).all())

    ref = transformer_reference(x, params, n_head=heads, T=T)
    err = float(jnp.max(jnp.abs(out - ref)))
    assert err < 1e-1, f"max abs err vs f32 reference: {err}"      # bf16 MXU drift

    print("KERNEL_OK")
</pallas_src>

<mosaic_0001>
module attributes {stable_mosaic.version = 11 : i64} {
  func.func @_ln_matmul_kernel(%arg0: i32, %arg1: i32, %arg2: memref<4x64xbf16, #tpu.memory_space<vmem>>, %arg3: memref<1x64xf32, #tpu.memory_space<vmem>>, %arg4: memref<1x64xf32, #tpu.memory_space<vmem>>, %arg5: memref<64x192xbf16, #tpu.memory_space<vmem>>, %arg6: memref<1x192xf32, #tpu.memory_space<vmem>>, %arg7: memref<4x192xbf16, #tpu.memory_space<vmem>>) attributes {dimension_semantics = [#tpu.dimension_semantics<parallel>, #tpu.dimension_semantics<parallel>], iteration_bounds = array<i64: 1, 1>, scalar_prefetch = 0 : i64, scratch_operands = 0 : i64, tpu.core_type = #tpu.core_type<tc>, window_params = [{transform_indices = @transform_0, window_bounds = array<i64: 4, 64>}, {pipeline_mode = #tpu.pipeline_mode<synchronous>, transform_indices = @transform_1, window_bounds = array<i64: 1, 64>}, {pipeline_mode = #tpu.pipeline_mode<synchronous>, transform_indices = @transform_2, window_bounds = array<i64: 1, 64>}, {transform_indices = @transform_3, window_bounds = array<i64: 64, 192>}, {transform_indices = @transform_4, window_bounds = array<i64: 1, 192>}, {transform_indices = @transform_5, window_bounds = array<i64: 4, 192>}]} {
    %c0 = arith.constant 0 : index
    %c0_0 = arith.constant 0 : index
    %0 = vector.load %arg2[%c0, %c0_0] : memref<4x64xbf16, #tpu.memory_space<vmem>>, vector<4x64xbf16>
    %1 = arith.extf %0 : vector<4x64xbf16> to vector<4x64xf32>
    %cst = arith.constant dense<0.000000e+00> : vector<4xf32>
    %2 = vector.multi_reduction <add>, %1, %cst [1] : vector<4x64xf32> to vector<4xf32>
    %3 = vector.shape_cast %2 : vector<4xf32> to vector<4x1xf32>
    %cst_1 = arith.constant 6.400000e+01 : f32
    %4 = vector.broadcast %cst_1 : f32 to vector<4x1xf32>
    %5 = arith.divf %3, %4 : vector<4x1xf32>
    %6 = vector.broadcast %5 : vector<4x1xf32> to vector<4x64xf32>
    %7 = arith.subf %1, %6 : vector<4x64xf32>
    %8 = arith.mulf %7, %7 : vector<4x64xf32>
    %cst_2 = arith.constant dense<0.000000e+00> : vector<4xf32>
    %9 = vector.multi_reduction <add>, %8, %cst_2 [1] : vector<4x64xf32> to vector<4xf32>
    %10 = vector.shape_cast %9 : vector<4xf32> to vector<4x1xf32>
    %cst_3 = arith.constant 6.400000e+01 : f32
    %11 = vector.broadcast %cst_3 : f32 to vector<4x1xf32>
    %12 = arith.divf %10, %11 : vector<4x1xf32>
    %13 = vector.broadcast %5 : vector<4x1xf32> to vector<4x64xf32>
    %14 = arith.subf %1, %13 : vector<4x64xf32>
    %cst_4 = arith.constant 9.99999974E-6 : f32
    %15 = vector.broadcast %cst_4 : f32 to vector<4x1xf32>
    %16 = arith.addf %12, %15 : vector<4x1xf32>
    %17 = math.rsqrt %16 : vector<4x1xf32>
    %18 = vector.broadcast %17 : vector<4x1xf32> to vector<4x64xf32>
    %19 = arith.mulf %14, %18 : vector<4x64xf32>
    %c0_5 = arith.constant 0 : index
    %c0_6 = arith.constant 0 : index
    %20 = vector.load %arg3[%c0_5, %c0_6] : memref<1x64xf32, #tpu.memory_space<vmem>>, vector<1x64xf32>
    %21 = vector.broadcast %20 : vector<1x64xf32> to vector<4x64xf32>
    %22 = arith.mulf %19, %21 : vector<4x64xf32>
    %c0_7 = arith.constant 0 : index
    %c0_8 = arith.constant 0 : index
    %23 = vector.load %arg4[%c0_7, %c0_8] : memref<1x64xf32, #tpu.memory_space<vmem>>, vector<1x64xf32>
    %24 = vector.broadcast %23 : vector<1x64xf32> to vector<4x64xf32>
    %25 = arith.addf %22, %24 : vector<4x64xf32>
    %26 = arith.truncf %25 : vector<4x64xf32> to vector<4x64xbf16>
    %c0_9 = arith.constant 0 : index
    %c0_10 = arith.constant 0 : index
    %27 = vector.load %arg5[%c0_9, %c0_10] : memref<64x192xbf16, #tpu.memory_space<vmem>>, vector<64x192xbf16>
    %cst_11 = arith.constant dense<0.000000e+00> : vector<4x192xf32>
    %28 = tpu.matmul %26, %27, %cst_11 {dimension_numbers = #tpu.dot_dimension_numbers<[1], [0], [0], [1], [0, 0, 1, 1], [], []>} : vector<4x64xbf16>, vector<64x192xbf16>, vector<4x192xf32> -> vector<4x192xf32>
    %c0_12 = arith.constant 0 : index
    %c0_13 = arith.constant 0 : index
    %29 = vector.load %arg6[%c0_12, %c0_13] : memref<1x192xf32, #tpu.memory_space<vmem>>, vector<1x192xf32>
    %30 = vector.broadcast %29 : vector<1x192xf32> to vector<4x192xf32>
    %31 = arith.addf %28, %30 : vector<4x192xf32>
    %32 = arith.truncf %31 : vector<4x192xf32> to vector<4x192xbf16>
    %c0_14 = arith.constant 0 : index
    %c0_15 = arith.constant 0 : index
    %33 = vector.load %arg7[%c0_14, %c0_15] : memref<4x192xbf16, #tpu.memory_space<vmem>>, vector<4x192xbf16>
    tpu.vector_store %arg7[%c0_14, %c0_15], %32 {strides = array<i32>} : memref<4x192xbf16, #tpu.memory_space<vmem>>, vector<4x192xbf16>,
    return
  }
  func.func @transform_0(%arg0: i32, %arg1: i32) -> (i32, i32) {
    %c0_i32 = arith.constant 0 : i32
    %c0_i32_0 = arith.constant 0 : i32
    return %arg0, %c0_i32 : i32, i32
  }
  func.func @transform_1(%arg0: i32, %arg1: i32) -> (i32, i32) {
    %c0_i32 = arith.constant 0 : i32
    %c0_i32_0 = arith.constant 0 : i32
    %c0_i32_1 = arith.constant 0 : i32
    return %c0_i32, %c0_i32_0 : i32, i32
  }
  func.func @transform_2(%arg0: i32, %arg1: i32) -> (i32, i32) {
    %c0_i32 = arith.constant 0 : i32
    %c0_i32_0 = arith.constant 0 : i32
    %c0_i32_1 = arith.constant 0 : i32
    return %c0_i32, %c0_i32_0 : i32, i32
  }
  func.func @transform_3(%arg0: i32, %arg1: i32) -> (i32, i32) {
    %c0_i32 = arith.constant 0 : i32
    %c0_i32_0 = arith.constant 0 : i32
    return %c0_i32, %arg1 : i32, i32
  }
  func.func @transform_4(%arg0: i32, %arg1: i32) -> (i32, i32) {
    %c0_i32 = arith.constant 0 : i32
    %c0_i32_0 = arith.constant 0 : i32
    return %c0_i32, %arg1 : i32, i32
  }
  func.func @transform_5(%arg0: i32, %arg1: i32) -> (i32, i32) {
    %c0_i32 = arith.constant 0 : i32
    return %arg0, %arg1 : i32, i32
  }
}

module attributes {stable_mosaic.version = 11 : i64} {
  func.func @_matmul_kernel(%arg0: i32, %arg1: i32, %arg2: i32, %arg3: memref<4x64xbf16, #tpu.memory_space<vmem>>, %arg4: memref<64x64xbf16, #tpu.memory_space<vmem>>, %arg5: memref<1x64xf32, #tpu.memory_space<vmem>>, %arg6: memref<4x64xbf16, #tpu.memory_space<vmem>>, %arg7: memref<4x64xf32, #tpu.memory_space<vmem>>) attributes {dimension_semantics = [#tpu.dimension_semantics<parallel>, #tpu.dimension_semantics<parallel>, #tpu.dimension_semantics<arbitrary>], iteration_bounds = array<i64: 1, 1, 1>, scalar_prefetch = 0 : i64, scratch_operands = 1 : i64, tpu.core_type = #tpu.core_type<tc>, window_params = [{transform_indices = @transform_0, window_bounds = array<i64: 4, 64>}, {transform_indices = @transform_1, window_bounds = array<i64: 64, 64>}, {transform_indices = @transform_2, window_bounds = array<i64: 1, 64>}, {transform_indices = @transform_3, window_bounds = array<i64: 4, 64>}]} {
    %c0_i32 = arith.constant 0 : i32
    %0 = arith.cmpi eq, %arg2, %c0_i32 : i32
    %1 = arith.extui %0 : i1 to i32
    %c0_i32_0 = arith.constant 0 : i32
    %2 = arith.cmpi ne, %1, %c0_i32_0 : i32
    scf.if %2 {
      %cst_10 = arith.constant 0.000000e+00 : f32
      %12 = vector.broadcast %cst_10 : f32 to vector<4x64xf32>
      %c0_11 = arith.constant 0 : index
      %c0_12 = arith.constant 0 : index
      %13 = vector.load %arg7[%c0_11, %c0_12] : memref<4x64xf32, #tpu.memory_space<vmem>>, vector<4x64xf32>
      tpu.vector_store %arg7[%c0_11, %c0_12], %12 {strides = array<i32>} : memref<4x64xf32, #tpu.memory_space<vmem>>, vector<4x64xf32>,
    } else {
    }
    %c0 = arith.constant 0 : index
    %c0_1 = arith.constant 0 : index
    %3 = vector.load %arg7[%c0, %c0_1] : memref<4x64xf32, #tpu.memory_space<vmem>>, vector<4x64xf32>
    %c0_2 = arith.constant 0 : index
    %c0_3 = arith.constant 0 : index
    %4 = vector.load %arg3[%c0_2, %c0_3] : memref<4x64xbf16, #tpu.memory_space<vmem>>, vector<4x64xbf16>
    %c0_4 = arith.constant 0 : index
    %c0_5 = arith.constant 0 : index
    %5 = vector.load %arg4[%c0_4, %c0_5] : memref<64x64xbf16, #tpu.memory_space<vmem>>, vector<64x64xbf16>
    %cst = arith.constant dense<0.000000e+00> : vector<4x64xf32>
    %6 = tpu.matmul %4, %5, %cst {dimension_numbers = #tpu.dot_dimension_numbers<[1], [0], [0], [1], [0, 0, 1, 1], [], []>} : vector<4x64xbf16>, vector<64x64xbf16>, vector<4x64xf32> -> vector<4x64xf32>
    %7 = arith.addf %3, %6 : vector<4x64xf32>
    %c0_6 = arith.constant 0 : index
    %c0_7 = arith.constant 0 : index
    %8 = vector.load %arg7[%c0_6, %c0_7] : memref<4x64xf32, #tpu.memory_space<vmem>>, vector<4x64xf32>
    tpu.vector_store %arg7[%c0_6, %c0_7], %7 {strides = array<i32>} : memref<4x64xf32, #tpu.memory_space<vmem>>, vector<4x64xf32>,
    %c0_i32_8 = arith.constant 0 : i32
    %9 = arith.cmpi eq, %arg2, %c0_i32_8 : i32
    %10 = arith.extui %9 : i1 to i32
    %c0_i32_9 = arith.constant 0 : i32
    %11 = arith.cmpi ne, %10, %c0_i32_9 : i32
    scf.if %11 {
      %c0_10 = arith.constant 0 : index
      %c0_11 = arith.constant 0 : index
      %12 = vector.load %arg7[%c0_10, %c0_11] : memref<4x64xf32, #tpu.memory_space<vmem>>, vector<4x64xf32>
      %c0_12 = arith.constant 0 : index
      %c0_13 = arith.constant 0 : index
      %13 = vector.load %arg5[%c0_12, %c0_13] : memref<1x64xf32, #tpu.memory_space<vmem>>, vector<1x64xf32>
      %14 = vector.broadcast %13 : vector<1x64xf32> to vector<4x64xf32>
      %15 = arith.addf %12, %14 : vector<4x64xf32>
      %16 = arith.truncf %15 : vector<4x64xf32> to vector<4x64xbf16>
      %c0_14 = arith.constant 0 : index
      %c0_15 = arith.constant 0 : index
      %17 = vector.load %arg6[%c0_14, %c0_15] : memref<4x64xbf16, #tpu.memory_space<vmem>>, vector<4x64xbf16>
      tpu.vector_store %arg6[%c0_14, %c0_15], %16 {strides = array<i32>} : memref<4x64xbf16, #tpu.memory_space<vmem>>, vector<4x64xbf16>,
    } else {
    }
    return
  }
  func.func @transform_0(%arg0: i32, %arg1: i32, %arg2: i32) -> (i32, i32) {
    %c0_i32 = arith.constant 0 : i32
    return %arg0, %arg2 : i32, i32
  }
  func.func @transform_1(%arg0: i32, %arg1: i32, %arg2: i32) -> (i32, i32) {
    %c0_i32 = arith.constant 0 : i32
    return %arg2, %arg1 : i32, i32
  }
  func.func @transform_2(%arg0: i32, %arg1: i32, %arg2: i32) -> (i32, i32) {
    %c0_i32 = arith.constant 0 : i32
    %c0_i32_0 = arith.constant 0 : i32
    return %c0_i32, %arg1 : i32, i32
  }
  func.func @transform_3(%arg0: i32, %arg1: i32, %arg2: i32) -> (i32, i32) {
    %c0_i32 = arith.constant 0 : i32
    return %arg0, %arg1 : i32, i32
  }
}

module attributes {stable_mosaic.version = 11 : i64} {
  func.func @_attn_kernel(%arg0: i32, %arg1: memref<1x2x192xbf16, #tpu.memory_space<vmem>>, %arg2: memref<1x2x64xbf16, #tpu.memory_space<vmem>>) attributes {dimension_semantics = [#tpu.dimension_semantics<parallel>], iteration_bounds = array<i64: 2>, scalar_prefetch = 0 : i64, scratch_operands = 0 : i64, tpu.core_type = #tpu.core_type<tc>, window_params = [{transform_indices = @transform_0, window_bounds = array<i64: 1, 2, 192>}, {transform_indices = @transform_1, window_bounds = array<i64: 1, 2, 64>}]} {
    %c0 = arith.constant 0 : index
    %c0_0 = arith.constant 0 : index
    %c0_1 = arith.constant 0 : index
    %0 = vector.load %arg1[%c0, %c0_0, %c0_1] : memref<1x2x192xbf16, #tpu.memory_space<vmem>>, vector<1x2x192xbf16>
    %1 = vector.shape_cast %0 : vector<1x2x192xbf16> to vector<2x192xbf16>
    %2 = vector.extract_strided_slice %1 {offsets = [0, 0], sizes = [2, 16], strides = [1, 1]} : vector<2x192xbf16> to vector<2x16xbf16>
    %3 = vector.extract_strided_slice %1 {offsets = [0, 64], sizes = [2, 16], strides = [1, 1]} : vector<2x192xbf16> to vector<2x16xbf16>
    %4 = vector.extract_strided_slice %1 {offsets = [0, 128], sizes = [2, 16], strides = [1, 1]} : vector<2x192xbf16> to vector<2x16xbf16>
    %cst = arith.constant dense<0.000000e+00> : vector<2x2xf32>
    %5 = tpu.matmul %2, %3, %cst {dimension_numbers = #tpu.dot_dimension_numbers<[1], [1], [0], [0], [0, 0, 1, 0], [], []>} : vector<2x16xbf16>, vector<2x16xbf16>, vector<2x2xf32> -> vector<2x2xf32>
    %cst_2 = arith.constant 2.500000e-01 : f32
    %6 = vector.broadcast %cst_2 : f32 to vector<2x2xf32>
    %7 = arith.mulf %5, %6 : vector<2x2xf32>
    %cst_3 = arith.constant dense<0xFF800000> : vector<2xf32>
    %8 = vector.multi_reduction <maximumf>, %7, %cst_3 [1] : vector<2x2xf32> to vector<2xf32>
    %9 = vector.shape_cast %8 : vector<2xf32> to vector<2x1xf32>
    %10 = vector.broadcast %9 : vector<2x1xf32> to vector<2x2xf32>
    %11 = arith.subf %7, %10 : vector<2x2xf32>
    %12 = math.exp %11 : vector<2x2xf32>
    %cst_4 = arith.constant dense<0.000000e+00> : vector<2xf32>
    %13 = vector.multi_reduction <add>, %12, %cst_4 [1] : vector<2x2xf32> to vector<2xf32>
    %14 = vector.shape_cast %13 : vector<2xf32> to vector<2x1xf32>
    %15 = tpu.reciprocal %14 {approx = true} : vector<2x1xf32> -> vector<2x1xf32>
    %16 = vector.broadcast %15 : vector<2x1xf32> to vector<2x2xf32>
    %17 = arith.mulf %12, %16 : vector<2x2xf32>
    %18 = arith.truncf %17 : vector<2x2xf32> to vector<2x2xbf16>
    %cst_5 = arith.constant dense<0.000000e+00> : vector<2x16xf32>
    %19 = tpu.matmul %18, %4, %cst_5 {dimension_numbers = #tpu.dot_dimension_numbers<[1], [0], [0], [1], [0, 0, 1, 1], [], []>} : vector<2x2xbf16>, vector<2x16xbf16>, vector<2x16xf32> -> vector<2x16xf32>
    %20 = vector.extract_strided_slice %1 {offsets = [0, 16], sizes = [2, 16], strides = [1, 1]} : vector<2x192xbf16> to vector<2x16xbf16>
    %21 = vector.extract_strided_slice %1 {offsets = [0, 80], sizes = [2, 16], strides = [1, 1]} : vector<2x192xbf16> to vector<2x16xbf16>
    %22 = vector.extract_strided_slice %1 {offsets = [0, 144], sizes = [2, 16], strides = [1, 1]} : vector<2x192xbf16> to vector<2x16xbf16>
    %cst_6 = arith.constant dense<0.000000e+00> : vector<2x2xf32>
    %23 = tpu.matmul %20, %21, %cst_6 {dimension_numbers = #tpu.dot_dimension_numbers<[1], [1], [0], [0], [0, 0, 1, 0], [], []>} : vector<2x16xbf16>, vector<2x16xbf16>, vector<2x2xf32> -> vector<2x2xf32>
    %cst_7 = arith.constant 2.500000e-01 : f32
    %24 = vector.broadcast %cst_7 : f32 to vector<2x2xf32>
    %25 = arith.mulf %23, %24 : vector<2x2xf32>
    %cst_8 = arith.constant dense<0xFF800000> : vector<2xf32>
    %26 = vector.multi_reduction <maximumf>, %25, %cst_8 [1] : vector<2x2xf32> to vector<2xf32>
    %27 = vector.shape_cast %26 : vector<2xf32> to vector<2x1xf32>
    %28 = vector.broadcast %27 : vector<2x1xf32> to vector<2x2xf32>
    %29 = arith.subf %25, %28 : vector<2x2xf32>
    %30 = math.exp %29 : vector<2x2xf32>
    %cst_9 = arith.constant dense<0.000000e+00> : vector<2xf32>
    %31 = vector.multi_reduction <add>, %30, %cst_9 [1] : vector<2x2xf32> to vector<2xf32>
    %32 = vector.shape_cast %31 : vector<2xf32> to vector<2x1xf32>
    %33 = tpu.reciprocal %32 {approx = true} : vector<2x1xf32> -> vector<2x1xf32>
    %34 = vector.broadcast %33 : vector<2x1xf32> to vector<2x2xf32>
    %35 = arith.mulf %30, %34 : vector<2x2xf32>
    %36 = arith.truncf %35 : vector<2x2xf32> to vector<2x2xbf16>
    %cst_10 = arith.constant dense<0.000000e+00> : vector<2x16xf32>
    %37 = tpu.matmul %36, %22, %cst_10 {dimension_numbers = #tpu.dot_dimension_numbers<[1], [0], [0], [1], [0, 0, 1, 1], [], []>} : vector<2x2xbf16>, vector<2x16xbf16>, vector<2x16xf32> -> vector<2x16xf32>
    %38 = vector.extract_strided_slice %1 {offsets = [0, 32], sizes = [2, 16], strides = [1, 1]} : vector<2x192xbf16> to vector<2x16xbf16>
    %39 = vector.extract_strided_slice %1 {offsets = [0, 96], sizes = [2, 16], strides = [1, 1]} : vector<2x192xbf16> to vector<2x16xbf16>
    %40 = vector.extract_strided_slice %1 {offsets = [0, 160], sizes = [2, 16], strides = [1, 1]} : vector<2x192xbf16> to vector<2x16xbf16>
    %cst_11 = arith.constant dense<0.000000e+00> : vector<2x2xf32>
    %41 = tpu.matmul %38, %39, %cst_11 {dimension_numbers = #tpu.dot_dimension_numbers<[1], [1], [0], [0], [0, 0, 1, 0], [], []>} : vector<2x16xbf16>, vector<2x16xbf16>, vector<2x2xf32> -> vector<2x2xf32>
    %cst_12 = arith.constant 2.500000e-01 : f32
    %42 = vector.broadcast %cst_12 : f32 to vector<2x2xf32>
    %43 = arith.mulf %41, %42 : vector<2x2xf32>
    %cst_13 = arith.constant dense<0xFF800000> : vector<2xf32>
    %44 = vector.multi_reduction <maximumf>, %43, %cst_13 [1] : vector<2x2xf32> to vector<2xf32>
    %45 = vector.shape_cast %44 : vector<2xf32> to vector<2x1xf32>
    %46 = vector.broadcast %45 : vector<2x1xf32> to vector<2x2xf32>
    %47 = arith.subf %43, %46 : vector<2x2xf32>
    %48 = math.exp %47 : vector<2x2xf32>
    %cst_14 = arith.constant dense<0.000000e+00> : vector<2xf32>
    %49 = vector.multi_reduction <add>, %48, %cst_14 [1] : vector<2x2xf32> to vector<2xf32>
    %50 = vector.shape_cast %49 : vector<2xf32> to vector<2x1xf32>
    %51 = tpu.reciprocal %50 {approx = true} : vector<2x1xf32> -> vector<2x1xf32>
    %52 = vector.broadcast %51 : vector<2x1xf32> to vector<2x2xf32>
    %53 = arith.mulf %48, %52 : vector<2x2xf32>
    %54 = arith.truncf %53 : vector<2x2xf32> to vector<2x2xbf16>
    %cst_15 = arith.constant dense<0.000000e+00> : vector<2x16xf32>
    %55 = tpu.matmul %54, %40, %cst_15 {dimension_numbers = #tpu.dot_dimension_numbers<[1], [0], [0], [1], [0, 0, 1, 1], [], []>} : vector<2x2xbf16>, vector<2x16xbf16>, vector<2x16xf32> -> vector<2x16xf32>
    %56 = vector.extract_strided_slice %1 {offsets = [0, 48], sizes = [2, 16], strides = [1, 1]} : vector<2x192xbf16> to vector<2x16xbf16>
    %57 = vector.extract_strided_slice %1 {offsets = [0, 112], sizes = [2, 16], strides = [1, 1]} : vector<2x192xbf16> to vector<2x16xbf16>
    %58 = vector.extract_strided_slice %1 {offsets = [0, 176], sizes = [2, 16], strides = [1, 1]} : vector<2x192xbf16> to vector<2x16xbf16>
    %cst_16 = arith.constant dense<0.000000e+00> : vector<2x2xf32>
    %59 = tpu.matmul %56, %57, %cst_16 {dimension_numbers = #tpu.dot_dimension_numbers<[1], [1], [0], [0], [0, 0, 1, 0], [], []>} : vector<2x16xbf16>, vector<2x16xbf16>, vector<2x2xf32> -> vector<2x2xf32>
    %cst_17 = arith.constant 2.500000e-01 : f32
    %60 = vector.broadcast %cst_17 : f32 to vector<2x2xf32>
    %61 = arith.mulf %59, %60 : vector<2x2xf32>
    %cst_18 = arith.constant dense<0xFF800000> : vector<2xf32>
    %62 = vector.multi_reduction <maximumf>, %61, %cst_18 [1] : vector<2x2xf32> to vector<2xf32>
    %63 = vector.shape_cast %62 : vector<2xf32> to vector<2x1xf32>
    %64 = vector.broadcast %63 : vector<2x1xf32> to vector<2x2xf32>
    %65 = arith.subf %61, %64 : vector<2x2xf32>
    %66 = math.exp %65 : vector<2x2xf32>
    %cst_19 = arith.constant dense<0.000000e+00> : vector<2xf32>
    %67 = vector.multi_reduction <add>, %66, %cst_19 [1] : vector<2x2xf32> to vector<2xf32>
    %68 = vector.shape_cast %67 : vector<2xf32> to vector<2x1xf32>
    %69 = tpu.reciprocal %68 {approx = true} : vector<2x1xf32> -> vector<2x1xf32>
    %70 = vector.broadcast %69 : vector<2x1xf32> to vector<2x2xf32>
    %71 = arith.mulf %66, %70 : vector<2x2xf32>
    %72 = arith.truncf %71 : vector<2x2xf32> to vector<2x2xbf16>
    %cst_20 = arith.constant dense<0.000000e+00> : vector<2x16xf32>
    %73 = tpu.matmul %72, %58, %cst_20 {dimension_numbers = #tpu.dot_dimension_numbers<[1], [0], [0], [1], [0, 0, 1, 1], [], []>} : vector<2x2xbf16>, vector<2x16xbf16>, vector<2x16xf32> -> vector<2x16xf32>
    %74 = tpu.concatenate %19, %37, %55, %73 in 1 : vector<2x16xf32>, vector<2x16xf32>, vector<2x16xf32>, vector<2x16xf32> -> vector<2x64xf32>
    %75 = arith.truncf %74 : vector<2x64xf32> to vector<2x64xbf16>
    %c0_21 = arith.constant 0 : index
    %c0_22 = arith.constant 0 : index
    %c0_23 = arith.constant 0 : index
    %76 = vector.load %arg2[%c0_21, %c0_22, %c0_23] : memref<1x2x64xbf16, #tpu.memory_space<vmem>>, vector<1x2x64xbf16>
    %77 = vector.shape_cast %76 : vector<1x2x64xbf16> to vector<2x64xbf16>
    %78 = vector.shape_cast %75 : vector<2x64xbf16> to vector<1x2x64xbf16>
    tpu.vector_store %arg2[%c0_21, %c0_22, %c0_23], %78 {strides = array<i32>} : memref<1x2x64xbf16, #tpu.memory_space<vmem>>, vector<1x2x64xbf16>,
    return
  }
  func.func @transform_0(%arg0: i32) -> (i32, i32, i32) {
    %c0_i32 = arith.constant 0 : i32
    %c0_i32_0 = arith.constant 0 : i32
    %c0_i32_1 = arith.constant 0 : i32
    return %arg0, %c0_i32, %c0_i32_0 : i32, i32, i32
  }
  func.func @transform_1(%arg0: i32) -> (i32, i32, i32) {
    %c0_i32 = arith.constant 0 : i32
    %c0_i32_0 = arith.constant 0 : i32
    %c0_i32_1 = arith.constant 0 : i32
    return %arg0, %c0_i32, %c0_i32_0 : i32, i32, i32
  }
}

module attributes {stable_mosaic.version = 11 : i64} {
  func.func @_matmul_kernel(%arg0: i32, %arg1: i32, %arg2: i32, %arg3: memref<4x64xbf16, #tpu.memory_space<vmem>>, %arg4: memref<64x64xbf16, #tpu.memory_space<vmem>>, %arg5: memref<1x64xf32, #tpu.memory_space<vmem>>, %arg6: memref<4x64xbf16, #tpu.memory_space<vmem>>, %arg7: memref<4x64xbf16, #tpu.memory_space<vmem>>, %arg8: memref<4x64xf32, #tpu.memory_space<vmem>>) attributes {dimension_semantics = [#tpu.dimension_semantics<parallel>, #tpu.dimension_semantics<parallel>, #tpu.dimension_semantics<arbitrary>], iteration_bounds = array<i64: 1, 1, 1>, scalar_prefetch = 0 : i64, scratch_operands = 1 : i64, tpu.core_type = #tpu.core_type<tc>, window_params = [{transform_indices = @transform_0, window_bounds = array<i64: 4, 64>}, {transform_indices = @transform_1, window_bounds = array<i64: 64, 64>}, {transform_indices = @transform_2, window_bounds = array<i64: 1, 64>}, {transform_indices = @transform_3, window_bounds = array<i64: 4, 64>}, {transform_indices = @transform_4, window_bounds = array<i64: 4, 64>}]} {
    %c0_i32 = arith.constant 0 : i32
    %0 = arith.cmpi eq, %arg2, %c0_i32 : i32
    %1 = arith.extui %0 : i1 to i32
    %c0_i32_0 = arith.constant 0 : i32
    %2 = arith.cmpi ne, %1, %c0_i32_0 : i32
    scf.if %2 {
      %cst_10 = arith.constant 0.000000e+00 : f32
      %12 = vector.broadcast %cst_10 : f32 to vector<4x64xf32>
      %c0_11 = arith.constant 0 : index
      %c0_12 = arith.constant 0 : index
      %13 = vector.load %arg8[%c0_11, %c0_12] : memref<4x64xf32, #tpu.memory_space<vmem>>, vector<4x64xf32>
      tpu.vector_store %arg8[%c0_11, %c0_12], %12 {strides = array<i32>} : memref<4x64xf32, #tpu.memory_space<vmem>>, vector<4x64xf32>,
    } else {
    }
    %c0 = arith.constant 0 : index
    %c0_1 = arith.constant 0 : index
    %3 = vector.load %arg8[%c0, %c0_1] : memref<4x64xf32, #tpu.memory_space<vmem>>, vector<4x64xf32>
    %c0_2 = arith.constant 0 : index
    %c0_3 = arith.constant 0 : index
    %4 = vector.load %arg3[%c0_2, %c0_3] : memref<4x64xbf16, #tpu.memory_space<vmem>>, vector<4x64xbf16>
    %c0_4 = arith.constant 0 : index
    %c0_5 = arith.constant 0 : index
    %5 = vector.load %arg4[%c0_4, %c0_5] : memref<64x64xbf16, #tpu.memory_space<vmem>>, vector<64x64xbf16>
    %cst = arith.constant dense<0.000000e+00> : vector<4x64xf32>
    %6 = tpu.matmul %4, %5, %cst {dimension_numbers = #tpu.dot_dimension_numbers<[1], [0], [0], [1], [0, 0, 1, 1], [], []>} : vector<4x64xbf16>, vector<64x64xbf16>, vector<4x64xf32> -> vector<4x64xf32>
    %7 = arith.addf %3, %6 : vector<4x64xf32>
    %c0_6 = arith.constant 0 : index
    %c0_7 = arith.constant 0 : index
    %8 = vector.load %arg8[%c0_6, %c0_7] : memref<4x64xf32, #tpu.memory_space<vmem>>, vector<4x64xf32>
    tpu.vector_store %arg8[%c0_6, %c0_7], %7 {strides = array<i32>} : memref<4x64xf32, #tpu.memory_space<vmem>>, vector<4x64xf32>,
    %c0_i32_8 = arith.constant 0 : i32
    %9 = arith.cmpi eq, %arg2, %c0_i32_8 : i32
    %10 = arith.extui %9 : i1 to i32
    %c0_i32_9 = arith.constant 0 : i32
    %11 = arith.cmpi ne, %10, %c0_i32_9 : i32
    scf.if %11 {
      %c0_10 = arith.constant 0 : index
      %c0_11 = arith.constant 0 : index
      %12 = vector.load %arg8[%c0_10, %c0_11] : memref<4x64xf32, #tpu.memory_space<vmem>>, vector<4x64xf32>
      %c0_12 = arith.constant 0 : index
      %c0_13 = arith.constant 0 : index
      %13 = vector.load %arg5[%c0_12, %c0_13] : memref<1x64xf32, #tpu.memory_space<vmem>>, vector<1x64xf32>
      %14 = vector.broadcast %13 : vector<1x64xf32> to vector<4x64xf32>
      %15 = arith.addf %12, %14 : vector<4x64xf32>
      %c0_14 = arith.constant 0 : index
      %c0_15 = arith.constant 0 : index
      %16 = vector.load %arg6[%c0_14, %c0_15] : memref<4x64xbf16, #tpu.memory_space<vmem>>, vector<4x64xbf16>
      %17 = arith.extf %16 : vector<4x64xbf16> to vector<4x64xf32>
      %18 = arith.addf %15, %17 : vector<4x64xf32>
      %19 = arith.truncf %18 : vector<4x64xf32> to vector<4x64xbf16>
      %c0_16 = arith.constant 0 : index
      %c0_17 = arith.constant 0 : index
      %20 = vector.load %arg7[%c0_16, %c0_17] : memref<4x64xbf16, #tpu.memory_space<vmem>>, vector<4x64xbf16>
      tpu.vector_store %arg7[%c0_16, %c0_17], %19 {strides = array<i32>} : memref<4x64xbf16, #tpu.memory_space<vmem>>, vector<4x64xbf16>,
    } else {
    }
    return
  }
  func.func @transform_0(%arg0: i32, %arg1: i32, %arg2: i32) -> (i32, i32) {
    %c0_i32 = arith.constant 0 : i32
    return %arg0, %arg2 : i32, i32
  }
  func.func @transform_1(%arg0: i32, %arg1: i32, %arg2: i32) -> (i32, i32) {
    %c0_i32 = arith.constant 0 : i32
    return %arg2, %arg1 : i32, i32
  }
  func.func @transform_2(%arg0: i32, %arg1: i32, %arg2: i32) -> (i32, i32) {
    %c0_i32 = arith.constant 0 : i32
    %c0_i32_0 = arith.constant 0 : i32
    return %c0_i32, %arg1 : i32, i32
  }
  func.func @transform_3(%arg0: i32, %arg1: i32, %arg2: i32) -> (i32, i32) {
    %c0_i32 = arith.constant 0 : i32
    return %arg0, %arg1 : i32, i32
  }
  func.func @transform_4(%arg0: i32, %arg1: i32, %arg2: i32) -> (i32, i32) {
    %c0_i32 = arith.constant 0 : i32
    return %arg0, %arg1 : i32, i32
  }
}

module attributes {stable_mosaic.version = 11 : i64} {
  func.func @_ln_matmul_kernel(%arg0: i32, %arg1: i32, %arg2: memref<36x64xbf16, #tpu.memory_space<vmem>>, %arg3: memref<1x64xf32, #tpu.memory_space<vmem>>, %arg4: memref<1x64xf32, #tpu.memory_space<vmem>>, %arg5: memref<64x192xbf16, #tpu.memory_space<vmem>>, %arg6: memref<1x192xf32, #tpu.memory_space<vmem>>, %arg7: memref<36x192xbf16, #tpu.memory_space<vmem>>) attributes {dimension_semantics = [#tpu.dimension_semantics<parallel>, #tpu.dimension_semantics<parallel>], iteration_bounds = array<i64: 1, 1>, scalar_prefetch = 0 : i64, scratch_operands = 0 : i64, tpu.core_type = #tpu.core_type<tc>, window_params = [{transform_indices = @transform_0, window_bounds = array<i64: 36, 64>}, {pipeline_mode = #tpu.pipeline_mode<synchronous>, transform_indices = @transform_1, window_bounds = array<i64: 1, 64>}, {pipeline_mode = #tpu.pipeline_mode<synchronous>, transform_indices = @transform_2, window_bounds = array<i64: 1, 64>}, {transform_indices = @transform_3, window_bounds = array<i64: 64, 192>}, {transform_indices = @transform_4, window_bounds = array<i64: 1, 192>}, {transform_indices = @transform_5, window_bounds = array<i64: 36, 192>}]} {
    %c0 = arith.constant 0 : index
    %c0_0 = arith.constant 0 : index
    %0 = vector.load %arg2[%c0, %c0_0] : memref<36x64xbf16, #tpu.memory_space<vmem>>, vector<36x64xbf16>
    %1 = arith.extf %0 : vector<36x64xbf16> to vector<36x64xf32>
    %cst = arith.constant dense<0.000000e+00> : vector<36xf32>
    %2 = vector.multi_reduction <add>, %1, %cst [1] : vector<36x64xf32> to vector<36xf32>
    %3 = vector.shape_cast %2 : vector<36xf32> to vector<36x1xf32>
    %cst_1 = arith.constant 6.400000e+01 : f32
    %4 = vector.broadcast %cst_1 : f32 to vector<36x1xf32>
    %5 = arith.divf %3, %4 : vector<36x1xf32>
    %6 = vector.broadcast %5 : vector<36x1xf32> to vector<36x64xf32>
    %7 = arith.subf %1, %6 : vector<36x64xf32>
    %8 = arith.mulf %7, %7 : vector<36x64xf32>
    %cst_2 = arith.constant dense<0.000000e+00> : vector<36xf32>
    %9 = vector.multi_reduction <add>, %8, %cst_2 [1] : vector<36x64xf32> to vector<36xf32>
    %10 = vector.shape_cast %9 : vector<36xf32> to vector<36x1xf32>
    %cst_3 = arith.constant 6.400000e+01 : f32
    %11 = vector.broadcast %cst_3 : f32 to vector<36x1xf32>
    %12 = arith.divf %10, %11 : vector<36x1xf32>
    %13 = vector.broadcast %5 : vector<36x1xf32> to vector<36x64xf32>
    %14 = arith.subf %1, %13 : vector<36x64xf32>
    %cst_4 = arith.constant 9.99999974E-6 : f32
    %15 = vector.broadcast %cst_4 : f32 to vector<36x1xf32>
    %16 = arith.addf %12, %15 : vector<36x1xf32>
    %17 = math.rsqrt %16 : vector<36x1xf32>
    %18 = vector.broadcast %17 : vector<36x1xf32> to vector<36x64xf32>
    %19 = arith.mulf %14, %18 : vector<36x64xf32>
    %c0_5 = arith.constant 0 : index
    %c0_6 = arith.constant 0 : index
    %20 = vector.load %arg3[%c0_5, %c0_6] : memref<1x64xf32, #tpu.memory_space<vmem>>, vector<1x64xf32>
    %21 = vector.broadcast %20 : vector<1x64xf32> to vector<36x64xf32>
    %22 = arith.mulf %19, %21 : vector<36x64xf32>
    %c0_7 = arith.constant 0 : index
    %c0_8 = arith.constant 0 : index
    %23 = vector.load %arg4[%c0_7, %c0_8] : memref<1x64xf32, #tpu.memory_space<vmem>>, vector<1x64xf32>
    %24 = vector.broadcast %23 : vector<1x64xf32> to vector<36x64xf32>
    %25 = arith.addf %22, %24 : vector<36x64xf32>
    %26 = arith.truncf %25 : vector<36x64xf32> to vector<36x64xbf16>
    %c0_9 = arith.constant 0 : index
    %c0_10 = arith.constant 0 : index
    %27 = vector.load %arg5[%c0_9, %c0_10] : memref<64x192xbf16, #tpu.memory_space<vmem>>, vector<64x192xbf16>
    %cst_11 = arith.constant dense<0.000000e+00> : vector<36x192xf32>
    %28 = tpu.matmul %26, %27, %cst_11 {dimension_numbers = #tpu.dot_dimension_numbers<[1], [0], [0], [1], [0, 0, 1, 1], [], []>} : vector<36x64xbf16>, vector<64x192xbf16>, vector<36x192xf32> -> vector<36x192xf32>
    %c0_12 = arith.constant 0 : index
    %c0_13 = arith.constant 0 : index
    %29 = vector.load %arg6[%c0_12, %c0_13] : memref<1x192xf32, #tpu.memory_space<vmem>>, vector<1x192xf32>
    %30 = vector.broadcast %29 : vector<1x192xf32> to vector<36x192xf32>
    %31 = arith.addf %28, %30 : vector<36x192xf32>
    %32 = arith.truncf %31 : vector<36x192xf32> to vector<36x192xbf16>
    %c0_14 = arith.constant 0 : index
    %c0_15 = arith.constant 0 : index
    %33 = vector.load %arg7[%c0_14, %c0_15] : memref<36x192xbf16, #tpu.memory_space<vmem>>, vector<36x192xbf16>
    tpu.vector_store %arg7[%c0_14, %c0_15], %32 {strides = array<i32>} : memref<36x192xbf16, #tpu.memory_space<vmem>>, vector<36x192xbf16>,
    return
  }
  func.func @transform_0(%arg0: i32, %arg1: i32) -> (i32, i32) {
    %c0_i32 = arith.constant 0 : i32
    %c0_i32_0 = arith.constant 0 : i32
    return %arg0, %c0_i32 : i32, i32
  }
  func.func @transform_1(%arg0: i32, %arg1: i32) -> (i32, i32) {
    %c0_i32 = arith.constant 0 : i32
    %c0_i32_0 = arith.constant 0 : i32
    %c0_i32_1 = arith.constant 0 : i32
    return %c0_i32, %c0_i32_0 : i32, i32
  }
  func.func @transform_2(%arg0: i32, %arg1: i32) -> (i32, i32) {
    %c0_i32 = arith.constant 0 : i32
    %c0_i32_0 = arith.constant 0 : i32
    %c0_i32_1 = arith.constant 0 : i32
    return %c0_i32, %c0_i32_0 : i32, i32
  }
  func.func @transform_3(%arg0: i32, %arg1: i32) -> (i32, i32) {
    %c0_i32 = arith.constant 0 : i32
    %c0_i32_0 = arith.constant 0 : i32
    return %c0_i32, %arg1 : i32, i32
  }
  func.func @transform_4(%arg0: i32, %arg1: i32) -> (i32, i32) {
    %c0_i32 = arith.constant 0 : i32
    %c0_i32_0 = arith.constant 0 : i32
    return %c0_i32, %arg1 : i32, i32
  }
  func.func @transform_5(%arg0: i32, %arg1: i32) -> (i32, i32) {
    %c0_i32 = arith.constant 0 : i32
    return %arg0, %arg1 : i32, i32
  }
}

module attributes {stable_mosaic.version = 11 : i64} {
  func.func @_matmul_kernel(%arg0: i32, %arg1: i32, %arg2: i32, %arg3: memref<36x64xbf16, #tpu.memory_space<vmem>>, %arg4: memref<64x64xbf16, #tpu.memory_space<vmem>>, %arg5: memref<1x64xf32, #tpu.memory_space<vmem>>, %arg6: memref<36x64xbf16, #tpu.memory_space<vmem>>, %arg7: memref<36x64xbf16, #tpu.memory_space<vmem>>, %arg8: memref<36x64xf32, #tpu.memory_space<vmem>>) attributes {dimension_semantics = [#tpu.dimension_semantics<parallel>, #tpu.dimension_semantics<parallel>, #tpu.dimension_semantics<arbitrary>], iteration_bounds = array<i64: 1, 1, 1>, scalar_prefetch = 0 : i64, scratch_operands = 1 : i64, tpu.core_type = #tpu.core_type<tc>, window_params = [{transform_indices = @transform_0, window_bounds = array<i64: 36, 64>}, {transform_indices = @transform_1, window_bounds = array<i64: 64, 64>}, {transform_indices = @transform_2, window_bounds = array<i64: 1, 64>}, {transform_indices = @transform_3, window_bounds = array<i64: 36, 64>}, {transform_indices = @transform_4, window_bounds = array<i64: 36, 64>}]} {
    %c0_i32 = arith.constant 0 : i32
    %0 = arith.cmpi eq, %arg2, %c0_i32 : i32
    %1 = arith.extui %0 : i1 to i32
    %c0_i32_0 = arith.constant 0 : i32
    %2 = arith.cmpi ne, %1, %c0_i32_0 : i32
    scf.if %2 {
      %cst_10 = arith.constant 0.000000e+00 : f32
      %12 = vector.broadcast %cst_10 : f32 to vector<36x64xf32>
      %c0_11 = arith.constant 0 : index
      %c0_12 = arith.constant 0 : index
      %13 = vector.load %arg8[%c0_11, %c0_12] : memref<36x64xf32, #tpu.memory_space<vmem>>, vector<36x64xf32>
      tpu.vector_store %arg8[%c0_11, %c0_12], %12 {strides = array<i32>} : memref<36x64xf32, #tpu.memory_space<vmem>>, vector<36x64xf32>,
    } else {
    }
    %c0 = arith.constant 0 : index
    %c0_1 = arith.constant 0 : index
    %3 = vector.load %arg8[%c0, %c0_1] : memref<36x64xf32, #tpu.memory_space<vmem>>, vector<36x64xf32>
    %c0_2 = arith.constant 0 : index
    %c0_3 = arith.constant 0 : index
    %4 = vector.load %arg3[%c0_2, %c0_3] : memref<36x64xbf16, #tpu.memory_space<vmem>>, vector<36x64xbf16>
    %c0_4 = arith.constant 0 : index
    %c0_5 = arith.constant 0 : index
    %5 = vector.load %arg4[%c0_4, %c0_5] : memref<64x64xbf16, #tpu.memory_space<vmem>>, vector<64x64xbf16>
    %cst = arith.constant dense<0.000000e+00> : vector<36x64xf32>
    %6 = tpu.matmul %4, %5, %cst {dimension_numbers = #tpu.dot_dimension_numbers<[1], [0], [0], [1], [0, 0, 1, 1], [], []>} : vector<36x64xbf16>, vector<64x64xbf16>, vector<36x64xf32> -> vector<36x64xf32>
    %7 = arith.addf %3, %6 : vector<36x64xf32>
    %c0_6 = arith.constant 0 : index
    %c0_7 = arith.constant 0 : index
    %8 = vector.load %arg8[%c0_6, %c0_7] : memref<36x64xf32, #tpu.memory_space<vmem>>, vector<36x64xf32>
    tpu.vector_store %arg8[%c0_6, %c0_7], %7 {strides = array<i32>} : memref<36x64xf32, #tpu.memory_space<vmem>>, vector<36x64xf32>,
    %c0_i32_8 = arith.constant 0 : i32
    %9 = arith.cmpi eq, %arg2, %c0_i32_8 : i32
    %10 = arith.extui %9 : i1 to i32
    %c0_i32_9 = arith.constant 0 : i32
    %11 = arith.cmpi ne, %10, %c0_i32_9 : i32
    scf.if %11 {
      %c0_10 = arith.constant 0 : index
      %c0_11 = arith.constant 0 : index
      %12 = vector.load %arg8[%c0_10, %c0_11] : memref<36x64xf32, #tpu.memory_space<vmem>>, vector<36x64xf32>
      %c0_12 = arith.constant 0 : index
      %c0_13 = arith.constant 0 : index
      %13 = vector.load %arg5[%c0_12, %c0_13] : memref<1x64xf32, #tpu.memory_space<vmem>>, vector<1x64xf32>
      %14 = vector.broadcast %13 : vector<1x64xf32> to vector<36x64xf32>
      %15 = arith.addf %12, %14 : vector<36x64xf32>
      %c0_14 = arith.constant 0 : index
      %c0_15 = arith.constant 0 : index
      %16 = vector.load %arg6[%c0_14, %c0_15] : memref<36x64xbf16, #tpu.memory_space<vmem>>, vector<36x64xbf16>
      %17 = arith.extf %16 : vector<36x64xbf16> to vector<36x64xf32>
      %18 = arith.addf %15, %17 : vector<36x64xf32>
      %19 = arith.truncf %18 : vector<36x64xf32> to vector<36x64xbf16>
      %c0_16 = arith.constant 0 : index
      %c0_17 = arith.constant 0 : index
      %20 = vector.load %arg7[%c0_16, %c0_17] : memref<36x64xbf16, #tpu.memory_space<vmem>>, vector<36x64xbf16>
      tpu.vector_store %arg7[%c0_16, %c0_17], %19 {strides = array<i32>} : memref<36x64xbf16, #tpu.memory_space<vmem>>, vector<36x64xbf16>,
    } else {
    }
    return
  }
  func.func @transform_0(%arg0: i32, %arg1: i32, %arg2: i32) -> (i32, i32) {
    %c0_i32 = arith.constant 0 : i32
    return %arg0, %arg2 : i32, i32
  }
  func.func @transform_1(%arg0: i32, %arg1: i32, %arg2: i32) -> (i32, i32) {
    %c0_i32 = arith.constant 0 : i32
    return %arg2, %arg1 : i32, i32
  }
  func.func @transform_2(%arg0: i32, %arg1: i32, %arg2: i32) -> (i32, i32) {
    %c0_i32 = arith.constant 0 : i32
    %c0_i32_0 = arith.constant 0 : i32
    return %c0_i32, %arg1 : i32, i32
  }
  func.func @transform_3(%arg0: i32, %arg1: i32, %arg2: i32) -> (i32, i32) {
    %c0_i32 = arith.constant 0 : i32
    return %arg0, %arg1 : i32, i32
  }
  func.func @transform_4(%arg0: i32, %arg1: i32, %arg2: i32) -> (i32, i32) {
    %c0_i32 = arith.constant 0 : i32
    return %arg0, %arg1 : i32, i32
  }
}

module attributes {stable_mosaic.version = 11 : i64} {
  func.func @_attn_kernel(%arg0: i32, %arg1: memref<1x9x192xbf16, #tpu.memory_space<vmem>>, %arg2: memref<1x9x64xbf16, #tpu.memory_space<vmem>>) attributes {dimension_semantics = [#tpu.dimension_semantics<parallel>], iteration_bounds = array<i64: 4>, scalar_prefetch = 0 : i64, scratch_operands = 0 : i64, tpu.core_type = #tpu.core_type<tc>, window_params = [{transform_indices = @transform_0, window_bounds = array<i64: 1, 9, 192>}, {transform_indices = @transform_1, window_bounds = array<i64: 1, 9, 64>}]} {
    %c0 = arith.constant 0 : index
    %c0_0 = arith.constant 0 : index
    %c0_1 = arith.constant 0 : index
    %0 = vector.load %arg1[%c0, %c0_0, %c0_1] : memref<1x9x192xbf16, #tpu.memory_space<vmem>>, vector<1x9x192xbf16>
    %1 = vector.shape_cast %0 : vector<1x9x192xbf16> to vector<9x192xbf16>
    %2 = vector.extract_strided_slice %1 {offsets = [0, 0], sizes = [9, 16], strides = [1, 1]} : vector<9x192xbf16> to vector<9x16xbf16>
    %3 = vector.extract_strided_slice %1 {offsets = [0, 64], sizes = [9, 16], strides = [1, 1]} : vector<9x192xbf16> to vector<9x16xbf16>
    %4 = vector.extract_strided_slice %1 {offsets = [0, 128], sizes = [9, 16], strides = [1, 1]} : vector<9x192xbf16> to vector<9x16xbf16>
    %cst = arith.constant dense<0.000000e+00> : vector<9x9xf32>
    %5 = tpu.matmul %2, %3, %cst {dimension_numbers = #tpu.dot_dimension_numbers<[1], [1], [0], [0], [0, 0, 1, 0], [], []>} : vector<9x16xbf16>, vector<9x16xbf16>, vector<9x9xf32> -> vector<9x9xf32>
    %cst_2 = arith.constant 2.500000e-01 : f32
    %6 = vector.broadcast %cst_2 : f32 to vector<9x9xf32>
    %7 = arith.mulf %5, %6 : vector<9x9xf32>
    %cst_3 = arith.constant dense<0xFF800000> : vector<9xf32>
    %8 = vector.multi_reduction <maximumf>, %7, %cst_3 [1] : vector<9x9xf32> to vector<9xf32>
    %9 = vector.shape_cast %8 : vector<9xf32> to vector<9x1xf32>
    %10 = vector.broadcast %9 : vector<9x1xf32> to vector<9x9xf32>
    %11 = arith.subf %7, %10 : vector<9x9xf32>
    %12 = math.exp %11 : vector<9x9xf32>
    %cst_4 = arith.constant dense<0.000000e+00> : vector<9xf32>
    %13 = vector.multi_reduction <add>, %12, %cst_4 [1] : vector<9x9xf32> to vector<9xf32>
    %14 = vector.shape_cast %13 : vector<9xf32> to vector<9x1xf32>
    %15 = tpu.reciprocal %14 {approx = true} : vector<9x1xf32> -> vector<9x1xf32>
    %16 = vector.broadcast %15 : vector<9x1xf32> to vector<9x9xf32>
    %17 = arith.mulf %12, %16 : vector<9x9xf32>
    %18 = arith.truncf %17 : vector<9x9xf32> to vector<9x9xbf16>
    %cst_5 = arith.constant dense<0.000000e+00> : vector<9x16xf32>
    %19 = tpu.matmul %18, %4, %cst_5 {dimension_numbers = #tpu.dot_dimension_numbers<[1], [0], [0], [1], [0, 0, 1, 1], [], []>} : vector<9x9xbf16>, vector<9x16xbf16>, vector<9x16xf32> -> vector<9x16xf32>
    %20 = vector.extract_strided_slice %1 {offsets = [0, 16], sizes = [9, 16], strides = [1, 1]} : vector<9x192xbf16> to vector<9x16xbf16>
    %21 = vector.extract_strided_slice %1 {offsets = [0, 80], sizes = [9, 16], strides = [1, 1]} : vector<9x192xbf16> to vector<9x16xbf16>
    %22 = vector.extract_strided_slice %1 {offsets = [0, 144], sizes = [9, 16], strides = [1, 1]} : vector<9x192xbf16> to vector<9x16xbf16>
    %cst_6 = arith.constant dense<0.000000e+00> : vector<9x9xf32>
    %23 = tpu.matmul %20, %21, %cst_6 {dimension_numbers = #tpu.dot_dimension_numbers<[1], [1], [0], [0], [0, 0, 1, 0], [], []>} : vector<9x16xbf16>, vector<9x16xbf16>, vector<9x9xf32> -> vector<9x9xf32>
    %cst_7 = arith.constant 2.500000e-01 : f32
    %24 = vector.broadcast %cst_7 : f32 to vector<9x9xf32>
    %25 = arith.mulf %23, %24 : vector<9x9xf32>
    %cst_8 = arith.constant dense<0xFF800000> : vector<9xf32>
    %26 = vector.multi_reduction <maximumf>, %25, %cst_8 [1] : vector<9x9xf32> to vector<9xf32>
    %27 = vector.shape_cast %26 : vector<9xf32> to vector<9x1xf32>
    %28 = vector.broadcast %27 : vector<9x1xf32> to vector<9x9xf32>
    %29 = arith.subf %25, %28 : vector<9x9xf32>
    %30 = math.exp %29 : vector<9x9xf32>
    %cst_9 = arith.constant dense<0.000000e+00> : vector<9xf32>
    %31 = vector.multi_reduction <add>, %30, %cst_9 [1] : vector<9x9xf32> to vector<9xf32>
    %32 = vector.shape_cast %31 : vector<9xf32> to vector<9x1xf32>
    %33 = tpu.reciprocal %32 {approx = true} : vector<9x1xf32> -> vector<9x1xf32>
    %34 = vector.broadcast %33 : vector<9x1xf32> to vector<9x9xf32>
    %35 = arith.mulf %30, %34 : vector<9x9xf32>
    %36 = arith.truncf %35 : vector<9x9xf32> to vector<9x9xbf16>
    %cst_10 = arith.constant dense<0.000000e+00> : vector<9x16xf32>
    %37 = tpu.matmul %36, %22, %cst_10 {dimension_numbers = #tpu.dot_dimension_numbers<[1], [0], [0], [1], [0, 0, 1, 1], [], []>} : vector<9x9xbf16>, vector<9x16xbf16>, vector<9x16xf32> -> vector<9x16xf32>
    %38 = vector.extract_strided_slice %1 {offsets = [0, 32], sizes = [9, 16], strides = [1, 1]} : vector<9x192xbf16> to vector<9x16xbf16>
    %39 = vector.extract_strided_slice %1 {offsets = [0, 96], sizes = [9, 16], strides = [1, 1]} : vector<9x192xbf16> to vector<9x16xbf16>
    %40 = vector.extract_strided_slice %1 {offsets = [0, 160], sizes = [9, 16], strides = [1, 1]} : vector<9x192xbf16> to vector<9x16xbf16>
    %cst_11 = arith.constant dense<0.000000e+00> : vector<9x9xf32>
    %41 = tpu.matmul %38, %39, %cst_11 {dimension_numbers = #tpu.dot_dimension_numbers<[1], [1], [0], [0], [0, 0, 1, 0], [], []>} : vector<9x16xbf16>, vector<9x16xbf16>, vector<9x9xf32> -> vector<9x9xf32>
    %cst_12 = arith.constant 2.500000e-01 : f32
    %42 = vector.broadcast %cst_12 : f32 to vector<9x9xf32>
    %43 = arith.mulf %41, %42 : vector<9x9xf32>
    %cst_13 = arith.constant dense<0xFF800000> : vector<9xf32>
    %44 = vector.multi_reduction <maximumf>, %43, %cst_13 [1] : vector<9x9xf32> to vector<9xf32>
    %45 = vector.shape_cast %44 : vector<9xf32> to vector<9x1xf32>
    %46 = vector.broadcast %45 : vector<9x1xf32> to vector<9x9xf32>
    %47 = arith.subf %43, %46 : vector<9x9xf32>
    %48 = math.exp %47 : vector<9x9xf32>
    %cst_14 = arith.constant dense<0.000000e+00> : vector<9xf32>
    %49 = vector.multi_reduction <add>, %48, %cst_14 [1] : vector<9x9xf32> to vector<9xf32>
    %50 = vector.shape_cast %49 : vector<9xf32> to vector<9x1xf32>
    %51 = tpu.reciprocal %50 {approx = true} : vector<9x1xf32> -> vector<9x1xf32>
    %52 = vector.broadcast %51 : vector<9x1xf32> to vector<9x9xf32>
    %53 = arith.mulf %48, %52 : vector<9x9xf32>
    %54 = arith.truncf %53 : vector<9x9xf32> to vector<9x9xbf16>
    %cst_15 = arith.constant dense<0.000000e+00> : vector<9x16xf32>
    %55 = tpu.matmul %54, %40, %cst_15 {dimension_numbers = #tpu.dot_dimension_numbers<[1], [0], [0], [1], [0, 0, 1, 1], [], []>} : vector<9x9xbf16>, vector<9x16xbf16>, vector<9x16xf32> -> vector<9x16xf32>
    %56 = vector.extract_strided_slice %1 {offsets = [0, 48], sizes = [9, 16], strides = [1, 1]} : vector<9x192xbf16> to vector<9x16xbf16>
    %57 = vector.extract_strided_slice %1 {offsets = [0, 112], sizes = [9, 16], strides = [1, 1]} : vector<9x192xbf16> to vector<9x16xbf16>
    %58 = vector.extract_strided_slice %1 {offsets = [0, 176], sizes = [9, 16], strides = [1, 1]} : vector<9x192xbf16> to vector<9x16xbf16>
    %cst_16 = arith.constant dense<0.000000e+00> : vector<9x9xf32>
    %59 = tpu.matmul %56, %57, %cst_16 {dimension_numbers = #tpu.dot_dimension_numbers<[1], [1], [0], [0], [0, 0, 1, 0], [], []>} : vector<9x16xbf16>, vector<9x16xbf16>, vector<9x9xf32> -> vector<9x9xf32>
    %cst_17 = arith.constant 2.500000e-01 : f32
    %60 = vector.broadcast %cst_17 : f32 to vector<9x9xf32>
    %61 = arith.mulf %59, %60 : vector<9x9xf32>
    %cst_18 = arith.constant dense<0xFF800000> : vector<9xf32>
    %62 = vector.multi_reduction <maximumf>, %61, %cst_18 [1] : vector<9x9xf32> to vector<9xf32>
    %63 = vector.shape_cast %62 : vector<9xf32> to vector<9x1xf32>
    %64 = vector.broadcast %63 : vector<9x1xf32> to vector<9x9xf32>
    %65 = arith.subf %61, %64 : vector<9x9xf32>
    %66 = math.exp %65 : vector<9x9xf32>
    %cst_19 = arith.constant dense<0.000000e+00> : vector<9xf32>
    %67 = vector.multi_reduction <add>, %66, %cst_19 [1] : vector<9x9xf32> to vector<9xf32>
    %68 = vector.shape_cast %67 : vector<9xf32> to vector<9x1xf32>
    %69 = tpu.reciprocal %68 {approx = true} : vector<9x1xf32> -> vector<9x1xf32>
    %70 = vector.broadcast %69 : vector<9x1xf32> to vector<9x9xf32>
    %71 = arith.mulf %66, %70 : vector<9x9xf32>
    %72 = arith.truncf %71 : vector<9x9xf32> to vector<9x9xbf16>
    %cst_20 = arith.constant dense<0.000000e+00> : vector<9x16xf32>
    %73 = tpu.matmul %72, %58, %cst_20 {dimension_numbers = #tpu.dot_dimension_numbers<[1], [0], [0], [1], [0, 0, 1, 1], [], []>} : vector<9x9xbf16>, vector<9x16xbf16>, vector<9x16xf32> -> vector<9x16xf32>
    %74 = tpu.concatenate %19, %37, %55, %73 in 1 : vector<9x16xf32>, vector<9x16xf32>, vector<9x16xf32>, vector<9x16xf32> -> vector<9x64xf32>
    %75 = arith.truncf %74 : vector<9x64xf32> to vector<9x64xbf16>
    %c0_21 = arith.constant 0 : index
    %c0_22 = arith.constant 0 : index
    %c0_23 = arith.constant 0 : index
    %76 = vector.load %arg2[%c0_21, %c0_22, %c0_23] : memref<1x9x64xbf16, #tpu.memory_space<vmem>>, vector<1x9x64xbf16>
    %77 = vector.shape_cast %76 : vector<1x9x64xbf16> to vector<9x64xbf16>
    %78 = vector.shape_cast %75 : vector<9x64xbf16> to vector<1x9x64xbf16>
    tpu.vector_store %arg2[%c0_21, %c0_22, %c0_23], %78 {strides = array<i32>} : memref<1x9x64xbf16, #tpu.memory_space<vmem>>, vector<1x9x64xbf16>,
    return
  }
  func.func @transform_0(%arg0: i32) -> (i32, i32, i32) {
    %c0_i32 = arith.constant 0 : i32
    %c0_i32_0 = arith.constant 0 : i32
    %c0_i32_1 = arith.constant 0 : i32
    return %arg0, %c0_i32, %c0_i32_0 : i32, i32, i32
  }
  func.func @transform_1(%arg0: i32) -> (i32, i32, i32) {
    %c0_i32 = arith.constant 0 : i32
    %c0_i32_0 = arith.constant 0 : i32
    %c0_i32_1 = arith.constant 0 : i32
    return %arg0, %c0_i32, %c0_i32_0 : i32, i32, i32
  }
}

module attributes {stable_mosaic.version = 11 : i64} {
  func.func @_ln_matmul_kernel(%arg0: i32, %arg1: i32, %arg2: memref<32x64xbf16, #tpu.memory_space<vmem>>, %arg3: memref<1x64xf32, #tpu.memory_space<vmem>>, %arg4: memref<1x64xf32, #tpu.memory_space<vmem>>, %arg5: memref<64x256xbf16, #tpu.memory_space<vmem>>, %arg6: memref<1x256xf32, #tpu.memory_space<vmem>>, %arg7: memref<32x256xbf16, #tpu.memory_space<vmem>>) attributes {dimension_semantics = [#tpu.dimension_semantics<parallel>, #tpu.dimension_semantics<parallel>], iteration_bounds = array<i64: 1, 1>, scalar_prefetch = 0 : i64, scratch_operands = 0 : i64, tpu.core_type = #tpu.core_type<tc>, window_params = [{transform_indices = @transform_0, window_bounds = array<i64: 32, 64>}, {pipeline_mode = #tpu.pipeline_mode<synchronous>, transform_indices = @transform_1, window_bounds = array<i64: 1, 64>}, {pipeline_mode = #tpu.pipeline_mode<synchronous>, transform_indices = @transform_2, window_bounds = array<i64: 1, 64>}, {transform_indices = @transform_3, window_bounds = array<i64: 64, 256>}, {transform_indices = @transform_4, window_bounds = array<i64: 1, 256>}, {transform_indices = @transform_5, window_bounds = array<i64: 32, 256>}]} {
    %c0 = arith.constant 0 : index
    %c0_0 = arith.constant 0 : index
    %0 = vector.load %arg2[%c0, %c0_0] : memref<32x64xbf16, #tpu.memory_space<vmem>>, vector<32x64xbf16>
    %1 = arith.extf %0 : vector<32x64xbf16> to vector<32x64xf32>
    %cst = arith.constant dense<0.000000e+00> : vector<32xf32>
    %2 = vector.multi_reduction <add>, %1, %cst [1] : vector<32x64xf32> to vector<32xf32>
    %3 = vector.shape_cast %2 : vector<32xf32> to vector<32x1xf32>
    %cst_1 = arith.constant 6.400000e+01 : f32
    %4 = vector.broadcast %cst_1 : f32 to vector<32x1xf32>
    %5 = arith.divf %3, %4 : vector<32x1xf32>
    %6 = vector.broadcast %5 : vector<32x1xf32> to vector<32x64xf32>
    %7 = arith.subf %1, %6 : vector<32x64xf32>
    %8 = arith.mulf %7, %7 : vector<32x64xf32>
    %cst_2 = arith.constant dense<0.000000e+00> : vector<32xf32>
    %9 = vector.multi_reduction <add>, %8, %cst_2 [1] : vector<32x64xf32> to vector<32xf32>
    %10 = vector.shape_cast %9 : vector<32xf32> to vector<32x1xf32>
    %cst_3 = arith.constant 6.400000e+01 : f32
    %11 = vector.broadcast %cst_3 : f32 to vector<32x1xf32>
    %12 = arith.divf %10, %11 : vector<32x1xf32>
    %13 = vector.broadcast %5 : vector<32x1xf32> to vector<32x64xf32>
    %14 = arith.subf %1, %13 : vector<32x64xf32>
    %cst_4 = arith.constant 9.99999974E-6 : f32
    %15 = vector.broadcast %cst_4 : f32 to vector<32x1xf32>
    %16 = arith.addf %12, %15 : vector<32x1xf32>
    %17 = math.rsqrt %16 : vector<32x1xf32>
    %18 = vector.broadcast %17 : vector<32x1xf32> to vector<32x64xf32>
    %19 = arith.mulf %14, %18 : vector<32x64xf32>
    %c0_5 = arith.constant 0 : index
    %c0_6 = arith.constant 0 : index
    %20 = vector.load %arg3[%c0_5, %c0_6] : memref<1x64xf32, #tpu.memory_space<vmem>>, vector<1x64xf32>
    %21 = vector.broadcast %20 : vector<1x64xf32> to vector<32x64xf32>
    %22 = arith.mulf %19, %21 : vector<32x64xf32>
    %c0_7 = arith.constant 0 : index
    %c0_8 = arith.constant 0 : index
    %23 = vector.load %arg4[%c0_7, %c0_8] : memref<1x64xf32, #tpu.memory_space<vmem>>, vector<1x64xf32>
    %24 = vector.broadcast %23 : vector<1x64xf32> to vector<32x64xf32>
    %25 = arith.addf %22, %24 : vector<32x64xf32>
    %26 = arith.truncf %25 : vector<32x64xf32> to vector<32x64xbf16>
    %c0_9 = arith.constant 0 : index
    %c0_10 = arith.constant 0 : index
    %27 = vector.load %arg5[%c0_9, %c0_10] : memref<64x256xbf16, #tpu.memory_space<vmem>>, vector<64x256xbf16>
    %cst_11 = arith.constant dense<0.000000e+00> : vector<32x256xf32>
    %28 = tpu.matmul %26, %27, %cst_11 {dimension_numbers = #tpu.dot_dimension_numbers<[1], [0], [0], [1], [0, 0, 1, 1], [], []>} : vector<32x64xbf16>, vector<64x256xbf16>, vector<32x256xf32> -> vector<32x256xf32>
    %c0_12 = arith.constant 0 : index
    %c0_13 = arith.constant 0 : index
    %29 = vector.load %arg6[%c0_12, %c0_13] : memref<1x256xf32, #tpu.memory_space<vmem>>, vector<1x256xf32>
    %30 = vector.broadcast %29 : vector<1x256xf32> to vector<32x256xf32>
    %31 = arith.addf %28, %30 : vector<32x256xf32>
    %cst_14 = arith.constant 1.702000e+00 : f32
    %32 = vector.broadcast %cst_14 : f32 to vector<32x256xf32>
    %33 = arith.mulf %32, %31 : vector<32x256xf32>
    %34 = arith.negf %33 : vector<32x256xf32>
    %35 = math.exp %34 : vector<32x256xf32>
    %cst_15 = arith.constant 1.000000e+00 : f32
    %36 = vector.broadcast %cst_15 : f32 to vector<32x256xf32>
    %37 = arith.addf %36, %35 : vector<32x256xf32>
    %38 = arith.divf %36, %37 : vector<32x256xf32>
    %39 = arith.mulf %31, %38 : vector<32x256xf32>
    %40 = arith.truncf %39 : vector<32x256xf32> to vector<32x256xbf16>
    %c0_16 = arith.constant 0 : index
    %c0_17 = arith.constant 0 : index
    %41 = vector.load %arg7[%c0_16, %c0_17] : memref<32x256xbf16, #tpu.memory_space<vmem>>, vector<32x256xbf16>
    tpu.vector_store %arg7[%c0_16, %c0_17], %40 {strides = array<i32>} : memref<32x256xbf16, #tpu.memory_space<vmem>>, vector<32x256xbf16>,
    return
  }
  func.func @transform_0(%arg0: i32, %arg1: i32) -> (i32, i32) {
    %c0_i32 = arith.constant 0 : i32
    %c0_i32_0 = arith.constant 0 : i32
    return %arg0, %c0_i32 : i32, i32
  }
  func.func @transform_1(%arg0: i32, %arg1: i32) -> (i32, i32) {
    %c0_i32 = arith.constant 0 : i32
    %c0_i32_0 = arith.constant 0 : i32
    %c0_i32_1 = arith.constant 0 : i32
    return %c0_i32, %c0_i32_0 : i32, i32
  }
  func.func @transform_2(%arg0: i32, %arg1: i32) -> (i32, i32) {
    %c0_i32 = arith.constant 0 : i32
    %c0_i32_0 = arith.constant 0 : i32
    %c0_i32_1 = arith.constant 0 : i32
    return %c0_i32, %c0_i32_0 : i32, i32
  }
  func.func @transform_3(%arg0: i32, %arg1: i32) -> (i32, i32) {
    %c0_i32 = arith.constant 0 : i32
    %c0_i32_0 = arith.constant 0 : i32
    return %c0_i32, %arg1 : i32, i32
  }
  func.func @transform_4(%arg0: i32, %arg1: i32) -> (i32, i32) {
    %c0_i32 = arith.constant 0 : i32
    %c0_i32_0 = arith.constant 0 : i32
    return %c0_i32, %arg1 : i32, i32
  }
  func.func @transform_5(%arg0: i32, %arg1: i32) -> (i32, i32) {
    %c0_i32 = arith.constant 0 : i32
    return %arg0, %arg1 : i32, i32
  }
}

module attributes {stable_mosaic.version = 11 : i64} {
  func.func @_matmul_kernel(%arg0: i32, %arg1: i32, %arg2: i32, %arg3: memref<32x256xbf16, #tpu.memory_space<vmem>>, %arg4: memref<256x64xbf16, #tpu.memory_space<vmem>>, %arg5: memref<1x64xf32, #tpu.memory_space<vmem>>, %arg6: memref<32x64xbf16, #tpu.memory_space<vmem>>, %arg7: memref<32x64xbf16, #tpu.memory_space<vmem>>, %arg8: memref<32x64xf32, #tpu.memory_space<vmem>>) attributes {dimension_semantics = [#tpu.dimension_semantics<parallel>, #tpu.dimension_semantics<parallel>, #tpu.dimension_semantics<arbitrary>], iteration_bounds = array<i64: 1, 1, 1>, scalar_prefetch = 0 : i64, scratch_operands = 1 : i64, tpu.core_type = #tpu.core_type<tc>, window_params = [{transform_indices = @transform_0, window_bounds = array<i64: 32, 256>}, {transform_indices = @transform_1, window_bounds = array<i64: 256, 64>}, {transform_indices = @transform_2, window_bounds = array<i64: 1, 64>}, {transform_indices = @transform_3, window_bounds = array<i64: 32, 64>}, {transform_indices = @transform_4, window_bounds = array<i64: 32, 64>}]} {
    %c0_i32 = arith.constant 0 : i32
    %0 = arith.cmpi eq, %arg2, %c0_i32 : i32
    %1 = arith.extui %0 : i1 to i32
    %c0_i32_0 = arith.constant 0 : i32
    %2 = arith.cmpi ne, %1, %c0_i32_0 : i32
    scf.if %2 {
      %cst_10 = arith.constant 0.000000e+00 : f32
      %12 = vector.broadcast %cst_10 : f32 to vector<32x64xf32>
      %c0_11 = arith.constant 0 : index
      %c0_12 = arith.constant 0 : index
      %13 = vector.load %arg8[%c0_11, %c0_12] : memref<32x64xf32, #tpu.memory_space<vmem>>, vector<32x64xf32>
      tpu.vector_store %arg8[%c0_11, %c0_12], %12 {strides = array<i32>} : memref<32x64xf32, #tpu.memory_space<vmem>>, vector<32x64xf32>,
    } else {
    }
    %c0 = arith.constant 0 : index
    %c0_1 = arith.constant 0 : index
    %3 = vector.load %arg8[%c0, %c0_1] : memref<32x64xf32, #tpu.memory_space<vmem>>, vector<32x64xf32>
    %c0_2 = arith.constant 0 : index
    %c0_3 = arith.constant 0 : index
    %4 = vector.load %arg3[%c0_2, %c0_3] : memref<32x256xbf16, #tpu.memory_space<vmem>>, vector<32x256xbf16>
    %c0_4 = arith.constant 0 : index
    %c0_5 = arith.constant 0 : index
    %5 = vector.load %arg4[%c0_4, %c0_5] : memref<256x64xbf16, #tpu.memory_space<vmem>>, vector<256x64xbf16>
    %cst = arith.constant dense<0.000000e+00> : vector<32x64xf32>
    %6 = tpu.matmul %4, %5, %cst {dimension_numbers = #tpu.dot_dimension_numbers<[1], [0], [0], [1], [0, 0, 1, 1], [], []>} : vector<32x256xbf16>, vector<256x64xbf16>, vector<32x64xf32> -> vector<32x64xf32>
    %7 = arith.addf %3, %6 : vector<32x64xf32>
    %c0_6 = arith.constant 0 : index
    %c0_7 = arith.constant 0 : index
    %8 = vector.load %arg8[%c0_6, %c0_7] : memref<32x64xf32, #tpu.memory_space<vmem>>, vector<32x64xf32>
    tpu.vector_store %arg8[%c0_6, %c0_7], %7 {strides = array<i32>} : memref<32x64xf32, #tpu.memory_space<vmem>>, vector<32x64xf32>,
    %c0_i32_8 = arith.constant 0 : i32
    %9 = arith.cmpi eq, %arg2, %c0_i32_8 : i32
    %10 = arith.extui %9 : i1 to i32
    %c0_i32_9 = arith.constant 0 : i32
    %11 = arith.cmpi ne, %10, %c0_i32_9 : i32
    scf.if %11 {
      %c0_10 = arith.constant 0 : index
      %c0_11 = arith.constant 0 : index
      %12 = vector.load %arg8[%c0_10, %c0_11] : memref<32x64xf32, #tpu.memory_space<vmem>>, vector<32x64xf32>
      %c0_12 = arith.constant 0 : index
      %c0_13 = arith.constant 0 : index
      %13 = vector.load %arg5[%c0_12, %c0_13] : memref<1x64xf32, #tpu.memory_space<vmem>>, vector<1x64xf32>
      %14 = vector.broadcast %13 : vector<1x64xf32> to vector<32x64xf32>
      %15 = arith.addf %12, %14 : vector<32x64xf32>
      %c0_14 = arith.constant 0 : index
      %c0_15 = arith.constant 0 : index
      %16 = vector.load %arg6[%c0_14, %c0_15] : memref<32x64xbf16, #tpu.memory_space<vmem>>, vector<32x64xbf16>
      %17 = arith.extf %16 : vector<32x64xbf16> to vector<32x64xf32>
      %18 = arith.addf %15, %17 : vector<32x64xf32>
      %19 = arith.truncf %18 : vector<32x64xf32> to vector<32x64xbf16>
      %c0_16 = arith.constant 0 : index
      %c0_17 = arith.constant 0 : index
      %20 = vector.load %arg7[%c0_16, %c0_17] : memref<32x64xbf16, #tpu.memory_space<vmem>>, vector<32x64xbf16>
      tpu.vector_store %arg7[%c0_16, %c0_17], %19 {strides = array<i32>} : memref<32x64xbf16, #tpu.memory_space<vmem>>, vector<32x64xbf16>,
    } else {
    }
    return
  }
  func.func @transform_0(%arg0: i32, %arg1: i32, %arg2: i32) -> (i32, i32) {
    %c0_i32 = arith.constant 0 : i32
    return %arg0, %arg2 : i32, i32
  }
  func.func @transform_1(%arg0: i32, %arg1: i32, %arg2: i32) -> (i32, i32) {
    %c0_i32 = arith.constant 0 : i32
    return %arg2, %arg1 : i32, i32
  }
  func.func @transform_2(%arg0: i32, %arg1: i32, %arg2: i32) -> (i32, i32) {
    %c0_i32 = arith.constant 0 : i32
    %c0_i32_0 = arith.constant 0 : i32
    return %c0_i32, %arg1 : i32, i32
  }
  func.func @transform_3(%arg0: i32, %arg1: i32, %arg2: i32) -> (i32, i32) {
    %c0_i32 = arith.constant 0 : i32
    return %arg0, %arg1 : i32, i32
  }
  func.func @transform_4(%arg0: i32, %arg1: i32, %arg2: i32) -> (i32, i32) {
    %c0_i32 = arith.constant 0 : i32
    return %arg0, %arg1 : i32, i32
  }
}

</mosaic_0001>

<llo_original>
// kernel: transformer_forward.18
$region0: #{transformer_forward.18}
  #allocation0 [shape = 'u32[]', space=smem, size = 0x4, offset = 0x4, fixed_abs, tag = 'smem constant byte address 0x4 - core index']
  #allocation1 [shape = 'u32[144,128]{1,0:T(1,128)}', space=vmem, size = 0x12000, scoped, tag = 'internal scratch']
  #allocation2 [shape = 'f32[4,64]{1,0:T(4,128)}', space=vmem, size = 0x800, scoped, tag = 'scratch operand']
  %s0 = inlined_call_operand.vmem [shape: bf16[4,64], index: 0, kind: input, shape index: {}]
  %s1 = inlined_call_operand.vmem [shape: bf16[64,64], index: 1, kind: input, shape index: {}]
  %s2 = inlined_call_operand.vmem [shape: f32[1,64], index: 2, kind: input, shape index: {}]
  %s3 = inlined_call_operand.vmem [shape: bf16[4,64], index: 3, kind: output, shape index: {}]
  %s4 = sld [smem:[#allocation0]]
  $region30: #{transformer_forward.18} parent=0
    _
  %s6 = ssub.s32 1, %s4
  %s7 = scalar_select 0, %s6, %s4
  // Predicated region
  $region2: #{transformer_forward.18} parent=0 // pred_check
    _
  $region3: #{transformer_forward.18} parent=0 // pred_check_branch
    %9 = sbr.rel (0) target = $region5
  $region4: #{transformer_forward.18} parent=0 // pred_region
    _
  $region5: #{transformer_forward.18} parent=0 // pred_fallthru
    _
  // Predicated region
  $region6: #{transformer_forward.18} parent=0 // pred_check
    _
  $region7: #{transformer_forward.18} parent=0 // pred_check_branch
    %11 = sbr.rel (0) target = $region9
  $region8: #{transformer_forward.18} parent=0 // pred_region
    _
  $region9: #{transformer_forward.18} parent=0 // pred_fallthru
    _
  // Predicated region
  $region10: #{transformer_forward.18} parent=0 // pred_check
    _
  $region11: #{transformer_forward.18} parent=0 // pred_check_branch
    %13 = sbr.rel (0) target = $region13
  $region12: #{transformer_forward.18} parent=0 // pred_region
    _
  $region13: #{transformer_forward.18} parent=0 // pred_fallthru
    _
  %p15 = scmp.eq.s32.totalorder 0, 0
  // Predicated region
  $region14: #{transformer_forward.18} parent=0 // pred_check
    %p16 = pneg %p15
  $region15: #{transformer_forward.18} parent=0 // pred_check_branch
    %18 = sbr.rel (%p16) target = $region17
  $region16: #{transformer_forward.18} parent=0 // pred_region
    %vm19 = vcmask 519168
    %20 = vst.msk [vmem:[#allocation2] sm:$0xf] %vm19, 0.0
  $region17: #{transformer_forward.18} parent=0 // pred_fallthru
    _
  %v21 = vld [vmem:[#allocation2] sm:$0xf]
  %v22 = vld [vmem:[%s0] sm:$0x3]
  %v23 = vld [vmem:[%s1] sm:$0xf]
  %v24 = vld [vmem:[%s1 + $0x4] sm:$0xf]
  %v25 = vld [vmem:[%s1 + $0x8] sm:$0xf]
  %v26 = vld [vmem:[%s1 + $0xc] sm:$0xf]
  %v27 = vld [vmem:[%s1 + $0x10] sm:$0xf]
  %v28 = vld [vmem:[%s1 + $0x14] sm:$0xf]
  %v29 = vld [vmem:[%s1 + $0x18] sm:$0xf]
  %v30 = vld [vmem:[%s1 + $0x1c] sm:$0xf]
  %v39 = vunpack.c.l.b16 %v23
  %v40 = vunpack.c.l.b16 %v24
  %v41 = vunpack.c.l.b16 %v25
  %v42 = vunpack.c.l.b16 %v26
  %v43 = vunpack.c.l.b16 %v27
  %v44 = vunpack.c.l.b16 %v28
  %v45 = vunpack.c.l.b16 %v29
  %v46 = vunpack.c.l.b16 %v30
  %v47 = vpack.c.b16 %v40, %v39
  %v48 = vpack.c.b16 %v42, %v41
  %v49 = vpack.c.b16 %v44, %v43
  %v50 = vpack.c.b16 %v46, %v45
  %vm55 = vcmask 523264
  %v57 = vsel %vm55, %v22, 0
  %59 = vmatprep.subr.bf16.mxu0 0
  %60 = vmatpush1.bf16.msra.mxu0 0
  %61 = vmatprep.subr.bf16.mxu0 0
  %62 = vmatpush1.bf16.msra.mxu0 0
  %63 = vmatprep.subr.bf16.mxu0 0
  %64 = vmatpush1.bf16.msra.mxu0 0
  %65 = vmatprep.subr.bf16.mxu0 0
  %66 = vmatpush1.bf16.msra.mxu0 0
  %67 = vmatprep.subr.bf16.mxu0 0
  %68 = vmatpush1.bf16.msra.mxu0 %v50
  %69 = vmatprep.subr.bf16.mxu0 0
  %70 = vmatpush1.bf16.msra.mxu0 %v49
  %71 = vmatprep.subr.bf16.mxu0 0
  %72 = vmatpush1.bf16.msra.mxu0 %v48
  %73 = vmatprep.subr.bf16.mxu0 0
  %74 = vmatpush1.bf16.msra.mxu0 %v47
  %75 = vmatprep.subr.bf16.mxu0 0
  %76 = vmatpush2.bf16.msra.mxu0 0
  %77 = vmatprep.subr.bf16.mxu0 0
  %78 = vmatpush2.bf16.msra.mxu0 0
  %79 = vmatprep.subr.bf16.mxu0 0
  %80 = vmatpush2.bf16.msra.mxu0 0
  %81 = vmatprep.subr.bf16.mxu0 0
  %82 = vmatpush2.bf16.msra.mxu0 0
  %83 = vmatprep.subr.bf16.mxu0 0
  %84 = vmatpush2.bf16.msra.mxu0 0
  %85 = vmatprep.subr.bf16.mxu0 0
  %86 = vmatpush2.bf16.msra.mxu0 0
  %87 = vmatprep.subr.bf16.mxu0 0
  %88 = vmatpush2.bf16.msra.mxu0 0
  %89 = vmatprep.subr.bf16.mxu0 0
  %90 = vmatpush2.bf16.msra.mxu0 0
  %91 = vmatprep.mubr.bf16.mxu0 0
  %92 = vmatmul.mubr.bf16.gmra.mxu0 %v57
  %v93 = vpop.f32.mrf.mxu0
  %v94 = vadd.f32 0.0, %v93
  %v95 = vpop.f32.mrf.mxu0
  %v96 = vpop.f32.mrf.mxu0
  %v97 = vpop.f32.mrf.mxu0
  %98 = vdwg.mxu0
  %v99 = vadd.f32 %v21, %v94
  %vm100 = vcmask 519168
  %101 = vst.msk [vmem:[#allocation2] sm:$0xf] %vm100, %v99
  // Predicated region
  $region18: #{transformer_forward.18} parent=0 // pred_check
    %p102 = pneg %p15
  $region19: #{transformer_forward.18} parent=0 // pred_check_branch
    %104 = sbr.rel (%p102) target = $region21
  $region20: #{transformer_forward.18} parent=0 // pred_region
    %v105 = vld [vmem:[#allocation2] sm:$0xf]
    %v106 = vld [vmem:[%s2] sm:$0x1]
    %v108 = vlaneseq
    %v109 = vshrl.u32 %v108, 7
    %v110 = vsub.s32 0, %v109
    %v111 = vrot.slane %v106, %v110
    %v113 = vadd.f32 %v105, %v111
    %v114 = vpack.c.bf16 %v113, %v113
    %vm115 = vcmask 517120
    %116 = vst.msk [vmem:[%s3] sm:$0x3] %vm115, %v114
  $region21: #{transformer_forward.18} parent=0 // pred_fallthru
    _
  // Predicated region
  $region22: #{transformer_forward.18} parent=0 // pred_check
    _
  $region23: #{transformer_forward.18} parent=0 // pred_check_branch
    %118 = sbr.rel (0) target = $region25
  $region24: #{transformer_forward.18} parent=0 // pred_region
    _
  $region25: #{transformer_forward.18} parent=0 // pred_fallthru
    _
  // Predicated region
  $region26: #{transformer_forward.18} parent=0 // pred_check
    _
  $region27: #{transformer_forward.18} parent=0 // pred_check_branch
    %120 = sbr.rel (0) target = $region29
  $region28: #{transformer_forward.18} parent=0 // pred_region
    _
  $region29: #{transformer_forward.18} parent=0 // pred_fallthru
    _

// kernel: transformer_forward.19
$region0: #{transformer_forward.19}
  #allocation0 [shape = 'u32[]', space=smem, size = 0x4, offset = 0x4, fixed_abs, tag = 'smem constant byte address 0x4 - core index']
  #allocation1 [shape = 'u32[144,128]{1,0:T(1,128)}', space=vmem, size = 0x12000, scoped, tag = 'internal scratch']
  %s0 = inlined_call_operand.vmem [shape: bf16[4,64], index: 0, kind: input, shape index: {}]
  %s1 = inlined_call_operand.vmem [shape: f32[1,64], index: 1, kind: input, shape index: {}]
  %s2 = inlined_call_operand.vmem [shape: f32[1,64], index: 2, kind: input, shape index: {}]
  %s3 = inlined_call_operand.vmem [shape: bf16[64,192], index: 3, kind: input, shape index: {}]
  %s4 = inlined_call_operand.vmem [shape: f32[1,192], index: 4, kind: input, shape index: {}]
  %s5 = inlined_call_operand.vmem [shape: bf16[4,192], index: 5, kind: output, shape index: {}]
  %s6 = sld [smem:[#allocation0]]
  $region30: #{transformer_forward.19} parent=0
    _
  %s8 = ssub.s32 1, %s6
  %s9 = scalar_select 0, %s8, %s6
  // Predicated region
  $region2: #{transformer_forward.19} parent=0 // pred_check
    _
  $region3: #{transformer_forward.19} parent=0 // pred_check_branch
    %11 = sbr.rel (0) target = $region5
  $region4: #{transformer_forward.19} parent=0 // pred_region
    _
  $region5: #{transformer_forward.19} parent=0 // pred_fallthru
    _
  // Predicated region
  $region6: #{transformer_forward.19} parent=0 // pred_check
    _
  $region7: #{transformer_forward.19} parent=0 // pred_check_branch
    %13 = sbr.rel (0) target = $region9
  $region8: #{transformer_forward.19} parent=0 // pred_region
    _
  $region9: #{transformer_forward.19} parent=0 // pred_fallthru
    _
  // Predicated region
  $region10: #{transformer_forward.19} parent=0 // pred_check
    _
  $region11: #{transformer_forward.19} parent=0 // pred_check_branch
    %15 = sbr.rel (0) target = $region13
  $region12: #{transformer_forward.19} parent=0 // pred_region
    _
  $region13: #{transformer_forward.19} parent=0 // pred_fallthru
    _
  // Predicated region
  $region14: #{transformer_forward.19} parent=0 // pred_check
    _
  $region15: #{transformer_forward.19} parent=0 // pred_check_branch
    %17 = sbr.rel (0) target = $region17
  $region16: #{transformer_forward.19} parent=0 // pred_region
    _
  $region17: #{transformer_forward.19} parent=0 // pred_fallthru
    _
  // Predicated region
  $region18: #{transformer_forward.19} parent=0 // pred_check
    _
  $region19: #{transformer_forward.19} parent=0 // pred_check_branch
    %19 = sbr.rel (0) target = $region21
  $region20: #{transformer_forward.19} parent=0 // pred_region
    _
  $region21: #{transformer_forward.19} parent=0 // pred_fallthru
    _
  %v21 = vld [vmem:[%s0] sm:$0x3]
  %v22 = vunpack.c.l.bf16 %v21
  %vm23 = vcmask 519168
  %v24 = vsel %vm23, %v22, 0.0
  %25 = vadd.xlane.f32.xlu0 %v24
  %v26 = vpop.xlane.xlu0 %25
  %v27 = vrcp.pop 64.0
  %v28 = vmul.f32 %v26, %v27
  %v29 = vsub.f32 %v22, %v28
  %v30 = vmul.f32 %v29, %v29
  %v31 = vsel %vm23, %v30, 0.0
  %32 = vadd.xlane.f32.xlu0 %v31
  %v33 = vpop.xlane.xlu0 %32
  %v34 = vmul.f32 %v33, %v27
  %v35 = vadd.f32 %v34, 1e-05
  %v36 = vrsqrt.pop %v35
  %v37 = vmul.f32 %v29, %v36
  %v38 = vld [vmem:[%s1] sm:$0x1]
  %v40 = vlaneseq
  %v41 = vshrl.u32 %v40, 7
  %v42 = vsub.s32 0, %v41
  %v43 = vrot.slane %v38, %v42
  %v45 = vmul.f32 %v37, %v43
  %v46 = vld [vmem:[%s2] sm:$0x1]
  %v48 = vlaneseq
  %v49 = vshrl.u32 %v48, 7
  %v50 = vsub.s32 0, %v49
  %v51 = vrot.slane %v46, %v50
  %v53 = vadd.f32 %v45, %v51
  %v54 = vpack.c.bf16 %v53, %v53
  %v55 = vld [vmem:[%s3] sm:$0xff]
  %v56 = vld [vmem:[%s3 + $0x8] sm:$0xff]
  %v57 = vld [vmem:[%s3 + $0x10] sm:$0xff]
  %v58 = vld [vmem:[%s3 + $0x18] sm:$0xff]
  %v59 = vld [vmem:[%s3 + $0x20] sm:$0xff]
  %v60 = vld [vmem:[%s3 + $0x28] sm:$0xff]
  %v61 = vld [vmem:[%s3 + $0x30] sm:$0xff]
  %v62 = vld [vmem:[%s3 + $0x38] sm:$0xff]
  %v63 = vld [vmem:[%s4] sm:$0x3]
  %v65 = vlaneseq
  %v66 = vshrl.u32 %v65, 7
  %v67 = vsub.s32 0, %v66
  %v68 = vrot.slane %v63, %v67
  %v69 = vlaneseq
  %v70 = vshrl.u32 %v69, 7
  %v71 = vsub.s32 1, %v70
  %v72 = vrot.slane %v63, %v71
  %v83 = vunpack.c.l.b16 %v55
  %v84 = vunpack.c.h.b16 %v55
  %v85 = vunpack.c.l.b16 %v56
  %v86 = vunpack.c.h.b16 %v56
  %v87 = vunpack.c.l.b16 %v57
  %v88 = vunpack.c.h.b16 %v57
  %v89 = vunpack.c.l.b16 %v58
  %v90 = vunpack.c.h.b16 %v58
  %v91 = vunpack.c.l.b16 %v59
  %v92 = vunpack.c.h.b16 %v59
  %v93 = vunpack.c.l.b16 %v60
  %v94 = vunpack.c.h.b16 %v60
  %v95 = vunpack.c.l.b16 %v61
  %v96 = vunpack.c.h.b16 %v61
  %v97 = vunpack.c.l.b16 %v62
  %v98 = vunpack.c.h.b16 %v62
  %v99 = vpack.c.b16 %v85, %v83
  %v100 = vpack.c.b16 %v86, %v84
  %v101 = vpack.c.b16 %v89, %v87
  %v102 = vpack.c.b16 %v90, %v88
  %v103 = vpack.c.b16 %v93, %v91
  %v104 = vpack.c.b16 %v94, %v92
  %v105 = vpack.c.b16 %v97, %v95
  %v106 = vpack.c.b16 %v98, %v96
  %vm115 = vcmask 523264
  %v117 = vsel %vm115, %v54, 0
  %119 = vmatprep.subr.bf16.mxu0 0
  %120 = vmatpush1.bf16.msra.mxu0 0
  %121 = vmatprep.subr.bf16.mxu0 0
  %122 = vmatpush1.bf16.msra.mxu0 0
  %123 = vmatprep.subr.bf16.mxu0 0
  %124 = vmatpush1.bf16.msra.mxu0 0
  %125 = vmatprep.subr.bf16.mxu0 0
  %126 = vmatpush1.bf16.msra.mxu0 0
  %127 = vmatprep.subr.bf16.mxu0 %v106
  %128 = vmatpush1.bf16.msra.mxu0 %v105
  %129 = vmatprep.subr.bf16.mxu0 %v104
  %130 = vmatpush1.bf16.msra.mxu0 %v103
  %131 = vmatprep.subr.bf16.mxu0 %v102
  %132 = vmatpush1.bf16.msra.mxu0 %v101
  %133 = vmatprep.subr.bf16.mxu0 %v100
  %134 = vmatpush1.bf16.msra.mxu0 %v99
  %135 = vmatprep.subr.bf16.mxu0 0
  %136 = vmatpush2.bf16.msra.mxu0 0
  %137 = vmatprep.subr.bf16.mxu0 0
  %138 = vmatpush2.bf16.msra.mxu0 0
  %139 = vmatprep.subr.bf16.mxu0 0
  %140 = vmatpush2.bf16.msra.mxu0 0
  %141 = vmatprep.subr.bf16.mxu0 0
  %142 = vmatpush2.bf16.msra.mxu0 0
  %143 = vmatprep.subr.bf16.mxu0 0
  %144 = vmatpush2.bf16.msra.mxu0 0
  %145 = vmatprep.subr.bf16.mxu0 0
  %146 = vmatpush2.bf16.msra.mxu0 0
  %147 = vmatprep.subr.bf16.mxu0 0
  %148 = vmatpush2.bf16.msra.mxu0 0
  %149 = vmatprep.subr.bf16.mxu0 0
  %150 = vmatpush2.bf16.msra.mxu0 0
  %151 = vmatprep.mubr.bf16.mxu0 0
  %152 = vmatmul.mubr.bf16.gmra.mxu0 %v117
  %v153 = vpop.f32.mrf.mxu0
  %v154 = vadd.f32 %v68, %v153
  %v155 = vpop.f32.mrf.mxu0
  %v156 = vadd.f32 %v72, %v155
  %v157 = vpop.f32.mrf.mxu0
  %v158 = vpop.f32.mrf.mxu0
  %159 = vdwg.mxu0
  %v160 = vpack.c.bf16 %v154, %v154
  %v161 = vpack.c.bf16 %v156, %v156
  %v164 = vcombine.low %v160, %v161
  %v166 = vunpack.c.l.s4 1983009808
  %v167 = vunpack.c.0.s8 %v166
  %v168 = vlaneseq
  %v169 = vshrl.u32 %v168, 7
  %v170 = vsub.s32 %v167, %v169
  %v171 = vrot.slane %v164, %v170
  %vm173 = vcmask 1041408
  %vm174 = vcmask 519170
  %vm175 = vmor %vm174, %vm173
  %176 = vst.msk [vmem:[%s5] sm:$0xf] %vm175, %v171
  // Predicated region
  $region22: #{transformer_forward.19} parent=0 // pred_check
    _
  $region23: #{transformer_forward.19} parent=0 // pred_check_branch
    %178 = sbr.rel (0) target = $region25
  $region24: #{transformer_forward.19} parent=0 // pred_region
    _
  $region25: #{transformer_forward.19} parent=0 // pred_fallthru
    _
  // Predicated region
  $region26: #{transformer_forward.19} parent=0 // pred_check
    _
  $region27: #{transformer_forward.19} parent=0 // pred_check_branch
    %180 = sbr.rel (0) target = $region29
  $region28: #{transformer_forward.19} parent=0 // pred_region
    _
  $region29: #{transformer_forward.19} parent=0 // pred_fallthru
    _

// kernel: transformer_forward.21
$region0: #{transformer_forward.21}
  #allocation0 [shape = 'u32[]', space=smem, size = 0x4, offset = 0x4, fixed_abs, tag = 'smem constant byte address 0x4 - core index']
  #allocation1 [shape = 'u32[144,128]{1,0:T(1,128)}', space=vmem, size = 0x12000, scoped, tag = 'internal scratch']
  #allocation2 [shape = 'f32[4,64]{1,0:T(4,128)}', space=vmem, size = 0x800, scoped, tag = 'scratch operand']
  %s0 = inlined_call_operand.vmem [shape: bf16[4,64], index: 0, kind: input, shape index: {}]
  %s1 = inlined_call_operand.vmem [shape: bf16[64,64], index: 1, kind: input, shape index: {}]
  %s2 = inlined_call_operand.vmem [shape: f32[1,64], index: 2, kind: input, shape index: {}]
  %s3 = inlined_call_operand.vmem [shape: bf16[4,64], index: 3, kind: input, shape index: {}]
  %s4 = inlined_call_operand.vmem [shape: bf16[4,64], index: 4, kind: output, shape index: {}]
  %s5 = sld [smem:[#allocation0]]
  $region34: #{transformer_forward.21} parent=0
    _
  %s7 = ssub.s32 1, %s5
  %s8 = scalar_select 0, %s7, %s5
  // Predicated region
  $region2: #{transformer_forward.21} parent=0 // pred_check
    _
  $region3: #{transformer_forward.21} parent=0 // pred_check_branch
    %10 = sbr.rel (0) target = $region5
  $region4: #{transformer_forward.21} parent=0 // pred_region
    _
  $region5: #{transformer_forward.21} parent=0 // pred_fallthru
    _
  // Predicated region
  $region6: #{transformer_forward.21} parent=0 // pred_check
    _
  $region7: #{transformer_forward.21} parent=0 // pred_check_branch
    %12 = sbr.rel (0) target = $region9
  $region8: #{transformer_forward.21} parent=0 // pred_region
    _
  $region9: #{transformer_forward.21} parent=0 // pred_fallthru
    _
  // Predicated region
  $region10: #{transformer_forward.21} parent=0 // pred_check
    _
  $region11: #{transformer_forward.21} parent=0 // pred_check_branch
    %14 = sbr.rel (0) target = $region13
  $region12: #{transformer_forward.21} parent=0 // pred_region
    _
  $region13: #{transformer_forward.21} parent=0 // pred_fallthru
    _
  // Predicated region
  $region14: #{transformer_forward.21} parent=0 // pred_check
    _
  $region15: #{transformer_forward.21} parent=0 // pred_check_branch
    %16 = sbr.rel (0) target = $region17
  $region16: #{transformer_forward.21} parent=0 // pred_region
    _
  $region17: #{transformer_forward.21} parent=0 // pred_fallthru
    _
  %p18 = scmp.eq.s32.totalorder 0, 0
  // Predicated region
  $region18: #{transformer_forward.21} parent=0 // pred_check
    %p19 = pneg %p18
  $region19: #{transformer_forward.21} parent=0 // pred_check_branch
    %21 = sbr.rel (%p19) target = $region21
  $region20: #{transformer_forward.21} parent=0 // pred_region
    %vm22 = vcmask 519168
    %23 = vst.msk [vmem:[#allocation2] sm:$0xf] %vm22, 0.0
  $region21: #{transformer_forward.21} parent=0 // pred_fallthru
    _
  %v24 = vld [vmem:[#allocation2] sm:$0xf]
  %v25 = vld [vmem:[%s0] sm:$0x3]
  %v26 = vld [vmem:[%s1] sm:$0xf]
  %v27 = vld [vmem:[%s1 + $0x4] sm:$0xf]
  %v28 = vld [vmem:[%s1 + $0x8] sm:$0xf]
  %v29 = vld [vmem:[%s1 + $0xc] sm:$0xf]
  %v30 = vld [vmem:[%s1 + $0x10] sm:$0xf]
  %v31 = vld [vmem:[%s1 + $0x14] sm:$0xf]
  %v32 = vld [vmem:[%s1 + $0x18] sm:$0xf]
  %v33 = vld [vmem:[%s1 + $0x1c] sm:$0xf]
  %v42 = vunpack.c.l.b16 %v26
  %v43 = vunpack.c.l.b16 %v27
  %v44 = vunpack.c.l.b16 %v28
  %v45 = vunpack.c.l.b16 %v29
  %v46 = vunpack.c.l.b16 %v30
  %v47 = vunpack.c.l.b16 %v31
  %v48 = vunpack.c.l.b16 %v32
  %v49 = vunpack.c.l.b16 %v33
  %v50 = vpack.c.b16 %v43, %v42
  %v51 = vpack.c.b16 %v45, %v44
  %v52 = vpack.c.b16 %v47, %v46
  %v53 = vpack.c.b16 %v49, %v48
  %vm58 = vcmask 523264
  %v60 = vsel %vm58, %v25, 0
  %62 = vmatprep.subr.bf16.mxu0 0
  %63 = vmatpush1.bf16.msra.mxu0 0
  %64 = vmatprep.subr.bf16.mxu0 0
  %65 = vmatpush1.bf16.msra.mxu0 0
  %66 = vmatprep.subr.bf16.mxu0 0
  %67 = vmatpush1.bf16.msra.mxu0 0
  %68 = vmatprep.subr.bf16.mxu0 0
  %69 = vmatpush1.bf16.msra.mxu0 0
  %70 = vmatprep.subr.bf16.mxu0 0
  %71 = vmatpush1.bf16.msra.mxu0 %v53
  %72 = vmatprep.subr.bf16.mxu0 0
  %73 = vmatpush1.bf16.msra.mxu0 %v52
  %74 = vmatprep.subr.bf16.mxu0 0
  %75 = vmatpush1.bf16.msra.mxu0 %v51
  %76 = vmatprep.subr.bf16.mxu0 0
  %77 = vmatpush1.bf16.msra.mxu0 %v50
  %78 = vmatprep.subr.bf16.mxu0 0
  %79 = vmatpush2.bf16.msra.mxu0 0
  %80 = vmatprep.subr.bf16.mxu0 0
  %81 = vmatpush2.bf16.msra.mxu0 0
  %82 = vmatprep.subr.bf16.mxu0 0
  %83 = vmatpush2.bf16.msra.mxu0 0
  %84 = vmatprep.subr.bf16.mxu0 0
  %85 = vmatpush2.bf16.msra.mxu0 0
  %86 = vmatprep.subr.bf16.mxu0 0
  %87 = vmatpush2.bf16.msra.mxu0 0
  %88 = vmatprep.subr.bf16.mxu0 0
  %89 = vmatpush2.bf16.msra.mxu0 0
  %90 = vmatprep.subr.bf16.mxu0 0
  %91 = vmatpush2.bf16.msra.mxu0 0
  %92 = vmatprep.subr.bf16.mxu0 0
  %93 = vmatpush2.bf16.msra.mxu0 0
  %94 = vmatprep.mubr.bf16.mxu0 0
  %95 = vmatmul.mubr.bf16.gmra.mxu0 %v60
  %v96 = vpop.f32.mrf.mxu0
  %v97 = vadd.f32 0.0, %v96
  %v98 = vpop.f32.mrf.mxu0
  %v99 = vpop.f32.mrf.mxu0
  %v100 = vpop.f32.mrf.mxu0
  %101 = vdwg.mxu0
  %v102 = vadd.f32 %v24, %v97
  %vm103 = vcmask 519168
  %104 = vst.msk [vmem:[#allocation2] sm:$0xf] %vm103, %v102
  // Predicated region
  $region22: #{transformer_forward.21} parent=0 // pred_check
    %p105 = pneg %p18
  $region23: #{transformer_forward.21} parent=0 // pred_check_branch
    %107 = sbr.rel (%p105) target = $region25
  $region24: #{transformer_forward.21} parent=0 // pred_region
    %v108 = vld [vmem:[#allocation2] sm:$0xf]
    %v109 = vld [vmem:[%s2] sm:$0x1]
    %v111 = vlaneseq
    %v112 = vshrl.u32 %v111, 7
    %v113 = vsub.s32 0, %v112
    %v114 = vrot.slane %v109, %v113
    %v116 = vadd.f32 %v108, %v114
    %v117 = vld [vmem:[%s3] sm:$0x3]
    %v118 = vunpack.c.l.bf16 %v117
    %v119 = vadd.f32 %v116, %v118
    %v120 = vpack.c.bf16 %v119, %v119
    %vm121 = vcmask 517120
    %122 = vst.msk [vmem:[%s4] sm:$0x3] %vm121, %v120
  $region25: #{transformer_forward.21} parent=0 // pred_fallthru
    _
  // Predicated region
  $region26: #{transformer_forward.21} parent=0 // pred_check
    _
  $region27: #{transformer_forward.21} parent=0 // pred_check_branch
    %124 = sbr.rel (0) target = $region29
  $region28: #{transformer_forward.21} parent=0 // pred_region
    _
  $region29: #{transformer_forward.21} parent=0 // pred_fallthru
    _
  // Predicated region
  $region30: #{transformer_forward.21} parent=0 // pred_check
    _
  $region31: #{transformer_forward.21} parent=0 // pred_check_branch
    %126 = sbr.rel (0) target = $region33
  $region32: #{transformer_forward.21} parent=0 // pred_region
    _
  $region33: #{transformer_forward.21} parent=0 // pred_fallthru
    _

// kernel: transformer_forward.20
$region0: #{transformer_forward.20}
  #allocation0 [shape = 'u32[]', space=smem, size = 0x4, offset = 0x4, fixed_abs, tag = 'smem constant byte address 0x4 - core index']
  #allocation1 [shape = 'u32[144,128]{1,0:T(1,128)}', space=vmem, size = 0x12000, scoped, tag = 'internal scratch']
  %s0 = inlined_call_operand.vmem [shape: bf16[2,2,192], index: 0, kind: input, shape index: {}]
  %s1 = inlined_call_operand.vmem [shape: bf16[2,2,64], index: 1, kind: output, shape index: {}]
  %s2 = sld [smem:[#allocation0]]
  $region37: #{transformer_forward.20} parent=0
    _
  %s4 = ssub.s32 1, %s2
  %s5 = scalar_select 0, %s4, %s2
  loop: start=0, step=1, limit=4
  $region2: #{transformer_forward.20} parent=0 // loop_pre_header
    _
  $region3: #{transformer_forward.20} parent=0 // loop_header
    %s7 = sphi 0, %s11
    %p8 = scmp.ge.s32.totalorder %s7, 4
    %s17 = sphi 0, %s19
    %s20 = sphi 0, %s17
    %s21 = sphi 0, %s20
    %s37 = sphi 0, %s21
    %s43 = sphi 0, %s45
    %s46 = sphi 0, %s43
    %s47 = sphi 0, %s46
    %s63 = sphi 0, %s47
  $region4: #{transformer_forward.20} parent=0 // loop_header_branch
    %10 = sbr.rel (%p8) target = $region8
  $region5: #{transformer_forward.20} parent=0 // loop_body
    %s12 = ssub.s32 %s7, 1
    %s13 = ssub.s32 %s7, 2
    %s14 = sadd.s32 %s7, 1
    %s15 = ssub.s32 %s7, %s14
    %p16 = scmp.eq.s32.totalorder %s15, 0
    %s18 = sadd.s32 %s17, 1
    %s19 = scalar_select %p16, %s17, %s18
    %p22 = pneg %p16
    %p23 = scmp.eq.s32.totalorder %s7, 1
    %p24 = por %p22, %p23
    %p25 = scmp.ne.s32.totalorder %s17, %s20
    %p26 = scmp.eq.s32.totalorder %s7, 0
    %p27 = por %p25, %p26
    %p28 = scmp.ne.s32.totalorder %s17, %s20
    %p29 = scmp.eq.s32.totalorder %s12, 1
    %p30 = por %p28, %p29
    %p31 = scmp.ne.s32.totalorder %s20, %s21
    %p32 = scmp.eq.s32.totalorder %s12, 0
    %p33 = por %p31, %p32
    %p34 = scmp.ne.s32.totalorder %s20, %s21
    %p35 = scmp.eq.s32.totalorder %s13, 1
    %p36 = por %p34, %p35
    %p38 = scmp.ne.s32.totalorder %s21, %s37
    %p39 = scmp.eq.s32.totalorder %s13, 0
    %p40 = por %p38, %p39
    %s41 = ssub.s32 %s7, %s14
    %p42 = scmp.eq.s32.totalorder %s41, 0
    %s44 = sadd.s32 %s43, 1
    %s45 = scalar_select %p42, %s43, %s44
    %p48 = pneg %p42
    %p49 = scmp.eq.s32.totalorder %s7, 1
    %p50 = por %p48, %p49
    %p51 = scmp.ne.s32.totalorder %s43, %s46
    %p52 = scmp.eq.s32.totalorder %s7, 0
    %p53 = por %p51, %p52
    %p54 = scmp.ne.s32.totalorder %s43, %s46
    %p55 = scmp.eq.s32.totalorder %s12, 1
    %p56 = por %p54, %p55
    %p57 = scmp.ne.s32.totalorder %s46, %s47
    %p58 = scmp.eq.s32.totalorder %s12, 0
    %p59 = por %p57, %p58
    %p60 = scmp.ne.s32.totalorder %s46, %s47
    %p61 = scmp.eq.s32.totalorder %s13, 1
    %p62 = por %p60, %p61
    %p64 = scmp.ne.s32.totalorder %s47, %s63
    %p65 = scmp.eq.s32.totalorder %s13, 0
    %p66 = por %p64, %p65
    %p67 = scmp.le.s32.totalorder 1, %s7
    %p68 = scmp.lt.s32.totalorder %s7, 3
    %p69 = pnand %p67, %p68
    %p70 = pneg %p69
    // Predicated region
    $region9: #{transformer_forward.20} parent=5 // pred_check
      _
    $region10: #{transformer_forward.20} parent=5 // pred_check_branch
      %72 = sbr.rel (%p69) target = $region12
    $region11: #{transformer_forward.20} parent=5 // pred_region
      %s73 = ssub.s32 %s7, 1
    $region12: #{transformer_forward.20} parent=5 // pred_fallthru
      _
    %p74 = scmp.lt.s32.totalorder %s7, 2
    // Predicated region
    $region13: #{transformer_forward.20} parent=5 // pred_check
      %p75 = pneg %p74
    $region14: #{transformer_forward.20} parent=5 // pred_check_branch
      %77 = sbr.rel (%p75) target = $region16
    $region15: #{transformer_forward.20} parent=5 // pred_region
      // Predicated region
      $region17: #{transformer_forward.20} parent=15 // pred_check
        %p78 = pneg %p27
      $region18: #{transformer_forward.20} parent=15 // pred_check_branch
        %80 = sbr.rel (%p78) target = $region20
      $region19: #{transformer_forward.20} parent=15 // pred_region
        %p81 = scmp.lt.s32.totalorder %s7, 1
        %s82 = scalar_select %p81, %s7, 1
        %s83 = smul.addr %s82, 2
        %s84 = scalar_lea.vmem %s0, %s83
      $region20: #{transformer_forward.20} parent=15 // pred_fallthru
        _
    $region16: #{transformer_forward.20} parent=5 // pred_fallthru
      _
    %p85 = scmp.le.s32.totalorder 1, %s7
    %p86 = scmp.lt.s32.totalorder %s7, 3
    %p87 = pnand %p85, %p86
    %p88 = pneg %p87
    // Predicated region
    $region21: #{transformer_forward.20} parent=5 // pred_check
      _
    $region22: #{transformer_forward.20} parent=5 // pred_check_branch
      %90 = sbr.rel (%p87) target = $region24
    $region23: #{transformer_forward.20} parent=5 // pred_region
      %s91 = ssub.s32 %s7, 1
      %p92 = scmp.lt.s32.totalorder %s12, 1
      %s93 = scalar_select %p92, %s12, 1
      %s94 = smul.addr %s93, 2
      %s95 = scalar_lea.vmem %s0, %s94
      %p96 = pneg %p33
      %p97 = pneg %p30
      %p98 = pneg %p59
      %p99 = pneg %p56
      %p100 = scmp.lt.s32.totalorder %s12, 1
      %s101 = scalar_select %p100, %s12, 1
      %s102 = scalar_lea.vmem %s1, %s101
      %p103 = scmp.lt.s32.totalorder %s12, 1
      %s104 = scalar_select %p103, %s12, 1
      %s105 = smul.addr %s104, 2
      %s106 = scalar_lea.vmem %s0, %s105
      %p107 = scmp.lt.s32.totalorder %s12, 1
      %s108 = scalar_select %p107, %s12, 1
      %s109 = scalar_lea.vmem %s1, %s108
      %v111 = vld [vmem:[%s106] sm:$0x3]
      %v114 = vunpack.c.l.s4 1966171168
      %v115 = vunpack.c.0.s8 %v114
      %v116 = vlaneseq
      %v117 = vshrl.u32 %v116, 7
      %v118 = vsub.s32 %v115, %v117
      %v119 = vrot.slane %v111, %v118
      %v121 = vunpack.c.l.s4 1966171168
      %v122 = vunpack.c.0.s8 %v121
      %v123 = vlaneseq
      %v124 = vshrl.u32 %v123, 7
      %v125 = vsub.s32 %v122, %v124
      %v126 = vrot.slane %v119, %v125
      %127 = vrot.lane.b32.xlu0 %v126, 64
      %v128 = vpop.permute.xlu0 %127
      %vm129 = vcmask 130048
      %v131 = vsel %vm129, %v111, 0
      %v134 = vsel %vm129, %v128, 0
      %136 = vmatprep.subr.bf16.mxu0 0
      %137 = vmatpush1.bf16.xpose.msra.mxu0 0
      %138 = vmatprep.subr.bf16.mxu0 0
      %139 = vmatpush1.bf16.xpose.msra.mxu0 0
      %140 = vmatprep.subr.bf16.mxu0 0
      %141 = vmatpush1.bf16.xpose.msra.mxu0 0
      %142 = vmatprep.subr.bf16.mxu0 0
      %143 = vmatpush1.bf16.xpose.msra.mxu0 0
      %144 = vmatprep.subr.bf16.mxu0 0
      %145 = vmatpush1.bf16.xpose.msra.mxu0 0
      %146 = vmatprep.subr.bf16.mxu0 0
      %147 = vmatpush1.bf16.xpose.msra.mxu0 0
      %148 = vmatprep.subr.bf16.mxu0 0
      %149 = vmatpush1.bf16.xpose.msra.mxu0 0
      %150 = vmatprep.subr.bf16.mxu0 0
      %151 = vmatpush1.bf16.xpose.msra.mxu0 %v134
      %152 = vmatprep.subr.bf16.mxu0 0
      %153 = vmatpush2.bf16.xpose.msra.mxu0 0
      %154 = vmatprep.subr.bf16.mxu0 0
      %155 = vmatpush2.bf16.xpose.msra.mxu0 0
      %156 = vmatprep.subr.bf16.mxu0 0
      %157 = vmatpush2.bf16.xpose.msra.mxu0 0
      %158 = vmatprep.subr.bf16.mxu0 0
      %159 = vmatpush2.bf16.xpose.msra.mxu0 0
      %160 = vmatprep.subr.bf16.mxu0 0
      %161 = vmatpush2.bf16.xpose.msra.mxu0 0
      %162 = vmatprep.subr.bf16.mxu0 0
      %163 = vmatpush2.bf16.xpose.msra.mxu0 0
      %164 = vmatprep.subr.bf16.mxu0 0
      %165 = vmatpush2.bf16.xpose.msra.mxu0 0
      %166 = vmatprep.subr.bf16.mxu0 0
      %167 = vmatpush2.bf16.xpose.msra.mxu0 0
      %168 = vmatprep.mubr.bf16.mxu0 0
      %169 = vmatmul.mubr.bf16.gmra.mxu0 %v131
      %v170 = vpop.f32.mrf.mxu0
      %v171 = vadd.f32 0.0, %v170
      %v172 = vpop.f32.mrf.mxu0
      %v173 = vpop.f32.mrf.mxu0
      %v174 = vpop.f32.mrf.mxu0
      %175 = vdwg.mxu0
      %v176 = vmul.f32 %v171, 0.25
      %vm177 = vcmask 9216
      %v178 = vsel %vm177, %v176, -inf
      %179 = vmax.xlane.f32.xlu0 %v178
      %v180 = vpop.xlane.xlu0 %179
      %v181 = vsub.f32 %v176, %v180
      %v182 = vmul.f32 %v181, 1.442695
      %v183 = vpow.pop %v182
      %v184 = vsel %vm177, %v183, 0.0
      %185 = vadd.xlane.f32.xlu0 %v184
      %v186 = vpop.xlane.xlu0 %185
      %v187 = vrcp.pop %v186
      %v188 = vmul.f32 %v183, %v187
      %v189 = vpack.c.bf16 %v188, %v188
      %v190 = vcombine.high %v119, %v119
      %v192 = vunpack.c.l.s4 1966171168
      %v193 = vunpack.c.0.s8 %v192
      %v194 = vlaneseq
      %v195 = vshrl.u32 %v194, 7
      %v196 = vsub.s32 %v193, %v195
      %v197 = vrot.slane %v190, %v196
      %vm198 = vcmask 15360
      %v200 = vsel %vm198, %v189, 0
      %vm202 = vcmask 1040384
      %v204 = vsel %vm202, %v197, 0
      %206 = vmatprep.subr.bf16.mxu0 0
      %207 = vmatpush1.bf16.msra.mxu0 0
      %208 = vmatprep.subr.bf16.mxu0 0
      %209 = vmatpush1.bf16.msra.mxu0 0
      %210 = vmatprep.subr.bf16.mxu0 0
      %211 = vmatpush1.bf16.msra.mxu0 0
      %212 = vmatprep.subr.bf16.mxu0 0
      %213 = vmatpush1.bf16.msra.mxu0 0
      %214 = vmatprep.subr.bf16.mxu0 0
      %215 = vmatpush1.bf16.msra.mxu0 0
      %216 = vmatprep.subr.bf16.mxu0 0
      %217 = vmatpush1.bf16.msra.mxu0 0
      %218 = vmatprep.subr.bf16.mxu0 0
      %219 = vmatpush1.bf16.msra.mxu0 0
      %220 = vmatprep.subr.bf16.mxu0 0
      %221 = vmatpush1.bf16.msra.mxu0 %v204
      %222 = vmatprep.subr.bf16.mxu0 0
      %223 = vmatpush2.bf16.msra.mxu0 0
      %224 = vmatprep.subr.bf16.mxu0 0
      %225 = vmatpush2.bf16.msra.mxu0 0
      %226 = vmatprep.subr.bf16.mxu0 0
      %227 = vmatpush2.bf16.msra.mxu0 0
      %228 = vmatprep.subr.bf16.mxu0 0
      %229 = vmatpush2.bf16.msra.mxu0 0
      %230 = vmatprep.subr.bf16.mxu0 0
      %231 = vmatpush2.bf16.msra.mxu0 0
      %232 = vmatprep.subr.bf16.mxu0 0
      %233 = vmatpush2.bf16.msra.mxu0 0
      %234 = vmatprep.subr.bf16.mxu0 0
      %235 = vmatpush2.bf16.msra.mxu0 0
      %236 = vmatprep.subr.bf16.mxu0 0
      %237 = vmatpush2.bf16.msra.mxu0 0
      %238 = vmatprep.mubr.bf16.mxu0 0
      %239 = vmatmul.mubr.bf16.gmra.mxu0 %v200
      %v240 = vpop.f32.mrf.mxu0
      %v241 = vadd.f32 0.0, %v240
      %v242 = vpop.f32.mrf.mxu0
      %v243 = vpop.f32.mrf.mxu0
      %v244 = vpop.f32.mrf.mxu0
      %245 = vdwg.mxu0
      %246 = vrot.lane.b32.xlu0 %v126, 112
      %v247 = vpop.permute.xlu0 %246
      %248 = vrot.lane.b32.xlu0 %v126, 48
      %v249 = vpop.permute.xlu0 %248
      %v251 = vsel %vm129, %v247, 0
      %v254 = vsel %vm129, %v249, 0
      %256 = vmatprep.subr.bf16.mxu0 0
      %257 = vmatpush1.bf16.xpose.msra.mxu0 0
      %258 = vmatprep.subr.bf16.mxu0 0
      %259 = vmatpush1.bf16.xpose.msra.mxu0 0
      %260 = vmatprep.subr.bf16.mxu0 0
      %261 = vmatpush1.bf16.xpose.msra.mxu0 0
      %262 = vmatprep.subr.bf16.mxu0 0
      %263 = vmatpush1.bf16.xpose.msra.mxu0 0
      %264 = vmatprep.subr.bf16.mxu0 0
      %265 = vmatpush1.bf16.xpose.msra.mxu0 0
      %266 = vmatprep.subr.bf16.mxu0 0
      %267 = vmatpush1.bf16.xpose.msra.mxu0 0
      %268 = vmatprep.subr.bf16.mxu0 0
      %269 = vmatpush1.bf16.xpose.msra.mxu0 0
      %270 = vmatprep.subr.bf16.mxu0 0
      %271 = vmatpush1.bf16.xpose.msra.mxu0 %v254
      %272 = vmatprep.subr.bf16.mxu0 0
      %273 = vmatpush2.bf16.xpose.msra.mxu0 0
      %274 = vmatprep.subr.bf16.mxu0 0
      %275 = vmatpush2.bf16.xpose.msra.mxu0 0
      %276 = vmatprep.subr.bf16.mxu0 0
      %277 = vmatpush2.bf16.xpose.msra.mxu0 0
      %278 = vmatprep.subr.bf16.mxu0 0
      %279 = vmatpush2.bf16.xpose.msra.mxu0 0
      %280 = vmatprep.subr.bf16.mxu0 0
      %281 = vmatpush2.bf16.xpose.msra.mxu0 0
      %282 = vmatprep.subr.bf16.mxu0 0
      %283 = vmatpush2.bf16.xpose.msra.mxu0 0
      %284 = vmatprep.subr.bf16.mxu0 0
      %285 = vmatpush2.bf16.xpose.msra.mxu0 0
      %286 = vmatprep.subr.bf16.mxu0 0
      %287 = vmatpush2.bf16.xpose.msra.mxu0 0
      %288 = vmatprep.mubr.bf16.mxu0 0
      %289 = vmatmul.mubr.bf16.gmra.mxu0 %v251
      %v290 = vpop.f32.mrf.mxu0
      %v291 = vadd.f32 0.0, %v290
      %v292 = vpop.f32.mrf.mxu0
      %v293 = vpop.f32.mrf.mxu0
      %v294 = vpop.f32.mrf.mxu0
      %295 = vdwg.mxu0
      %v296 = vmul.f32 %v291, 0.25
      %v297 = vsel %vm177, %v296, -inf
      %298 = vmax.xlane.f32.xlu0 %v297
      %v299 = vpop.xlane.xlu0 %298
      %v300 = vsub.f32 %v296, %v299
      %v301 = vmul.f32 %v300, 1.442695
      %v302 = vpow.pop %v301
      %v303 = vsel %vm177, %v302, 0.0
      %304 = vadd.xlane.f32.xlu0 %v303
      %v305 = vpop.xlane.xlu0 %304
      %v306 = vrcp.pop %v305
      %v307 = vmul.f32 %v302, %v306
      %v308 = vpack.c.bf16 %v307, %v307
      %309 = vrot.lane.b32.xlu0 %v197, 112
      %v310 = vpop.permute.xlu0 %309
      %v312 = vsel %vm198, %v308, 0
      %v315 = vsel %vm202, %v310, 0
      %317 = vmatprep.subr.bf16.mxu0 0
      %318 = vmatpush1.bf16.msra.mxu0 0
      %319 = vmatprep.subr.bf16.mxu0 0
      %320 = vmatpush1.bf16.msra.mxu0 0
      %321 = vmatprep.subr.bf16.mxu0 0
      %322 = vmatpush1.bf16.msra.mxu0 0
      %323 = vmatprep.subr.bf16.mxu0 0
      %324 = vmatpush1.bf16.msra.mxu0 0
      %325 = vmatprep.subr.bf16.mxu0 0
      %326 = vmatpush1.bf16.msra.mxu0 0
      %327 = vmatprep.subr.bf16.mxu0 0
      %328 = vmatpush1.bf16.msra.mxu0 0
      %329 = vmatprep.subr.bf16.mxu0 0
      %330 = vmatpush1.bf16.msra.mxu0 0
      %331 = vmatprep.subr.bf16.mxu0 0
      %332 = vmatpush1.bf16.msra.mxu0 %v315
      %333 = vmatprep.subr.bf16.mxu0 0
      %334 = vmatpush2.bf16.msra.mxu0 0
      %335 = vmatprep.subr.bf16.mxu0 0
      %336 = vmatpush2.bf16.msra.mxu0 0
      %337 = vmatprep.subr.bf16.mxu0 0
      %338 = vmatpush2.bf16.msra.mxu0 0
      %339 = vmatprep.subr.bf16.mxu0 0
      %340 = vmatpush2.bf16.msra.mxu0 0
      %341 = vmatprep.subr.bf16.mxu0 0
      %342 = vmatpush2.bf16.msra.mxu0 0
      %343 = vmatprep.subr.bf16.mxu0 0
      %344 = vmatpush2.bf16.msra.mxu0 0
      %345 = vmatprep.subr.bf16.mxu0 0
      %346 = vmatpush2.bf16.msra.mxu0 0
      %347 = vmatprep.subr.bf16.mxu0 0
      %348 = vmatpush2.bf16.msra.mxu0 0
      %349 = vmatprep.mubr.bf16.mxu0 0
      %350 = vmatmul.mubr.bf16.gmra.mxu0 %v312
      %v351 = vpop.f32.mrf.mxu0
      %v352 = vadd.f32 0.0, %v351
      %v353 = vpop.f32.mrf.mxu0
      %v354 = vpop.f32.mrf.mxu0
      %v355 = vpop.f32.mrf.mxu0
      %356 = vdwg.mxu0
      %357 = vrot.lane.b32.xlu0 %v126, 96
      %v358 = vpop.permute.xlu0 %357
      %359 = vrot.lane.b32.xlu0 %v126, 32
      %v360 = vpop.permute.xlu0 %359
      %v362 = vsel %vm129, %v358, 0
      %v365 = vsel %vm129, %v360, 0
      %367 = vmatprep.subr.bf16.mxu0 0
      %368 = vmatpush1.bf16.xpose.msra.mxu0 0
      %369 = vmatprep.subr.bf16.mxu0 0
      %370 = vmatpush1.bf16.xpose.msra.mxu0 0
      %371 = vmatprep.subr.bf16.mxu0 0
      %372 = vmatpush1.bf16.xpose.msra.mxu0 0
      %373 = vmatprep.subr.bf16.mxu0 0
      %374 = vmatpush1.bf16.xpose.msra.mxu0 0
      %375 = vmatprep.subr.bf16.mxu0 0
      %376 = vmatpush1.bf16.xpose.msra.mxu0 0
      %377 = vmatprep.subr.bf16.mxu0 0
      %378 = vmatpush1.bf16.xpose.msra.mxu0 0
      %379 = vmatprep.subr.bf16.mxu0 0
      %380 = vmatpush1.bf16.xpose.msra.mxu0 0
      %381 = vmatprep.subr.bf16.mxu0 0
      %382 = vmatpush1.bf16.xpose.msra.mxu0 %v365
      %383 = vmatprep.subr.bf16.mxu0 0
      %384 = vmatpush2.bf16.xpose.msra.mxu0 0
      %385 = vmatprep.subr.bf16.mxu0 0
      %386 = vmatpush2.bf16.xpose.msra.mxu0 0
      %387 = vmatprep.subr.bf16.mxu0 0
      %388 = vmatpush2.bf16.xpose.msra.mxu0 0
      %389 = vmatprep.subr.bf16.mxu0 0
      %390 = vmatpush2.bf16.xpose.msra.mxu0 0
      %391 = vmatprep.subr.bf16.mxu0 0
      %392 = vmatpush2.bf16.xpose.msra.mxu0 0
      %393 = vmatprep.subr.bf16.mxu0 0
      %394 = vmatpush2.bf16.xpose.msra.mxu0 0
      %395 = vmatprep.subr.bf16.mxu0 0
      %396 = vmatpush2.bf16.xpose.msra.mxu0 0
      %397 = vmatprep.subr.bf16.mxu0 0
      %398 = vmatpush2.bf16.xpose.msra.mxu0 0
      %399 = vmatprep.mubr.bf16.mxu0 0
      %400 = vmatmul.mubr.bf16.gmra.mxu0 %v362
      %v401 = vpop.f32.mrf.mxu0
      %v402 = vadd.f32 0.0, %v401
      %v403 = vpop.f32.mrf.mxu0
      %v404 = vpop.f32.mrf.mxu0
      %v405 = vpop.f32.mrf.mxu0
      %406 = vdwg.mxu0
      %v407 = vmul.f32 %v402, 0.25
      %v408 = vsel %vm177, %v407, -inf
      %409 = vmax.xlane.f32.xlu0 %v408
      %v410 = vpop.xlane.xlu0 %409
      %v411 = vsub.f32 %v407, %v410
      %v412 = vmul.f32 %v411, 1.442695
      %v413 = vpow.pop %v412
      %v414 = vsel %vm177, %v413, 0.0
      %415 = vadd.xlane.f32.xlu0 %v414
      %v416 = vpop.xlane.xlu0 %415
      %v417 = vrcp.pop %v416
      %v418 = vmul.f32 %v413, %v417
      %v419 = vpack.c.bf16 %v418, %v418
      %420 = vrot.lane.b32.xlu0 %v197, 96
      %v421 = vpop.permute.xlu0 %420
      %v423 = vsel %vm198, %v419, 0
      %v426 = vsel %vm202, %v421, 0
      %428 = vmatprep.subr.bf16.mxu0 0
      %429 = vmatpush1.bf16.msra.mxu0 0
      %430 = vmatprep.subr.bf16.mxu0 0
      %431 = vmatpush1.bf16.msra.mxu0 0
      %432 = vmatprep.subr.bf16.mxu0 0
      %433 = vmatpush1.bf16.msra.mxu0 0
      %434 = vmatprep.subr.bf16.mxu0 0
      %435 = vmatpush1.bf16.msra.mxu0 0
      %436 = vmatprep.subr.bf16.mxu0 0
      %437 = vmatpush1.bf16.msra.mxu0 0
      %438 = vmatprep.subr.bf16.mxu0 0
      %439 = vmatpush1.bf16.msra.mxu0 0
      %440 = vmatprep.subr.bf16.mxu0 0
      %441 = vmatpush1.bf16.msra.mxu0 0
      %442 = vmatprep.subr.bf16.mxu0 0
      %443 = vmatpush1.bf16.msra.mxu0 %v426
      %444 = vmatprep.subr.bf16.mxu0 0
      %445 = vmatpush2.bf16.msra.mxu0 0
      %446 = vmatprep.subr.bf16.mxu0 0
      %447 = vmatpush2.bf16.msra.mxu0 0
      %448 = vmatprep.subr.bf16.mxu0 0
      %449 = vmatpush2.bf16.msra.mxu0 0
      %450 = vmatprep.subr.bf16.mxu0 0
      %451 = vmatpush2.bf16.msra.mxu0 0
      %452 = vmatprep.subr.bf16.mxu0 0
      %453 = vmatpush2.bf16.msra.mxu0 0
      %454 = vmatprep.subr.bf16.mxu0 0
      %455 = vmatpush2.bf16.msra.mxu0 0
      %456 = vmatprep.subr.bf16.mxu0 0
      %457 = vmatpush2.bf16.msra.mxu0 0
      %458 = vmatprep.subr.bf16.mxu0 0
      %459 = vmatpush2.bf16.msra.mxu0 0
      %460 = vmatprep.mubr.bf16.mxu0 0
      %461 = vmatmul.mubr.bf16.gmra.mxu0 %v423
      %v462 = vpop.f32.mrf.mxu0
      %v463 = vadd.f32 0.0, %v462
      %v464 = vpop.f32.mrf.mxu0
      %v465 = vpop.f32.mrf.mxu0
      %v466 = vpop.f32.mrf.mxu0
      %467 = vdwg.mxu0
      %468 = vrot.lane.b32.xlu0 %v126, 80
      %v469 = vpop.permute.xlu0 %468
      %470 = vrot.lane.b32.xlu0 %v126, 16
      %v471 = vpop.permute.xlu0 %470
      %v473 = vsel %vm129, %v469, 0
      %v476 = vsel %vm129, %v471, 0
      %478 = vmatprep.subr.bf16.mxu0 0
      %479 = vmatpush1.bf16.xpose.msra.mxu0 0
      %480 = vmatprep.subr.bf16.mxu0 0
      %481 = vmatpush1.bf16.xpose.msra.mxu0 0
      %482 = vmatprep.subr.bf16.mxu0 0
      %483 = vmatpush1.bf16.xpose.msra.mxu0 0
      %484 = vmatprep.subr.bf16.mxu0 0
      %485 = vmatpush1.bf16.xpose.msra.mxu0 0
      %486 = vmatprep.subr.bf16.mxu0 0
      %487 = vmatpush1.bf16.xpose.msra.mxu0 0
      %488 = vmatprep.subr.bf16.mxu0 0
      %489 = vmatpush1.bf16.xpose.msra.mxu0 0
      %490 = vmatprep.subr.bf16.mxu0 0
      %491 = vmatpush1.bf16.xpose.msra.mxu0 0
      %492 = vmatprep.subr.bf16.mxu0 0
      %493 = vmatpush1.bf16.xpose.msra.mxu0 %v476
      %494 = vmatprep.subr.bf16.mxu0 0
      %495 = vmatpush2.bf16.xpose.msra.mxu0 0
      %496 = vmatprep.subr.bf16.mxu0 0
      %497 = vmatpush2.bf16.xpose.msra.mxu0 0
      %498 = vmatprep.subr.bf16.mxu0 0
      %499 = vmatpush2.bf16.xpose.msra.mxu0 0
      %500 = vmatprep.subr.bf16.mxu0 0
      %501 = vmatpush2.bf16.xpose.msra.mxu0 0
      %502 = vmatprep.subr.bf16.mxu0 0
      %503 = vmatpush2.bf16.xpose.msra.mxu0 0
      %504 = vmatprep.subr.bf16.mxu0 0
      %505 = vmatpush2.bf16.xpose.msra.mxu0 0
      %506 = vmatprep.subr.bf16.mxu0 0
      %507 = vmatpush2.bf16.xpose.msra.mxu0 0
      %508 = vmatprep.subr.bf16.mxu0 0
      %509 = vmatpush2.bf16.xpose.msra.mxu0 0
      %510 = vmatprep.mubr.bf16.mxu0 0
      %511 = vmatmul.mubr.bf16.gmra.mxu0 %v473
      %v512 = vpop.f32.mrf.mxu0
      %v513 = vadd.f32 0.0, %v512
      %v514 = vpop.f32.mrf.mxu0
      %v515 = vpop.f32.mrf.mxu0
      %v516 = vpop.f32.mrf.mxu0
      %517 = vdwg.mxu0
      %v518 = vmul.f32 %v513, 0.25
      %v519 = vsel %vm177, %v518, -inf
      %520 = vmax.xlane.f32.xlu0 %v519
      %v521 = vpop.xlane.xlu0 %520
      %v522 = vsub.f32 %v518, %v521
      %v523 = vmul.f32 %v522, 1.442695
      %v524 = vpow.pop %v523
      %v525 = vsel %vm177, %v524, 0.0
      %526 = vadd.xlane.f32.xlu0 %v525
      %v527 = vpop.xlane.xlu0 %526
      %v528 = vrcp.pop %v527
      %v529 = vmul.f32 %v524, %v528
      %v530 = vpack.c.bf16 %v529, %v529
      %531 = vrot.lane.b32.xlu0 %v197, 80
      %v532 = vpop.permute.xlu0 %531
      %v534 = vsel %vm198, %v530, 0
      %v537 = vsel %vm202, %v532, 0
      %539 = vmatprep.subr.bf16.mxu0 0
      %540 = vmatpush1.bf16.msra.mxu0 0
      %541 = vmatprep.subr.bf16.mxu0 0
      %542 = vmatpush1.bf16.msra.mxu0 0
      %543 = vmatprep.subr.bf16.mxu0 0
      %544 = vmatpush1.bf16.msra.mxu0 0
      %545 = vmatprep.subr.bf16.mxu0 0
      %546 = vmatpush1.bf16.msra.mxu0 0
      %547 = vmatprep.subr.bf16.mxu0 0
      %548 = vmatpush1.bf16.msra.mxu0 0
      %549 = vmatprep.subr.bf16.mxu0 0
      %550 = vmatpush1.bf16.msra.mxu0 0
      %551 = vmatprep.subr.bf16.mxu0 0
      %552 = vmatpush1.bf16.msra.mxu0 0
      %553 = vmatprep.subr.bf16.mxu0 0
      %554 = vmatpush1.bf16.msra.mxu0 %v537
      %555 = vmatprep.subr.bf16.mxu0 0
      %556 = vmatpush2.bf16.msra.mxu0 0
      %557 = vmatprep.subr.bf16.mxu0 0
      %558 = vmatpush2.bf16.msra.mxu0 0
      %559 = vmatprep.subr.bf16.mxu0 0
      %560 = vmatpush2.bf16.msra.mxu0 0
      %561 = vmatprep.subr.bf16.mxu0 0
      %562 = vmatpush2.bf16.msra.mxu0 0
      %563 = vmatprep.subr.bf16.mxu0 0
      %564 = vmatpush2.bf16.msra.mxu0 0
      %565 = vmatprep.subr.bf16.mxu0 0
      %566 = vmatpush2.bf16.msra.mxu0 0
      %567 = vmatprep.subr.bf16.mxu0 0
      %568 = vmatpush2.bf16.msra.mxu0 0
      %569 = vmatprep.subr.bf16.mxu0 0
      %570 = vmatpush2.bf16.msra.mxu0 0
      %571 = vmatprep.mubr.bf16.mxu0 0
      %572 = vmatmul.mubr.bf16.gmra.mxu0 %v534
      %v573 = vpop.f32.mrf.mxu0
      %v574 = vadd.f32 0.0, %v573
      %v575 = vpop.f32.mrf.mxu0
      %v576 = vpop.f32.mrf.mxu0
      %v577 = vpop.f32.mrf.mxu0
      %578 = vdwg.mxu0
      %580 = vrot.lane.b32.xlu0 %v352, 16
      %v581 = vpop.permute.xlu0 %580
      %584 = vrot.lane.b32.xlu0 %v463, 32
      %v585 = vpop.permute.xlu0 %584
      %588 = vrot.lane.b32.xlu0 %v574, 48
      %v589 = vpop.permute.xlu0 %588
      %v591 = vsel %vm129, %v241, %v581
      %vm592 = vcmask 261120
      %v593 = vsel %vm592, %v591, %v585
      %vm594 = vcmask 392192
      %v595 = vsel %vm594, %v593, %v589
      %v596 = vpack.c.bf16 %v595, %v595
      %vm597 = vcmask 516096
      %598 = vst.msk [vmem:[%s109] sm:$0x1] %vm597, %v596
      %p599 = scmp.lt.s32.totalorder %s12, 1
      %s600 = scalar_select %p599, %s12, 1
      %s601 = scalar_lea.vmem %s1, %s600
      // Predicated region
      $region25: #{transformer_forward.20} parent=23 // pred_check
        %p602 = pneg %p56
      $region26: #{transformer_forward.20} parent=23 // pred_check_branch
        %604 = sbr.rel (%p602) target = $region28
      $region27: #{transformer_forward.20} parent=23 // pred_region
        _
      $region28: #{transformer_forward.20} parent=23 // pred_fallthru
        _
    $region24: #{transformer_forward.20} parent=5 // pred_fallthru
      _
    %p605 = scmp.le.s32.totalorder 2, %s7
    // Predicated region
    $region29: #{transformer_forward.20} parent=5 // pred_check
      %p606 = pneg %p605
    $region30: #{transformer_forward.20} parent=5 // pred_check_branch
      %608 = sbr.rel (%p606) target = $region32
    $region31: #{transformer_forward.20} parent=5 // pred_region
      %s609 = ssub.s32 %s7, 2
      // Predicated region
      $region33: #{transformer_forward.20} parent=31 // pred_check
        %p610 = pneg %p62
      $region34: #{transformer_forward.20} parent=31 // pred_check_branch
        %612 = sbr.rel (%p610) target = $region36
      $region35: #{transformer_forward.20} parent=31 // pred_region
        %p613 = scmp.lt.s32.totalorder %s13, 1
        %s614 = scalar_select %p613, %s13, 1
        %s615 = scalar_lea.vmem %s1, %s614
      $region36: #{transformer_forward.20} parent=31 // pred_fallthru
        _
    $region32: #{transformer_forward.20} parent=5 // pred_fallthru
      _
  $region6: #{transformer_forward.20} parent=0 // loop_footer
    %s11 = sadd.s32 1, %s7
  $region7: #{transformer_forward.20} parent=0 // loop_footer_branch
    %6 = sbr.rel target = $region3
  $region8: #{transformer_forward.20} parent=0 // loop_exit
    _

// kernel: transformer_forward.22
$region0: #{transformer_forward.22}
  #allocation0 [shape = 'u32[]', space=smem, size = 0x4, offset = 0x4, fixed_abs, tag = 'smem constant byte address 0x4 - core index']
  #allocation1 [shape = 'u32[144,128]{1,0:T(1,128)}', space=vmem, size = 0x12000, scoped, tag = 'internal scratch']
  %s0 = inlined_call_operand.vmem [shape: bf16[36,64], index: 0, kind: input, shape index: {}]
  %s1 = inlined_call_operand.vmem [shape: f32[1,64], index: 1, kind: input, shape index: {}]
  %s2 = inlined_call_operand.vmem [shape: f32[1,64], index: 2, kind: input, shape index: {}]
  %s3 = inlined_call_operand.vmem [shape: bf16[64,192], index: 3, kind: input, shape index: {}]
  %s4 = inlined_call_operand.vmem [shape: f32[1,192], index: 4, kind: input, shape index: {}]
  %s5 = inlined_call_operand.vmem [shape: bf16[36,192], index: 5, kind: output, shape index: {}]
  %s6 = sld [smem:[#allocation0]]
  $region30: #{transformer_forward.22} parent=0
    _
  %s8 = ssub.s32 1, %s6
  %s9 = scalar_select 0, %s8, %s6
  // Predicated region
  $region2: #{transformer_forward.22} parent=0 // pred_check
    _
  $region3: #{transformer_forward.22} parent=0 // pred_check_branch
    %11 = sbr.rel (0) target = $region5
  $region4: #{transformer_forward.22} parent=0 // pred_region
    _
  $region5: #{transformer_forward.22} parent=0 // pred_fallthru
    _
  // Predicated region
  $region6: #{transformer_forward.22} parent=0 // pred_check
    _
  $region7: #{transformer_forward.22} parent=0 // pred_check_branch
    %13 = sbr.rel (0) target = $region9
  $region8: #{transformer_forward.22} parent=0 // pred_region
    _
  $region9: #{transformer_forward.22} parent=0 // pred_fallthru
    _
  // Predicated region
  $region10: #{transformer_forward.22} parent=0 // pred_check
    _
  $region11: #{transformer_forward.22} parent=0 // pred_check_branch
    %15 = sbr.rel (0) target = $region13
  $region12: #{transformer_forward.22} parent=0 // pred_region
    _
  $region13: #{transformer_forward.22} parent=0 // pred_fallthru
    _
  // Predicated region
  $region14: #{transformer_forward.22} parent=0 // pred_check
    _
  $region15: #{transformer_forward.22} parent=0 // pred_check_branch
    %17 = sbr.rel (0) target = $region17
  $region16: #{transformer_forward.22} parent=0 // pred_region
    _
  $region17: #{transformer_forward.22} parent=0 // pred_fallthru
    _
  // Predicated region
  $region18: #{transformer_forward.22} parent=0 // pred_check
    _
  $region19: #{transformer_forward.22} parent=0 // pred_check_branch
    %19 = sbr.rel (0) target = $region21
  $region20: #{transformer_forward.22} parent=0 // pred_region
    _
  $region21: #{transformer_forward.22} parent=0 // pred_fallthru
    _
  %v21 = vld [vmem:[%s0] sm:$0xf]
  %v22 = vld [vmem:[%s0 + $0x4] sm:$0xf]
  %v23 = vld [vmem:[%s0 + $0x8] sm:$0xf]
  %v24 = vld [vmem:[%s0 + $0xc] sm:$0xf]
  %v25 = vld [vmem:[%s0 + $0x10] sm:$0x3]
  %v26 = vunpack.c.l.bf16 %v21
  %v27 = vunpack.c.l.bf16 %v22
  %v28 = vunpack.c.l.bf16 %v23
  %v29 = vunpack.c.l.bf16 %v24
  %v30 = vunpack.c.l.bf16 %v25
  %vm31 = vcmask 523264
  %v32 = vsel %vm31, %v26, 0.0
  %33 = vadd.xlane.f32.xlu0 %v32
  %v34 = vpop.xlane.xlu0 %33
  %v35 = vsel %vm31, %v27, 0.0
  %36 = vadd.xlane.f32.xlu0 %v35
  %v37 = vpop.xlane.xlu0 %36
  %v38 = vsel %vm31, %v28, 0.0
  %39 = vadd.xlane.f32.xlu0 %v38
  %v40 = vpop.xlane.xlu0 %39
  %v41 = vsel %vm31, %v29, 0.0
  %42 = vadd.xlane.f32.xlu0 %v41
  %v43 = vpop.xlane.xlu0 %42
  %vm44 = vcmask 519168
  %v45 = vsel %vm44, %v30, 0.0
  %46 = vadd.xlane.f32.xlu0 %v45
  %v47 = vpop.xlane.xlu0 %46
  %v48 = vrcp.pop 64.0
  %v49 = vmul.f32 %v34, %v48
  %v50 = vmul.f32 %v37, %v48
  %v51 = vmul.f32 %v40, %v48
  %v52 = vmul.f32 %v43, %v48
  %v53 = vmul.f32 %v47, %v48
  %v54 = vsub.f32 %v26, %v49
  %v55 = vsub.f32 %v27, %v50
  %v56 = vsub.f32 %v28, %v51
  %v57 = vsub.f32 %v29, %v52
  %v58 = vsub.f32 %v30, %v53
  %v59 = vmul.f32 %v54, %v54
  %v60 = vmul.f32 %v55, %v55
  %v61 = vmul.f32 %v56, %v56
  %v62 = vmul.f32 %v57, %v57
  %v63 = vmul.f32 %v58, %v58
  %v64 = vsel %vm31, %v59, 0.0
  %65 = vadd.xlane.f32.xlu0 %v64
  %v66 = vpop.xlane.xlu0 %65
  %v67 = vsel %vm31, %v60, 0.0
  %68 = vadd.xlane.f32.xlu0 %v67
  %v69 = vpop.xlane.xlu0 %68
  %v70 = vsel %vm31, %v61, 0.0
  %71 = vadd.xlane.f32.xlu0 %v70
  %v72 = vpop.xlane.xlu0 %71
  %v73 = vsel %vm31, %v62, 0.0
  %74 = vadd.xlane.f32.xlu0 %v73
  %v75 = vpop.xlane.xlu0 %74
  %v76 = vsel %vm44, %v63, 0.0
  %77 = vadd.xlane.f32.xlu0 %v76
  %v78 = vpop.xlane.xlu0 %77
  %v79 = vmul.f32 %v66, %v48
  %v80 = vmul.f32 %v69, %v48
  %v81 = vmul.f32 %v72, %v48
  %v82 = vmul.f32 %v75, %v48
  %v83 = vmul.f32 %v78, %v48
  %v84 = vadd.f32 %v79, 1e-05
  %v85 = vadd.f32 %v80, 1e-05
  %v86 = vadd.f32 %v81, 1e-05
  %v87 = vadd.f32 %v82, 1e-05
  %v88 = vadd.f32 %v83, 1e-05
  %v89 = vrsqrt.pop %v84
  %v90 = vrsqrt.pop %v85
  %v91 = vrsqrt.pop %v86
  %v92 = vrsqrt.pop %v87
  %v93 = vrsqrt.pop %v88
  %v94 = vmul.f32 %v54, %v89
  %v95 = vmul.f32 %v55, %v90
  %v96 = vmul.f32 %v56, %v91
  %v97 = vmul.f32 %v57, %v92
  %v98 = vmul.f32 %v58, %v93
  %v99 = vld [vmem:[%s1] sm:$0x1]
  %v101 = vlaneseq
  %v102 = vshrl.u32 %v101, 7
  %v103 = vsub.s32 0, %v102
  %v104 = vrot.slane %v99, %v103
  %v106 = vmul.f32 %v94, %v104
  %v107 = vmul.f32 %v95, %v104
  %v108 = vmul.f32 %v96, %v104
  %v109 = vmul.f32 %v97, %v104
  %v110 = vmul.f32 %v98, %v104
  %v111 = vld [vmem:[%s2] sm:$0x1]
  %v113 = vlaneseq
  %v114 = vshrl.u32 %v113, 7
  %v115 = vsub.s32 0, %v114
  %v116 = vrot.slane %v111, %v115
  %v118 = vadd.f32 %v106, %v116
  %v119 = vadd.f32 %v107, %v116
  %v120 = vadd.f32 %v108, %v116
  %v121 = vadd.f32 %v109, %v116
  %v122 = vadd.f32 %v110, %v116
  %v123 = vpack.c.bf16 %v119, %v118
  %v124 = vpack.c.bf16 %v121, %v120
  %v125 = vpack.c.bf16 %v122, %v122
  %v126 = vld [vmem:[%s3] sm:$0xff]
  %v127 = vld [vmem:[%s3 + $0x8] sm:$0xff]
  %v128 = vld [vmem:[%s3 + $0x10] sm:$0xff]
  %v129 = vld [vmem:[%s3 + $0x18] sm:$0xff]
  %v130 = vld [vmem:[%s3 + $0x20] sm:$0xff]
  %v131 = vld [vmem:[%s3 + $0x28] sm:$0xff]
  %v132 = vld [vmem:[%s3 + $0x30] sm:$0xff]
  %v133 = vld [vmem:[%s3 + $0x38] sm:$0xff]
  %v134 = vld [vmem:[%s4] sm:$0x3]
  %v136 = vlaneseq
  %v137 = vshrl.u32 %v136, 7
  %v138 = vsub.s32 0, %v137
  %v139 = vrot.slane %v134, %v138
  %v140 = vlaneseq
  %v141 = vshrl.u32 %v140, 7
  %v142 = vsub.s32 1, %v141
  %v143 = vrot.slane %v134, %v142
  %v154 = vunpack.c.l.b16 %v126
  %v155 = vunpack.c.h.b16 %v126
  %v156 = vunpack.c.l.b16 %v127
  %v157 = vunpack.c.h.b16 %v127
  %v158 = vunpack.c.l.b16 %v128
  %v159 = vunpack.c.h.b16 %v128
  %v160 = vunpack.c.l.b16 %v129
  %v161 = vunpack.c.h.b16 %v129
  %v162 = vunpack.c.l.b16 %v130
  %v163 = vunpack.c.h.b16 %v130
  %v164 = vunpack.c.l.b16 %v131
  %v165 = vunpack.c.h.b16 %v131
  %v166 = vunpack.c.l.b16 %v132
  %v167 = vunpack.c.h.b16 %v132
  %v168 = vunpack.c.l.b16 %v133
  %v169 = vunpack.c.h.b16 %v133
  %v170 = vpack.c.b16 %v156, %v154
  %v171 = vpack.c.b16 %v157, %v155
  %v172 = vpack.c.b16 %v160, %v158
  %v173 = vpack.c.b16 %v161, %v159
  %v174 = vpack.c.b16 %v164, %v162
  %v175 = vpack.c.b16 %v165, %v163
  %v176 = vpack.c.b16 %v168, %v166
  %v177 = vpack.c.b16 %v169, %v167
  %v187 = vsel %vm31, %v123, 0
  %v190 = vsel %vm31, %v124, 0
  %v193 = vsel %vm31, %v125, 0
  %195 = vmatprep.subr.bf16.mxu0 0
  %196 = vmatpush1.bf16.msra.mxu0 0
  %197 = vmatprep.subr.bf16.mxu0 0
  %198 = vmatpush1.bf16.msra.mxu0 0
  %199 = vmatprep.subr.bf16.mxu0 0
  %200 = vmatpush1.bf16.msra.mxu0 0
  %201 = vmatprep.subr.bf16.mxu0 0
  %202 = vmatpush1.bf16.msra.mxu0 0
  %203 = vmatprep.subr.bf16.mxu0 %v177
  %204 = vmatpush1.bf16.msra.mxu0 %v176
  %205 = vmatprep.subr.bf16.mxu0 %v175
  %206 = vmatpush1.bf16.msra.mxu0 %v174
  %207 = vmatprep.subr.bf16.mxu0 %v173
  %208 = vmatpush1.bf16.msra.mxu0 %v172
  %209 = vmatprep.subr.bf16.mxu0 %v171
  %210 = vmatpush1.bf16.msra.mxu0 %v170
  %211 = vmatprep.subr.bf16.mxu0 0
  %212 = vmatpush2.bf16.msra.mxu0 0
  %213 = vmatprep.subr.bf16.mxu0 0
  %214 = vmatpush2.bf16.msra.mxu0 0
  %215 = vmatprep.subr.bf16.mxu0 0
  %216 = vmatpush2.bf16.msra.mxu0 0
  %217 = vmatprep.subr.bf16.mxu0 0
  %218 = vmatpush2.bf16.msra.mxu0 0
  %219 = vmatprep.subr.bf16.mxu0 0
  %220 = vmatpush2.bf16.msra.mxu0 0
  %221 = vmatprep.subr.bf16.mxu0 0
  %222 = vmatpush2.bf16.msra.mxu0 0
  %223 = vmatprep.subr.bf16.mxu0 0
  %224 = vmatpush2.bf16.msra.mxu0 0
  %225 = vmatprep.subr.bf16.mxu0 0
  %226 = vmatpush2.bf16.msra.mxu0 0
  %227 = vmatprep.mubr.bf16.mxu0 0
  %228 = vmatmul.mubr.bf16.gmra.mxu0 %v187
  %v229 = vpop.f32.mrf.mxu0
  %v230 = vadd.f32 %v139, %v229
  %v231 = vpop.f32.mrf.mxu0
  %v232 = vadd.f32 %v143, %v231
  %v233 = vpop.f32.mrf.mxu0
  %v234 = vadd.f32 %v139, %v233
  %v235 = vpop.f32.mrf.mxu0
  %v236 = vadd.f32 %v143, %v235
  %237 = vmatprep.mubr.bf16.mxu0 0
  %238 = vmatmul.mubr.bf16.gmra.mxu0 %v190
  %v239 = vpop.f32.mrf.mxu0
  %v240 = vadd.f32 %v139, %v239
  %v241 = vpop.f32.mrf.mxu0
  %v242 = vadd.f32 %v143, %v241
  %v243 = vpop.f32.mrf.mxu0
  %v244 = vadd.f32 %v139, %v243
  %v245 = vpop.f32.mrf.mxu0
  %v246 = vadd.f32 %v143, %v245
  %247 = vmatprep.mubr.bf16.mxu0 0
  %248 = vmatmul.mubr.bf16.gmra.mxu0 %v193
  %v249 = vpop.f32.mrf.mxu0
  %v250 = vadd.f32 %v139, %v249
  %v251 = vpop.f32.mrf.mxu0
  %v252 = vadd.f32 %v143, %v251
  %v253 = vpop.f32.mrf.mxu0
  %v254 = vpop.f32.mrf.mxu0
  %255 = vdwg.mxu0
  %v256 = vpack.c.bf16 %v234, %v230
  %v257 = vpack.c.bf16 %v236, %v232
  %v258 = vpack.c.bf16 %v244, %v240
  %v259 = vpack.c.bf16 %v246, %v242
  %v260 = vpack.c.bf16 %v250, %v250
  %v261 = vpack.c.bf16 %v252, %v252
  %v268 = vunpack.c.l.b16 %v256
  %v269 = vunpack.c.l.b16 %v257
  %v270 = vunpack.c.h.b16 %v256
  %v271 = vunpack.c.h.b16 %v257
  %v272 = vunpack.c.l.b16 %v258
  %v273 = vunpack.c.l.b16 %v259
  %v274 = vunpack.c.h.b16 %v258
  %v275 = vunpack.c.h.b16 %v259
  %v276 = vunpack.c.l.b16 %v260
  %v277 = vunpack.c.l.b16 %v261
  %v278 = vpack.c.b16 %v269, %v268
  %v279 = vpack.c.b16 %v271, %v270
  %v280 = vpack.c.b16 %v273, %v272
  %v281 = vpack.c.b16 %v275, %v274
  %v282 = vpack.c.b16 %v277, %v276
  %vm288 = vcmask 1043456
  %vm289 = vcmask 523268
  %vm290 = vmor %vm289, %vm288
  %291 = vst.msk [vmem:[%s5] sm:$0xff] %vm290, %v278
  %292 = vst.msk [vmem:[%s5 + $0x8] sm:$0xff] %vm290, %v279
  %293 = vst.msk [vmem:[%s5 + $0x10] sm:$0xff] %vm290, %v280
  %294 = vst.msk [vmem:[%s5 + $0x18] sm:$0xff] %vm290, %v281
  %vm295 = vcmask 1041408
  %vm296 = vcmask 521220
  %vm297 = vmor %vm296, %vm295
  %298 = vst.msk [vmem:[%s5 + $0x20] sm:$0x33] %vm297, %v282
  // Predicated region
  $region22: #{transformer_forward.22} parent=0 // pred_check
    _
  $region23: #{transformer_forward.22} parent=0 // pred_check_branch
    %300 = sbr.rel (0) target = $region25
  $region24: #{transformer_forward.22} parent=0 // pred_region
    _
  $region25: #{transformer_forward.22} parent=0 // pred_fallthru
    _
  // Predicated region
  $region26: #{transformer_forward.22} parent=0 // pred_check
    _
  $region27: #{transformer_forward.22} parent=0 // pred_check_branch
    %302 = sbr.rel (0) target = $region29
  $region28: #{transformer_forward.22} parent=0 // pred_region
    _
  $region29: #{transformer_forward.22} parent=0 // pred_fallthru
    _

// kernel: transformer_forward.24
$region0: #{transformer_forward.24}
  #allocation0 [shape = 'u32[]', space=smem, size = 0x4, offset = 0x4, fixed_abs, tag = 'smem constant byte address 0x4 - core index']
  #allocation1 [shape = 'u32[144,128]{1,0:T(1,128)}', space=vmem, size = 0x12000, scoped, tag = 'internal scratch']
  #allocation2 [shape = 'f32[36,64]{1,0:T(8,128)}', space=vmem, size = 0x5000, scoped, tag = 'scratch operand']
  %s0 = inlined_call_operand.vmem [shape: bf16[36,64], index: 0, kind: input, shape index: {}]
  %s1 = inlined_call_operand.vmem [shape: bf16[64,64], index: 1, kind: input, shape index: {}]
  %s2 = inlined_call_operand.vmem [shape: f32[1,64], index: 2, kind: input, shape index: {}]
  %s3 = inlined_call_operand.vmem [shape: bf16[36,64], index: 3, kind: input, shape index: {}]
  %s4 = inlined_call_operand.vmem [shape: bf16[36,64], index: 4, kind: output, shape index: {}]
  %s5 = sld [smem:[#allocation0]]
  $region34: #{transformer_forward.24} parent=0
    _
  %s7 = ssub.s32 1, %s5
  %s8 = scalar_select 0, %s7, %s5
  // Predicated region
  $region2: #{transformer_forward.24} parent=0 // pred_check
    _
  $region3: #{transformer_forward.24} parent=0 // pred_check_branch
    %10 = sbr.rel (0) target = $region5
  $region4: #{transformer_forward.24} parent=0 // pred_region
    _
  $region5: #{transformer_forward.24} parent=0 // pred_fallthru
    _
  // Predicated region
  $region6: #{transformer_forward.24} parent=0 // pred_check
    _
  $region7: #{transformer_forward.24} parent=0 // pred_check_branch
    %12 = sbr.rel (0) target = $region9
  $region8: #{transformer_forward.24} parent=0 // pred_region
    _
  $region9: #{transformer_forward.24} parent=0 // pred_fallthru
    _
  // Predicated region
  $region10: #{transformer_forward.24} parent=0 // pred_check
    _
  $region11: #{transformer_forward.24} parent=0 // pred_check_branch
    %14 = sbr.rel (0) target = $region13
  $region12: #{transformer_forward.24} parent=0 // pred_region
    _
  $region13: #{transformer_forward.24} parent=0 // pred_fallthru
    _
  // Predicated region
  $region14: #{transformer_forward.24} parent=0 // pred_check
    _
  $region15: #{transformer_forward.24} parent=0 // pred_check_branch
    %16 = sbr.rel (0) target = $region17
  $region16: #{transformer_forward.24} parent=0 // pred_region
    _
  $region17: #{transformer_forward.24} parent=0 // pred_fallthru
    _
  %p18 = scmp.eq.s32.totalorder 0, 0
  // Predicated region
  $region18: #{transformer_forward.24} parent=0 // pred_check
    %p19 = pneg %p18
  $region19: #{transformer_forward.24} parent=0 // pred_check_branch
    %21 = sbr.rel (%p19) target = $region21
  $region20: #{transformer_forward.24} parent=0 // pred_region
    %vm22 = vcmask 523264
    %23 = vst.msk [vmem:[#allocation2] sm:$0xff] %vm22, 0.0
    %24 = vst.msk [vmem:[#allocation2 + $0x8] sm:$0xff] %vm22, 0.0
    %25 = vst.msk [vmem:[#allocation2 + $0x10] sm:$0xff] %vm22, 0.0
    %26 = vst.msk [vmem:[#allocation2 + $0x18] sm:$0xff] %vm22, 0.0
    %vm27 = vcmask 519168
    %28 = vst.msk [vmem:[#allocation2 + $0x20] sm:$0xf] %vm27, 0.0
  $region21: #{transformer_forward.24} parent=0 // pred_fallthru
    _
  %v29 = vld [vmem:[#allocation2] sm:$0xff]
  %v30 = vld [vmem:[#allocation2 + $0x8] sm:$0xff]
  %v31 = vld [vmem:[#allocation2 + $0x10] sm:$0xff]
  %v32 = vld [vmem:[#allocation2 + $0x18] sm:$0xff]
  %v33 = vld [vmem:[#allocation2 + $0x20] sm:$0xf]
  %v34 = vld [vmem:[%s0] sm:$0xf]
  %v35 = vld [vmem:[%s0 + $0x4] sm:$0xf]
  %v36 = vld [vmem:[%s0 + $0x8] sm:$0xf]
  %v37 = vld [vmem:[%s0 + $0xc] sm:$0xf]
  %v38 = vld [vmem:[%s0 + $0x10] sm:$0x3]
  %v39 = vld [vmem:[%s1] sm:$0xf]
  %v40 = vld [vmem:[%s1 + $0x4] sm:$0xf]
  %v41 = vld [vmem:[%s1 + $0x8] sm:$0xf]
  %v42 = vld [vmem:[%s1 + $0xc] sm:$0xf]
  %v43 = vld [vmem:[%s1 + $0x10] sm:$0xf]
  %v44 = vld [vmem:[%s1 + $0x14] sm:$0xf]
  %v45 = vld [vmem:[%s1 + $0x18] sm:$0xf]
  %v46 = vld [vmem:[%s1 + $0x1c] sm:$0xf]
  %v52 = vunpack.c.l.b16 %v34
  %v53 = vunpack.c.l.b16 %v35
  %v54 = vunpack.c.l.b16 %v36
  %v55 = vunpack.c.l.b16 %v37
  %v56 = vunpack.c.l.b16 %v38
  %v57 = vpack.c.b16 %v53, %v52
  %v58 = vpack.c.b16 %v55, %v54
  %v59 = vpack.c.b16 %v56, %v56
  %v68 = vunpack.c.l.b16 %v39
  %v69 = vunpack.c.l.b16 %v40
  %v70 = vunpack.c.l.b16 %v41
  %v71 = vunpack.c.l.b16 %v42
  %v72 = vunpack.c.l.b16 %v43
  %v73 = vunpack.c.l.b16 %v44
  %v74 = vunpack.c.l.b16 %v45
  %v75 = vunpack.c.l.b16 %v46
  %v76 = vpack.c.b16 %v69, %v68
  %v77 = vpack.c.b16 %v71, %v70
  %v78 = vpack.c.b16 %v73, %v72
  %v79 = vpack.c.b16 %v75, %v74
  %vm84 = vcmask 523264
  %v86 = vsel %vm84, %v57, 0
  %v89 = vsel %vm84, %v58, 0
  %v92 = vsel %vm84, %v59, 0
  %94 = vmatprep.subr.bf16.mxu0 0
  %95 = vmatpush1.bf16.msra.mxu0 0
  %96 = vmatprep.subr.bf16.mxu0 0
  %97 = vmatpush1.bf16.msra.mxu0 0
  %98 = vmatprep.subr.bf16.mxu0 0
  %99 = vmatpush1.bf16.msra.mxu0 0
  %100 = vmatprep.subr.bf16.mxu0 0
  %101 = vmatpush1.bf16.msra.mxu0 0
  %102 = vmatprep.subr.bf16.mxu0 0
  %103 = vmatpush1.bf16.msra.mxu0 %v79
  %104 = vmatprep.subr.bf16.mxu0 0
  %105 = vmatpush1.bf16.msra.mxu0 %v78
  %106 = vmatprep.subr.bf16.mxu0 0
  %107 = vmatpush1.bf16.msra.mxu0 %v77
  %108 = vmatprep.subr.bf16.mxu0 0
  %109 = vmatpush1.bf16.msra.mxu0 %v76
  %110 = vmatprep.subr.bf16.mxu0 0
  %111 = vmatpush2.bf16.msra.mxu0 0
  %112 = vmatprep.subr.bf16.mxu0 0
  %113 = vmatpush2.bf16.msra.mxu0 0
  %114 = vmatprep.subr.bf16.mxu0 0
  %115 = vmatpush2.bf16.msra.mxu0 0
  %116 = vmatprep.subr.bf16.mxu0 0
  %117 = vmatpush2.bf16.msra.mxu0 0
  %118 = vmatprep.subr.bf16.mxu0 0
  %119 = vmatpush2.bf16.msra.mxu0 0
  %120 = vmatprep.subr.bf16.mxu0 0
  %121 = vmatpush2.bf16.msra.mxu0 0
  %122 = vmatprep.subr.bf16.mxu0 0
  %123 = vmatpush2.bf16.msra.mxu0 0
  %124 = vmatprep.subr.bf16.mxu0 0
  %125 = vmatpush2.bf16.msra.mxu0 0
  %126 = vmatprep.mubr.bf16.mxu0 0
  %127 = vmatmul.mubr.bf16.gmra.mxu0 %v86
  %v128 = vpop.f32.mrf.mxu0
  %v129 = vadd.f32 0.0, %v128
  %v130 = vpop.f32.mrf.mxu0
  %v131 = vpop.f32.mrf.mxu0
  %v132 = vadd.f32 0.0, %v131
  %v133 = vpop.f32.mrf.mxu0
  %134 = vmatprep.mubr.bf16.mxu0 0
  %135 = vmatmul.mubr.bf16.gmra.mxu0 %v89
  %v136 = vpop.f32.mrf.mxu0
  %v137 = vadd.f32 0.0, %v136
  %v138 = vpop.f32.mrf.mxu0
  %v139 = vpop.f32.mrf.mxu0
  %v140 = vadd.f32 0.0, %v139
  %v141 = vpop.f32.mrf.mxu0
  %142 = vmatprep.mubr.bf16.mxu0 0
  %143 = vmatmul.mubr.bf16.gmra.mxu0 %v92
  %v144 = vpop.f32.mrf.mxu0
  %v145 = vadd.f32 0.0, %v144
  %v146 = vpop.f32.mrf.mxu0
  %v147 = vpop.f32.mrf.mxu0
  %v148 = vpop.f32.mrf.mxu0
  %149 = vdwg.mxu0
  %v150 = vadd.f32 %v29, %v129
  %v151 = vadd.f32 %v30, %v132
  %v152 = vadd.f32 %v31, %v137
  %v153 = vadd.f32 %v32, %v140
  %v154 = vadd.f32 %v33, %v145
  %155 = vst.msk [vmem:[#allocation2] sm:$0xff] %vm84, %v150
  %156 = vst.msk [vmem:[#allocation2 + $0x8] sm:$0xff] %vm84, %v151
  %157 = vst.msk [vmem:[#allocation2 + $0x10] sm:$0xff] %vm84, %v152
  %158 = vst.msk [vmem:[#allocation2 + $0x18] sm:$0xff] %vm84, %v153
  %vm159 = vcmask 519168
  %160 = vst.msk [vmem:[#allocation2 + $0x20] sm:$0xf] %vm159, %v154
  // Predicated region
  $region22: #{transformer_forward.24} parent=0 // pred_check
    %p161 = pneg %p18
  $region23: #{transformer_forward.24} parent=0 // pred_check_branch
    %163 = sbr.rel (%p161) target = $region25
  $region24: #{transformer_forward.24} parent=0 // pred_region
    %v164 = vld [vmem:[#allocation2] sm:$0xff]
    %v165 = vld [vmem:[#allocation2 + $0x8] sm:$0xff]
    %v166 = vld [vmem:[#allocation2 + $0x10] sm:$0xff]
    %v167 = vld [vmem:[#allocation2 + $0x18] sm:$0xff]
    %v168 = vld [vmem:[#allocation2 + $0x20] sm:$0xf]
    %v169 = vld [vmem:[%s2] sm:$0x1]
    %v171 = vlaneseq
    %v172 = vshrl.u32 %v171, 7
    %v173 = vsub.s32 0, %v172
    %v174 = vrot.slane %v169, %v173
    %v176 = vadd.f32 %v164, %v174
    %v177 = vadd.f32 %v165, %v174
    %v178 = vadd.f32 %v166, %v174
    %v179 = vadd.f32 %v167, %v174
    %v180 = vadd.f32 %v168, %v174
    %v181 = vld [vmem:[%s3] sm:$0xf]
    %v182 = vld [vmem:[%s3 + $0x4] sm:$0xf]
    %v183 = vld [vmem:[%s3 + $0x8] sm:$0xf]
    %v184 = vld [vmem:[%s3 + $0xc] sm:$0xf]
    %v185 = vld [vmem:[%s3 + $0x10] sm:$0x3]
    %v186 = vunpack.c.l.bf16 %v181
    %v187 = vunpack.c.l.bf16 %v182
    %v188 = vunpack.c.l.bf16 %v183
    %v189 = vunpack.c.l.bf16 %v184
    %v190 = vunpack.c.l.bf16 %v185
    %v191 = vadd.f32 %v176, %v186
    %v192 = vadd.f32 %v177, %v187
    %v193 = vadd.f32 %v178, %v188
    %v194 = vadd.f32 %v179, %v189
    %v195 = vadd.f32 %v180, %v190
    %v196 = vpack.c.bf16 %v192, %v191
    %v197 = vpack.c.bf16 %v194, %v193
    %v198 = vpack.c.bf16 %v195, %v195
    %v202 = vunpack.c.l.b16 %v196
    %v203 = vunpack.c.h.b16 %v196
    %v204 = vunpack.c.l.b16 %v197
    %v205 = vunpack.c.h.b16 %v197
    %v206 = vunpack.c.l.b16 %v198
    %v207 = vpack.c.b16 %v202, %v202
    %v208 = vpack.c.b16 %v203, %v203
    %v209 = vpack.c.b16 %v204, %v204
    %v210 = vpack.c.b16 %v205, %v205
    %v211 = vpack.c.b16 %v206, %v206
    %217 = vst.msk [vmem:[%s4] sm:$0xf] %vm159, %v207
    %218 = vst.msk [vmem:[%s4 + $0x4] sm:$0xf] %vm159, %v208
    %219 = vst.msk [vmem:[%s4 + $0x8] sm:$0xf] %vm159, %v209
    %220 = vst.msk [vmem:[%s4 + $0xc] sm:$0xf] %vm159, %v210
    %vm221 = vcmask 517120
    %222 = vst.msk [vmem:[%s4 + $0x10] sm:$0x3] %vm221, %v211
  $region25: #{transformer_forward.24} parent=0 // pred_fallthru
    _
  // Predicated region
  $region26: #{transformer_forward.24} parent=0 // pred_check
    _
  $region27: #{transformer_forward.24} parent=0 // pred_check_branch
    %224 = sbr.rel (0) target = $region29
  $region28: #{transformer_forward.24} parent=0 // pred_region
    _
  $region29: #{transformer_forward.24} parent=0 // pred_fallthru
    _
  // Predicated region
  $region30: #{transformer_forward.24} parent=0 // pred_check
    _
  $region31: #{transformer_forward.24} parent=0 // pred_check_branch
    %226 = sbr.rel (0) target = $region33
  $region32: #{transformer_forward.24} parent=0 // pred_region
    _
  $region33: #{transformer_forward.24} parent=0 // pred_fallthru
    _

// kernel: transformer_forward.23
$region0: #{transformer_forward.23}
  #allocation0 [shape = 'u32[]', space=smem, size = 0x4, offset = 0x4, fixed_abs, tag = 'smem constant byte address 0x4 - core index']
  #allocation1 [shape = 'u32[144,128]{1,0:T(1,128)}', space=vmem, size = 0x12000, scoped, tag = 'internal scratch']
  %s0 = inlined_call_operand.vmem [shape: bf16[4,9,192], index: 0, kind: input, shape index: {}]
  %s1 = inlined_call_operand.vmem [shape: bf16[4,9,64], index: 1, kind: output, shape index: {}]
  %s2 = sld [smem:[#allocation0]]
  $region37: #{transformer_forward.23} parent=0
    _
  %s4 = ssub.s32 1, %s2
  %s5 = scalar_select 0, %s4, %s2
  loop: start=0, step=1, limit=6
  $region2: #{transformer_forward.23} parent=0 // loop_pre_header
    _
  $region3: #{transformer_forward.23} parent=0 // loop_header
    %s7 = sphi 0, %s11
    %p8 = scmp.ge.s32.totalorder %s7, 6
    %s17 = sphi 0, %s19
    %s20 = sphi 0, %s17
    %s21 = sphi 0, %s20
    %s37 = sphi 0, %s21
    %s43 = sphi 0, %s45
    %s46 = sphi 0, %s43
    %s47 = sphi 0, %s46
    %s63 = sphi 0, %s47
  $region4: #{transformer_forward.23} parent=0 // loop_header_branch
    %10 = sbr.rel (%p8) target = $region8
  $region5: #{transformer_forward.23} parent=0 // loop_body
    %s12 = ssub.s32 %s7, 1
    %s13 = ssub.s32 %s7, 2
    %s14 = sadd.s32 %s7, 1
    %s15 = ssub.s32 %s7, %s14
    %p16 = scmp.eq.s32.totalorder %s15, 0
    %s18 = sadd.s32 %s17, 1
    %s19 = scalar_select %p16, %s17, %s18
    %p22 = pneg %p16
    %p23 = scmp.eq.s32.totalorder %s7, 3
    %p24 = por %p22, %p23
    %p25 = scmp.ne.s32.totalorder %s17, %s20
    %p26 = scmp.eq.s32.totalorder %s7, 0
    %p27 = por %p25, %p26
    %p28 = scmp.ne.s32.totalorder %s17, %s20
    %p29 = scmp.eq.s32.totalorder %s12, 3
    %p30 = por %p28, %p29
    %p31 = scmp.ne.s32.totalorder %s20, %s21
    %p32 = scmp.eq.s32.totalorder %s12, 0
    %p33 = por %p31, %p32
    %p34 = scmp.ne.s32.totalorder %s20, %s21
    %p35 = scmp.eq.s32.totalorder %s13, 3
    %p36 = por %p34, %p35
    %p38 = scmp.ne.s32.totalorder %s21, %s37
    %p39 = scmp.eq.s32.totalorder %s13, 0
    %p40 = por %p38, %p39
    %s41 = ssub.s32 %s7, %s14
    %p42 = scmp.eq.s32.totalorder %s41, 0
    %s44 = sadd.s32 %s43, 1
    %s45 = scalar_select %p42, %s43, %s44
    %p48 = pneg %p42
    %p49 = scmp.eq.s32.totalorder %s7, 3
    %p50 = por %p48, %p49
    %p51 = scmp.ne.s32.totalorder %s43, %s46
    %p52 = scmp.eq.s32.totalorder %s7, 0
    %p53 = por %p51, %p52
    %p54 = scmp.ne.s32.totalorder %s43, %s46
    %p55 = scmp.eq.s32.totalorder %s12, 3
    %p56 = por %p54, %p55
    %p57 = scmp.ne.s32.totalorder %s46, %s47
    %p58 = scmp.eq.s32.totalorder %s12, 0
    %p59 = por %p57, %p58
    %p60 = scmp.ne.s32.totalorder %s46, %s47
    %p61 = scmp.eq.s32.totalorder %s13, 3
    %p62 = por %p60, %p61
    %p64 = scmp.ne.s32.totalorder %s47, %s63
    %p65 = scmp.eq.s32.totalorder %s13, 0
    %p66 = por %p64, %p65
    %p67 = scmp.le.s32.totalorder 1, %s7
    %p68 = scmp.lt.s32.totalorder %s7, 5
    %p69 = pnand %p67, %p68
    %p70 = pneg %p69
    // Predicated region
    $region9: #{transformer_forward.23} parent=5 // pred_check
      _
    $region10: #{transformer_forward.23} parent=5 // pred_check_branch
      %72 = sbr.rel (%p69) target = $region12
    $region11: #{transformer_forward.23} parent=5 // pred_region
      %s73 = ssub.s32 %s7, 1
    $region12: #{transformer_forward.23} parent=5 // pred_fallthru
      _
    %p74 = scmp.lt.s32.totalorder %s7, 4
    // Predicated region
    $region13: #{transformer_forward.23} parent=5 // pred_check
      %p75 = pneg %p74
    $region14: #{transformer_forward.23} parent=5 // pred_check_branch
      %77 = sbr.rel (%p75) target = $region16
    $region15: #{transformer_forward.23} parent=5 // pred_region
      // Predicated region
      $region17: #{transformer_forward.23} parent=15 // pred_check
        %p78 = pneg %p27
      $region18: #{transformer_forward.23} parent=15 // pred_check_branch
        %80 = sbr.rel (%p78) target = $region20
      $region19: #{transformer_forward.23} parent=15 // pred_region
        %p81 = scmp.lt.s32.totalorder %s7, 3
        %s82 = scalar_select %p81, %s7, 3
        %s83 = smul.addr %s82, 4
        %s84 = smul.addr %s83, 4
        %s85 = scalar_lea.vmem %s0, %s84
      $region20: #{transformer_forward.23} parent=15 // pred_fallthru
        _
    $region16: #{transformer_forward.23} parent=5 // pred_fallthru
      _
    %p86 = scmp.le.s32.totalorder 1, %s7
    %p87 = scmp.lt.s32.totalorder %s7, 5
    %p88 = pnand %p86, %p87
    %p89 = pneg %p88
    // Predicated region
    $region21: #{transformer_forward.23} parent=5 // pred_check
      _
    $region22: #{transformer_forward.23} parent=5 // pred_check_branch
      %91 = sbr.rel (%p88) target = $region24
    $region23: #{transformer_forward.23} parent=5 // pred_region
      %s92 = ssub.s32 %s7, 1
      %p93 = scmp.lt.s32.totalorder %s12, 3
      %s94 = scalar_select %p93, %s12, 3
      %s95 = smul.addr %s94, 4
      %s96 = smul.addr %s95, 4
      %s97 = scalar_lea.vmem %s0, %s96
      %p98 = pneg %p33
      %p99 = pneg %p30
      %p100 = pneg %p59
      %p101 = pneg %p56
      %p102 = scmp.lt.s32.totalorder %s12, 3
      %s103 = scalar_select %p102, %s12, 3
      %s104 = smul.addr %s103, 2
      %s105 = smul.addr %s104, 4
      %s106 = scalar_lea.vmem %s1, %s105
      %p107 = scmp.lt.s32.totalorder %s12, 3
      %s108 = scalar_select %p107, %s12, 3
      %s109 = smul.addr %s108, 4
      %s110 = smul.addr %s109, 4
      %s111 = scalar_lea.vmem %s0, %s110
      %p112 = scmp.lt.s32.totalorder %s12, 3
      %s113 = scalar_select %p112, %s12, 3
      %s114 = smul.addr %s113, 2
      %s115 = smul.addr %s114, 4
      %s116 = scalar_lea.vmem %s1, %s115
      %v118 = vld [vmem:[%s111] sm:$0xff]
      %v119 = vld [vmem:[%s111 + $0x8] sm:$0x11]
      %v122 = vunpack.c.l.b16 %v118
      %v123 = vunpack.c.l.b16 %v119
      %v124 = vpack.c.b16 %v123, %v122
      %125 = vrot.lane.b32.xlu0 %v124, 64
      %v126 = vpop.permute.xlu0 %125
      %vm127 = vcmask 130048
      %v129 = vsel %vm127, %v124, 0
      %v132 = vsel %vm127, %v126, 0
      %134 = vmatprep.subr.bf16.mxu0 0
      %135 = vmatpush1.bf16.xpose.msra.mxu0 0
      %136 = vmatprep.subr.bf16.mxu0 0
      %137 = vmatpush1.bf16.xpose.msra.mxu0 0
      %138 = vmatprep.subr.bf16.mxu0 0
      %139 = vmatpush1.bf16.xpose.msra.mxu0 0
      %140 = vmatprep.subr.bf16.mxu0 0
      %141 = vmatpush1.bf16.xpose.msra.mxu0 0
      %142 = vmatprep.subr.bf16.mxu0 0
      %143 = vmatpush1.bf16.xpose.msra.mxu0 0
      %144 = vmatprep.subr.bf16.mxu0 0
      %145 = vmatpush1.bf16.xpose.msra.mxu0 0
      %146 = vmatprep.subr.bf16.mxu0 0
      %147 = vmatpush1.bf16.xpose.msra.mxu0 0
      %148 = vmatprep.subr.bf16.mxu0 0
      %149 = vmatpush1.bf16.xpose.msra.mxu0 %v132
      %150 = vmatprep.subr.bf16.mxu0 0
      %151 = vmatpush2.bf16.xpose.msra.mxu0 0
      %152 = vmatprep.subr.bf16.mxu0 0
      %153 = vmatpush2.bf16.xpose.msra.mxu0 0
      %154 = vmatprep.subr.bf16.mxu0 0
      %155 = vmatpush2.bf16.xpose.msra.mxu0 0
      %156 = vmatprep.subr.bf16.mxu0 0
      %157 = vmatpush2.bf16.xpose.msra.mxu0 0
      %158 = vmatprep.subr.bf16.mxu0 0
      %159 = vmatpush2.bf16.xpose.msra.mxu0 0
      %160 = vmatprep.subr.bf16.mxu0 0
      %161 = vmatpush2.bf16.xpose.msra.mxu0 0
      %162 = vmatprep.subr.bf16.mxu0 0
      %163 = vmatpush2.bf16.xpose.msra.mxu0 0
      %164 = vmatprep.subr.bf16.mxu0 0
      %165 = vmatpush2.bf16.xpose.msra.mxu0 0
      %166 = vmatprep.mubr.bf16.mxu0 0
      %167 = vmatmul.mubr.bf16.gmra.mxu0 %v129
      %v168 = vpop.f32.mrf.mxu0
      %v169 = vadd.f32 0.0, %v168
      %v170 = vpop.f32.mrf.mxu0
      %v171 = vpop.f32.mrf.mxu0
      %v172 = vadd.f32 0.0, %v171
      %v173 = vpop.f32.mrf.mxu0
      %174 = vdwg.mxu0
      %v175 = vmul.f32 %v169, 0.25
      %v176 = vmul.f32 %v172, 0.25
      %vm177 = vcmask 72704
      %v178 = vsel %vm177, %v175, -inf
      %179 = vmax.xlane.f32.xlu0 %v178
      %v180 = vpop.xlane.xlu0 %179
      %vm181 = vcmask 65536
      %v182 = vsel %vm181, %v176, -inf
      %183 = vmax.xlane.f32.xlu0 %v182
      %v184 = vpop.xlane.xlu0 %183
      %v185 = vsub.f32 %v175, %v180
      %v186 = vsub.f32 %v176, %v184
      %v187 = vmul.f32 %v185, 1.442695
      %v188 = vpow.pop %v187
      %v189 = vmul.f32 %v186, 1.442695
      %v190 = vpow.pop %v189
      %v191 = vsel %vm177, %v188, 0.0
      %192 = vadd.xlane.f32.xlu0 %v191
      %v193 = vpop.xlane.xlu0 %192
      %v194 = vsel %vm181, %v190, 0.0
      %195 = vadd.xlane.f32.xlu0 %v194
      %v196 = vpop.xlane.xlu0 %195
      %v197 = vrcp.pop %v193
      %v198 = vrcp.pop %v196
      %v199 = vmul.f32 %v188, %v197
      %v200 = vmul.f32 %v190, %v198
      %v201 = vpack.c.bf16 %v200, %v199
      %v202 = vunpack.c.h.b16 %v118
      %v203 = vunpack.c.h.b16 %v119
      %v204 = vpack.c.b16 %v203, %v202
      %v206 = vsel %vm177, %v201, 0
      %vm208 = vcmask 1043456
      %vm209 = vcmask 1044480
      %v210 = vsel %vm208, 4294967295, 65535
      %v211 = vsel %vm209, %v210, 0
      %v213 = vand.u32 %v204, %v211
      %215 = vmatprep.subr.bf16.mxu0 0
      %216 = vmatpush1.bf16.msra.mxu0 0
      %217 = vmatprep.subr.bf16.mxu0 0
      %218 = vmatpush1.bf16.msra.mxu0 0
      %219 = vmatprep.subr.bf16.mxu0 0
      %220 = vmatpush1.bf16.msra.mxu0 0
      %221 = vmatprep.subr.bf16.mxu0 0
      %222 = vmatpush1.bf16.msra.mxu0 0
      %223 = vmatprep.subr.bf16.mxu0 0
      %224 = vmatpush1.bf16.msra.mxu0 0
      %225 = vmatprep.subr.bf16.mxu0 0
      %226 = vmatpush1.bf16.msra.mxu0 0
      %227 = vmatprep.subr.bf16.mxu0 0
      %228 = vmatpush1.bf16.msra.mxu0 0
      %229 = vmatprep.subr.bf16.mxu0 0
      %230 = vmatpush1.bf16.msra.mxu0 %v213
      %231 = vmatprep.subr.bf16.mxu0 0
      %232 = vmatpush2.bf16.msra.mxu0 0
      %233 = vmatprep.subr.bf16.mxu0 0
      %234 = vmatpush2.bf16.msra.mxu0 0
      %235 = vmatprep.subr.bf16.mxu0 0
      %236 = vmatpush2.bf16.msra.mxu0 0
      %237 = vmatprep.subr.bf16.mxu0 0
      %238 = vmatpush2.bf16.msra.mxu0 0
      %239 = vmatprep.subr.bf16.mxu0 0
      %240 = vmatpush2.bf16.msra.mxu0 0
      %241 = vmatprep.subr.bf16.mxu0 0
      %242 = vmatpush2.bf16.msra.mxu0 0
      %243 = vmatprep.subr.bf16.mxu0 0
      %244 = vmatpush2.bf16.msra.mxu0 0
      %245 = vmatprep.subr.bf16.mxu0 0
      %246 = vmatpush2.bf16.msra.mxu0 0
      %247 = vmatprep.mubr.bf16.mxu0 0
      %248 = vmatmul.mubr.bf16.gmra.mxu0 %v206
      %v249 = vpop.f32.mrf.mxu0
      %v250 = vadd.f32 0.0, %v249
      %v251 = vpop.f32.mrf.mxu0
      %v252 = vpop.f32.mrf.mxu0
      %v253 = vadd.f32 0.0, %v252
      %v254 = vpop.f32.mrf.mxu0
      %255 = vdwg.mxu0
      %256 = vrot.lane.b32.xlu0 %v124, 112
      %v257 = vpop.permute.xlu0 %256
      %258 = vrot.lane.b32.xlu0 %v124, 48
      %v259 = vpop.permute.xlu0 %258
      %v261 = vsel %vm127, %v257, 0
      %v264 = vsel %vm127, %v259, 0
      %266 = vmatprep.subr.bf16.mxu0 0
      %267 = vmatpush1.bf16.xpose.msra.mxu0 0
      %268 = vmatprep.subr.bf16.mxu0 0
      %269 = vmatpush1.bf16.xpose.msra.mxu0 0
      %270 = vmatprep.subr.bf16.mxu0 0
      %271 = vmatpush1.bf16.xpose.msra.mxu0 0
      %272 = vmatprep.subr.bf16.mxu0 0
      %273 = vmatpush1.bf16.xpose.msra.mxu0 0
      %274 = vmatprep.subr.bf16.mxu0 0
      %275 = vmatpush1.bf16.xpose.msra.mxu0 0
      %276 = vmatprep.subr.bf16.mxu0 0
      %277 = vmatpush1.bf16.xpose.msra.mxu0 0
      %278 = vmatprep.subr.bf16.mxu0 0
      %279 = vmatpush1.bf16.xpose.msra.mxu0 0
      %280 = vmatprep.subr.bf16.mxu0 0
      %281 = vmatpush1.bf16.xpose.msra.mxu0 %v264
      %282 = vmatprep.subr.bf16.mxu0 0
      %283 = vmatpush2.bf16.xpose.msra.mxu0 0
      %284 = vmatprep.subr.bf16.mxu0 0
      %285 = vmatpush2.bf16.xpose.msra.mxu0 0
      %286 = vmatprep.subr.bf16.mxu0 0
      %287 = vmatpush2.bf16.xpose.msra.mxu0 0
      %288 = vmatprep.subr.bf16.mxu0 0
      %289 = vmatpush2.bf16.xpose.msra.mxu0 0
      %290 = vmatprep.subr.bf16.mxu0 0
      %291 = vmatpush2.bf16.xpose.msra.mxu0 0
      %292 = vmatprep.subr.bf16.mxu0 0
      %293 = vmatpush2.bf16.xpose.msra.mxu0 0
      %294 = vmatprep.subr.bf16.mxu0 0
      %295 = vmatpush2.bf16.xpose.msra.mxu0 0
      %296 = vmatprep.subr.bf16.mxu0 0
      %297 = vmatpush2.bf16.xpose.msra.mxu0 0
      %298 = vmatprep.mubr.bf16.mxu0 0
      %299 = vmatmul.mubr.bf16.gmra.mxu0 %v261
      %v300 = vpop.f32.mrf.mxu0
      %v301 = vadd.f32 0.0, %v300
      %v302 = vpop.f32.mrf.mxu0
      %v303 = vpop.f32.mrf.mxu0
      %v304 = vadd.f32 0.0, %v303
      %v305 = vpop.f32.mrf.mxu0
      %306 = vdwg.mxu0
      %v307 = vmul.f32 %v301, 0.25
      %v308 = vmul.f32 %v304, 0.25
      %v309 = vsel %vm177, %v307, -inf
      %310 = vmax.xlane.f32.xlu0 %v309
      %v311 = vpop.xlane.xlu0 %310
      %v312 = vsel %vm181, %v308, -inf
      %313 = vmax.xlane.f32.xlu0 %v312
      %v314 = vpop.xlane.xlu0 %313
      %v315 = vsub.f32 %v307, %v311
      %v316 = vsub.f32 %v308, %v314
      %v317 = vmul.f32 %v315, 1.442695
      %v318 = vpow.pop %v317
      %v319 = vmul.f32 %v316, 1.442695
      %v320 = vpow.pop %v319
      %v321 = vsel %vm177, %v318, 0.0
      %322 = vadd.xlane.f32.xlu0 %v321
      %v323 = vpop.xlane.xlu0 %322
      %v324 = vsel %vm181, %v320, 0.0
      %325 = vadd.xlane.f32.xlu0 %v324
      %v326 = vpop.xlane.xlu0 %325
      %v327 = vrcp.pop %v323
      %v328 = vrcp.pop %v326
      %v329 = vmul.f32 %v318, %v327
      %v330 = vmul.f32 %v320, %v328
      %v331 = vpack.c.bf16 %v330, %v329
      %332 = vrot.lane.b32.xlu0 %v204, 112
      %v333 = vpop.permute.xlu0 %332
      %v335 = vsel %vm177, %v331, 0
      %v338 = vand.u32 %v333, %v211
      %340 = vmatprep.subr.bf16.mxu0 0
      %341 = vmatpush1.bf16.msra.mxu0 0
      %342 = vmatprep.subr.bf16.mxu0 0
      %343 = vmatpush1.bf16.msra.mxu0 0
      %344 = vmatprep.subr.bf16.mxu0 0
      %345 = vmatpush1.bf16.msra.mxu0 0
      %346 = vmatprep.subr.bf16.mxu0 0
      %347 = vmatpush1.bf16.msra.mxu0 0
      %348 = vmatprep.subr.bf16.mxu0 0
      %349 = vmatpush1.bf16.msra.mxu0 0
      %350 = vmatprep.subr.bf16.mxu0 0
      %351 = vmatpush1.bf16.msra.mxu0 0
      %352 = vmatprep.subr.bf16.mxu0 0
      %353 = vmatpush1.bf16.msra.mxu0 0
      %354 = vmatprep.subr.bf16.mxu0 0
      %355 = vmatpush1.bf16.msra.mxu0 %v338
      %356 = vmatprep.subr.bf16.mxu0 0
      %357 = vmatpush2.bf16.msra.mxu0 0
      %358 = vmatprep.subr.bf16.mxu0 0
      %359 = vmatpush2.bf16.msra.mxu0 0
      %360 = vmatprep.subr.bf16.mxu0 0
      %361 = vmatpush2.bf16.msra.mxu0 0
      %362 = vmatprep.subr.bf16.mxu0 0
      %363 = vmatpush2.bf16.msra.mxu0 0
      %364 = vmatprep.subr.bf16.mxu0 0
      %365 = vmatpush2.bf16.msra.mxu0 0
      %366 = vmatprep.subr.bf16.mxu0 0
      %367 = vmatpush2.bf16.msra.mxu0 0
      %368 = vmatprep.subr.bf16.mxu0 0
      %369 = vmatpush2.bf16.msra.mxu0 0
      %370 = vmatprep.subr.bf16.mxu0 0
      %371 = vmatpush2.bf16.msra.mxu0 0
      %372 = vmatprep.mubr.bf16.mxu0 0
      %373 = vmatmul.mubr.bf16.gmra.mxu0 %v335
      %v374 = vpop.f32.mrf.mxu0
      %v375 = vadd.f32 0.0, %v374
      %v376 = vpop.f32.mrf.mxu0
      %v377 = vpop.f32.mrf.mxu0
      %v378 = vadd.f32 0.0, %v377
      %v379 = vpop.f32.mrf.mxu0
      %380 = vdwg.mxu0
      %381 = vrot.lane.b32.xlu0 %v124, 96
      %v382 = vpop.permute.xlu0 %381
      %383 = vrot.lane.b32.xlu0 %v124, 32
      %v384 = vpop.permute.xlu0 %383
      %v386 = vsel %vm127, %v382, 0
      %v389 = vsel %vm127, %v384, 0
      %391 = vmatprep.subr.bf16.mxu0 0
      %392 = vmatpush1.bf16.xpose.msra.mxu0 0
      %393 = vmatprep.subr.bf16.mxu0 0
      %394 = vmatpush1.bf16.xpose.msra.mxu0 0
      %395 = vmatprep.subr.bf16.mxu0 0
      %396 = vmatpush1.bf16.xpose.msra.mxu0 0
      %397 = vmatprep.subr.bf16.mxu0 0
      %398 = vmatpush1.bf16.xpose.msra.mxu0 0
      %399 = vmatprep.subr.bf16.mxu0 0
      %400 = vmatpush1.bf16.xpose.msra.mxu0 0
      %401 = vmatprep.subr.bf16.mxu0 0
      %402 = vmatpush1.bf16.xpose.msra.mxu0 0
      %403 = vmatprep.subr.bf16.mxu0 0
      %404 = vmatpush1.bf16.xpose.msra.mxu0 0
      %405 = vmatprep.subr.bf16.mxu0 0
      %406 = vmatpush1.bf16.xpose.msra.mxu0 %v389
      %407 = vmatprep.subr.bf16.mxu0 0
      %408 = vmatpush2.bf16.xpose.msra.mxu0 0
      %409 = vmatprep.subr.bf16.mxu0 0
      %410 = vmatpush2.bf16.xpose.msra.mxu0 0
      %411 = vmatprep.subr.bf16.mxu0 0
      %412 = vmatpush2.bf16.xpose.msra.mxu0 0
      %413 = vmatprep.subr.bf16.mxu0 0
      %414 = vmatpush2.bf16.xpose.msra.mxu0 0
      %415 = vmatprep.subr.bf16.mxu0 0
      %416 = vmatpush2.bf16.xpose.msra.mxu0 0
      %417 = vmatprep.subr.bf16.mxu0 0
      %418 = vmatpush2.bf16.xpose.msra.mxu0 0
      %419 = vmatprep.subr.bf16.mxu0 0
      %420 = vmatpush2.bf16.xpose.msra.mxu0 0
      %421 = vmatprep.subr.bf16.mxu0 0
      %422 = vmatpush2.bf16.xpose.msra.mxu0 0
      %423 = vmatprep.mubr.bf16.mxu0 0
      %424 = vmatmul.mubr.bf16.gmra.mxu0 %v386
      %v425 = vpop.f32.mrf.mxu0
      %v426 = vadd.f32 0.0, %v425
      %v427 = vpop.f32.mrf.mxu0
      %v428 = vpop.f32.mrf.mxu0
      %v429 = vadd.f32 0.0, %v428
      %v430 = vpop.f32.mrf.mxu0
      %431 = vdwg.mxu0
      %v432 = vmul.f32 %v426, 0.25
      %v433 = vmul.f32 %v429, 0.25
      %v434 = vsel %vm177, %v432, -inf
      %435 = vmax.xlane.f32.xlu0 %v434
      %v436 = vpop.xlane.xlu0 %435
      %v437 = vsel %vm181, %v433, -inf
      %438 = vmax.xlane.f32.xlu0 %v437
      %v439 = vpop.xlane.xlu0 %438
      %v440 = vsub.f32 %v432, %v436
      %v441 = vsub.f32 %v433, %v439
      %v442 = vmul.f32 %v440, 1.442695
      %v443 = vpow.pop %v442
      %v444 = vmul.f32 %v441, 1.442695
      %v445 = vpow.pop %v444
      %v446 = vsel %vm177, %v443, 0.0
      %447 = vadd.xlane.f32.xlu0 %v446
      %v448 = vpop.xlane.xlu0 %447
      %v449 = vsel %vm181, %v445, 0.0
      %450 = vadd.xlane.f32.xlu0 %v449
      %v451 = vpop.xlane.xlu0 %450
      %v452 = vrcp.pop %v448
      %v453 = vrcp.pop %v451
      %v454 = vmul.f32 %v443, %v452
      %v455 = vmul.f32 %v445, %v453
      %v456 = vpack.c.bf16 %v455, %v454
      %457 = vrot.lane.b32.xlu0 %v204, 96
      %v458 = vpop.permute.xlu0 %457
      %v460 = vsel %vm177, %v456, 0
      %v463 = vand.u32 %v458, %v211
      %465 = vmatprep.subr.bf16.mxu0 0
      %466 = vmatpush1.bf16.msra.mxu0 0
      %467 = vmatprep.subr.bf16.mxu0 0
      %468 = vmatpush1.bf16.msra.mxu0 0
      %469 = vmatprep.subr.bf16.mxu0 0
      %470 = vmatpush1.bf16.msra.mxu0 0
      %471 = vmatprep.subr.bf16.mxu0 0
      %472 = vmatpush1.bf16.msra.mxu0 0
      %473 = vmatprep.subr.bf16.mxu0 0
      %474 = vmatpush1.bf16.msra.mxu0 0
      %475 = vmatprep.subr.bf16.mxu0 0
      %476 = vmatpush1.bf16.msra.mxu0 0
      %477 = vmatprep.subr.bf16.mxu0 0
      %478 = vmatpush1.bf16.msra.mxu0 0
      %479 = vmatprep.subr.bf16.mxu0 0
      %480 = vmatpush1.bf16.msra.mxu0 %v463
      %481 = vmatprep.subr.bf16.mxu0 0
      %482 = vmatpush2.bf16.msra.mxu0 0
      %483 = vmatprep.subr.bf16.mxu0 0
      %484 = vmatpush2.bf16.msra.mxu0 0
      %485 = vmatprep.subr.bf16.mxu0 0
      %486 = vmatpush2.bf16.msra.mxu0 0
      %487 = vmatprep.subr.bf16.mxu0 0
      %488 = vmatpush2.bf16.msra.mxu0 0
      %489 = vmatprep.subr.bf16.mxu0 0
      %490 = vmatpush2.bf16.msra.mxu0 0
      %491 = vmatprep.subr.bf16.mxu0 0
      %492 = vmatpush2.bf16.msra.mxu0 0
      %493 = vmatprep.subr.bf16.mxu0 0
      %494 = vmatpush2.bf16.msra.mxu0 0
      %495 = vmatprep.subr.bf16.mxu0 0
      %496 = vmatpush2.bf16.msra.mxu0 0
      %497 = vmatprep.mubr.bf16.mxu0 0
      %498 = vmatmul.mubr.bf16.gmra.mxu0 %v460
      %v499 = vpop.f32.mrf.mxu0
      %v500 = vadd.f32 0.0, %v499
      %v501 = vpop.f32.mrf.mxu0
      %v502 = vpop.f32.mrf.mxu0
      %v503 = vadd.f32 0.0, %v502
      %v504 = vpop.f32.mrf.mxu0
      %505 = vdwg.mxu0
      %506 = vrot.lane.b32.xlu0 %v124, 80
      %v507 = vpop.permute.xlu0 %506
      %508 = vrot.lane.b32.xlu0 %v124, 16
      %v509 = vpop.permute.xlu0 %508
      %v511 = vsel %vm127, %v507, 0
      %v514 = vsel %vm127, %v509, 0
      %516 = vmatprep.subr.bf16.mxu0 0
      %517 = vmatpush1.bf16.xpose.msra.mxu0 0
      %518 = vmatprep.subr.bf16.mxu0 0
      %519 = vmatpush1.bf16.xpose.msra.mxu0 0
      %520 = vmatprep.subr.bf16.mxu0 0
      %521 = vmatpush1.bf16.xpose.msra.mxu0 0
      %522 = vmatprep.subr.bf16.mxu0 0
      %523 = vmatpush1.bf16.xpose.msra.mxu0 0
      %524 = vmatprep.subr.bf16.mxu0 0
      %525 = vmatpush1.bf16.xpose.msra.mxu0 0
      %526 = vmatprep.subr.bf16.mxu0 0
      %527 = vmatpush1.bf16.xpose.msra.mxu0 0
      %528 = vmatprep.subr.bf16.mxu0 0
      %529 = vmatpush1.bf16.xpose.msra.mxu0 0
      %530 = vmatprep.subr.bf16.mxu0 0
      %531 = vmatpush1.bf16.xpose.msra.mxu0 %v514
      %532 = vmatprep.subr.bf16.mxu0 0
      %533 = vmatpush2.bf16.xpose.msra.mxu0 0
      %534 = vmatprep.subr.bf16.mxu0 0
      %535 = vmatpush2.bf16.xpose.msra.mxu0 0
      %536 = vmatprep.subr.bf16.mxu0 0
      %537 = vmatpush2.bf16.xpose.msra.mxu0 0
      %538 = vmatprep.subr.bf16.mxu0 0
      %539 = vmatpush2.bf16.xpose.msra.mxu0 0
      %540 = vmatprep.subr.bf16.mxu0 0
      %541 = vmatpush2.bf16.xpose.msra.mxu0 0
      %542 = vmatprep.subr.bf16.mxu0 0
      %543 = vmatpush2.bf16.xpose.msra.mxu0 0
      %544 = vmatprep.subr.bf16.mxu0 0
      %545 = vmatpush2.bf16.xpose.msra.mxu0 0
      %546 = vmatprep.subr.bf16.mxu0 0
      %547 = vmatpush2.bf16.xpose.msra.mxu0 0
      %548 = vmatprep.mubr.bf16.mxu0 0
      %549 = vmatmul.mubr.bf16.gmra.mxu0 %v511
      %v550 = vpop.f32.mrf.mxu0
      %v551 = vadd.f32 0.0, %v550
      %v552 = vpop.f32.mrf.mxu0
      %v553 = vpop.f32.mrf.mxu0
      %v554 = vadd.f32 0.0, %v553
      %v555 = vpop.f32.mrf.mxu0
      %556 = vdwg.mxu0
      %v557 = vmul.f32 %v551, 0.25
      %v558 = vmul.f32 %v554, 0.25
      %v559 = vsel %vm177, %v557, -inf
      %560 = vmax.xlane.f32.xlu0 %v559
      %v561 = vpop.xlane.xlu0 %560
      %v562 = vsel %vm181, %v558, -inf
      %563 = vmax.xlane.f32.xlu0 %v562
      %v564 = vpop.xlane.xlu0 %563
      %v565 = vsub.f32 %v557, %v561
      %v566 = vsub.f32 %v558, %v564
      %v567 = vmul.f32 %v565, 1.442695
      %v568 = vpow.pop %v567
      %v569 = vmul.f32 %v566, 1.442695
      %v570 = vpow.pop %v569
      %v571 = vsel %vm177, %v568, 0.0
      %572 = vadd.xlane.f32.xlu0 %v571
      %v573 = vpop.xlane.xlu0 %572
      %v574 = vsel %vm181, %v570, 0.0
      %575 = vadd.xlane.f32.xlu0 %v574
      %v576 = vpop.xlane.xlu0 %575
      %v577 = vrcp.pop %v573
      %v578 = vrcp.pop %v576
      %v579 = vmul.f32 %v568, %v577
      %v580 = vmul.f32 %v570, %v578
      %v581 = vpack.c.bf16 %v580, %v579
      %582 = vrot.lane.b32.xlu0 %v204, 80
      %v583 = vpop.permute.xlu0 %582
      %v585 = vsel %vm177, %v581, 0
      %v588 = vand.u32 %v583, %v211
      %590 = vmatprep.subr.bf16.mxu0 0
      %591 = vmatpush1.bf16.msra.mxu0 0
      %592 = vmatprep.subr.bf16.mxu0 0
      %593 = vmatpush1.bf16.msra.mxu0 0
      %594 = vmatprep.subr.bf16.mxu0 0
      %595 = vmatpush1.bf16.msra.mxu0 0
      %596 = vmatprep.subr.bf16.mxu0 0
      %597 = vmatpush1.bf16.msra.mxu0 0
      %598 = vmatprep.subr.bf16.mxu0 0
      %599 = vmatpush1.bf16.msra.mxu0 0
      %600 = vmatprep.subr.bf16.mxu0 0
      %601 = vmatpush1.bf16.msra.mxu0 0
      %602 = vmatprep.subr.bf16.mxu0 0
      %603 = vmatpush1.bf16.msra.mxu0 0
      %604 = vmatprep.subr.bf16.mxu0 0
      %605 = vmatpush1.bf16.msra.mxu0 %v588
      %606 = vmatprep.subr.bf16.mxu0 0
      %607 = vmatpush2.bf16.msra.mxu0 0
      %608 = vmatprep.subr.bf16.mxu0 0
      %609 = vmatpush2.bf16.msra.mxu0 0
      %610 = vmatprep.subr.bf16.mxu0 0
      %611 = vmatpush2.bf16.msra.mxu0 0
      %612 = vmatprep.subr.bf16.mxu0 0
      %613 = vmatpush2.bf16.msra.mxu0 0
      %614 = vmatprep.subr.bf16.mxu0 0
      %615 = vmatpush2.bf16.msra.mxu0 0
      %616 = vmatprep.subr.bf16.mxu0 0
      %617 = vmatpush2.bf16.msra.mxu0 0
      %618 = vmatprep.subr.bf16.mxu0 0
      %619 = vmatpush2.bf16.msra.mxu0 0
      %620 = vmatprep.subr.bf16.mxu0 0
      %621 = vmatpush2.bf16.msra.mxu0 0
      %622 = vmatprep.mubr.bf16.mxu0 0
      %623 = vmatmul.mubr.bf16.gmra.mxu0 %v585
      %v624 = vpop.f32.mrf.mxu0
      %v625 = vadd.f32 0.0, %v624
      %v626 = vpop.f32.mrf.mxu0
      %v627 = vpop.f32.mrf.mxu0
      %v628 = vadd.f32 0.0, %v627
      %v629 = vpop.f32.mrf.mxu0
      %630 = vdwg.mxu0
      %633 = vrot.lane.b32.xlu0 %v375, 16
      %v634 = vpop.permute.xlu0 %633
      %635 = vrot.lane.b32.xlu0 %v378, 16
      %v636 = vpop.permute.xlu0 %635
      %641 = vrot.lane.b32.xlu0 %v500, 32
      %v642 = vpop.permute.xlu0 %641
      %643 = vrot.lane.b32.xlu0 %v503, 32
      %v644 = vpop.permute.xlu0 %643
      %649 = vrot.lane.b32.xlu0 %v625, 48
      %v650 = vpop.permute.xlu0 %649
      %651 = vrot.lane.b32.xlu0 %v628, 48
      %v652 = vpop.permute.xlu0 %651
      %v655 = vsel %vm127, %v250, %v634
      %v656 = vsel %vm127, %v253, %v636
      %vm657 = vcmask 261120
      %v658 = vsel %vm657, %v655, %v642
      %v659 = vsel %vm657, %v656, %v644
      %vm660 = vcmask 392192
      %v661 = vsel %vm660, %v658, %v650
      %v662 = vsel %vm660, %v659, %v652
      %v663 = vpack.c.bf16 %v662, %v661
      %v665 = vunpack.c.l.b16 %v663
      %v666 = vunpack.c.h.b16 %v663
      %v667 = vpack.c.b16 %v665, %v665
      %v668 = vpack.c.b16 %v666, %v666
      %vm671 = vcmask 519168
      %672 = vst.msk [vmem:[%s116] sm:$0xf] %vm671, %v667
      %vm673 = vcmask 516096
      %vm674 = vsmask.f32 256
      %vm675 = vmand %vm673, %vm674
      %v676 = vld [vmem:[%s116 + $0x4] sm:$0x1]
      %v677 = vsel %vm675, %v668, %v676
      %678 = vst [vmem:[%s116 + $0x4] sm:$0x1] %v677
      %p679 = scmp.lt.s32.totalorder %s12, 3
      %s680 = scalar_select %p679, %s12, 3
      %s681 = smul.addr %s680, 2
      %s682 = smul.addr %s681, 4
      %s683 = scalar_lea.vmem %s1, %s682
      // Predicated region
      $region25: #{transformer_forward.23} parent=23 // pred_check
        %p684 = pneg %p56
      $region26: #{transformer_forward.23} parent=23 // pred_check_branch
        %686 = sbr.rel (%p684) target = $region28
      $region27: #{transformer_forward.23} parent=23 // pred_region
        _
      $region28: #{transformer_forward.23} parent=23 // pred_fallthru
        _
    $region24: #{transformer_forward.23} parent=5 // pred_fallthru
      _
    %p687 = scmp.le.s32.totalorder 2, %s7
    // Predicated region
    $region29: #{transformer_forward.23} parent=5 // pred_check
      %p688 = pneg %p687
    $region30: #{transformer_forward.23} parent=5 // pred_check_branch
      %690 = sbr.rel (%p688) target = $region32
    $region31: #{transformer_forward.23} parent=5 // pred_region
      %s691 = ssub.s32 %s7, 2
      // Predicated region
      $region33: #{transformer_forward.23} parent=31 // pred_check
        %p692 = pneg %p62
      $region34: #{transformer_forward.23} parent=31 // pred_check_branch
        %694 = sbr.rel (%p692) target = $region36
      $region35: #{transformer_forward.23} parent=31 // pred_region
        %p695 = scmp.lt.s32.totalorder %s13, 3
        %s696 = scalar_select %p695, %s13, 3
        %s697 = smul.addr %s696, 2
        %s698 = smul.addr %s697, 4
        %s699 = scalar_lea.vmem %s1, %s698
      $region36: #{transformer_forward.23} parent=31 // pred_fallthru
        _
    $region32: #{transformer_forward.23} parent=5 // pred_fallthru
      _
  $region6: #{transformer_forward.23} parent=0 // loop_footer
    %s11 = sadd.s32 1, %s7
  $region7: #{transformer_forward.23} parent=0 // loop_footer_branch
    %6 = sbr.rel target = $region3
  $region8: #{transformer_forward.23} parent=0 // loop_exit
    _

// kernel: transformer_forward.25
$region0: #{transformer_forward.25}
  #allocation0 [shape = 'u32[]', space=smem, size = 0x4, offset = 0x4, fixed_abs, tag = 'smem constant byte address 0x4 - core index']
  #allocation1 [shape = 'u32[144,128]{1,0:T(1,128)}', space=vmem, size = 0x12000, scoped, tag = 'internal scratch']
  %s0 = inlined_call_operand.vmem [shape: bf16[32,64], index: 0, kind: input, shape index: {}]
  %s1 = inlined_call_operand.vmem [shape: f32[1,64], index: 1, kind: input, shape index: {}]
  %s2 = inlined_call_operand.vmem [shape: f32[1,64], index: 2, kind: input, shape index: {}]
  %s3 = inlined_call_operand.vmem [shape: bf16[64,256], index: 3, kind: input, shape index: {}]
  %s4 = inlined_call_operand.vmem [shape: f32[1,256], index: 4, kind: input, shape index: {}]
  %s5 = inlined_call_operand.vmem [shape: bf16[32,256], index: 5, kind: output, shape index: {}]
  %s6 = sld [smem:[#allocation0]]
  $region30: #{transformer_forward.25} parent=0
    _
  %s8 = ssub.s32 1, %s6
  %s9 = scalar_select 0, %s8, %s6
  // Predicated region
  $region2: #{transformer_forward.25} parent=0 // pred_check
    _
  $region3: #{transformer_forward.25} parent=0 // pred_check_branch
    %11 = sbr.rel (0) target = $region5
  $region4: #{transformer_forward.25} parent=0 // pred_region
    _
  $region5: #{transformer_forward.25} parent=0 // pred_fallthru
    _
  // Predicated region
  $region6: #{transformer_forward.25} parent=0 // pred_check
    _
  $region7: #{transformer_forward.25} parent=0 // pred_check_branch
    %13 = sbr.rel (0) target = $region9
  $region8: #{transformer_forward.25} parent=0 // pred_region
    _
  $region9: #{transformer_forward.25} parent=0 // pred_fallthru
    _
  // Predicated region
  $region10: #{transformer_forward.25} parent=0 // pred_check
    _
  $region11: #{transformer_forward.25} parent=0 // pred_check_branch
    %15 = sbr.rel (0) target = $region13
  $region12: #{transformer_forward.25} parent=0 // pred_region
    _
  $region13: #{transformer_forward.25} parent=0 // pred_fallthru
    _
  // Predicated region
  $region14: #{transformer_forward.25} parent=0 // pred_check
    _
  $region15: #{transformer_forward.25} parent=0 // pred_check_branch
    %17 = sbr.rel (0) target = $region17
  $region16: #{transformer_forward.25} parent=0 // pred_region
    _
  $region17: #{transformer_forward.25} parent=0 // pred_fallthru
    _
  // Predicated region
  $region18: #{transformer_forward.25} parent=0 // pred_check
    _
  $region19: #{transformer_forward.25} parent=0 // pred_check_branch
    %19 = sbr.rel (0) target = $region21
  $region20: #{transformer_forward.25} parent=0 // pred_region
    _
  $region21: #{transformer_forward.25} parent=0 // pred_fallthru
    _
  %v21 = vld [vmem:[%s0] sm:$0xf]
  %v22 = vld [vmem:[%s0 + $0x4] sm:$0xf]
  %v23 = vld [vmem:[%s0 + $0x8] sm:$0xf]
  %v24 = vld [vmem:[%s0 + $0xc] sm:$0xf]
  %v25 = vunpack.c.l.bf16 %v21
  %v26 = vunpack.c.l.bf16 %v22
  %v27 = vunpack.c.l.bf16 %v23
  %v28 = vunpack.c.l.bf16 %v24
  %vm29 = vcmask 523264
  %v30 = vsel %vm29, %v25, 0.0
  %31 = vadd.xlane.f32.xlu0 %v30
  %v32 = vpop.xlane.xlu0 %31
  %v33 = vsel %vm29, %v26, 0.0
  %34 = vadd.xlane.f32.xlu0 %v33
  %v35 = vpop.xlane.xlu0 %34
  %v36 = vsel %vm29, %v27, 0.0
  %37 = vadd.xlane.f32.xlu0 %v36
  %v38 = vpop.xlane.xlu0 %37
  %v39 = vsel %vm29, %v28, 0.0
  %40 = vadd.xlane.f32.xlu0 %v39
  %v41 = vpop.xlane.xlu0 %40
  %v42 = vrcp.pop 64.0
  %v43 = vmul.f32 %v32, %v42
  %v44 = vmul.f32 %v35, %v42
  %v45 = vmul.f32 %v38, %v42
  %v46 = vmul.f32 %v41, %v42
  %v47 = vsub.f32 %v25, %v43
  %v48 = vsub.f32 %v26, %v44
  %v49 = vsub.f32 %v27, %v45
  %v50 = vsub.f32 %v28, %v46
  %v51 = vmul.f32 %v47, %v47
  %v52 = vmul.f32 %v48, %v48
  %v53 = vmul.f32 %v49, %v49
  %v54 = vmul.f32 %v50, %v50
  %v55 = vsel %vm29, %v51, 0.0
  %56 = vadd.xlane.f32.xlu0 %v55
  %v57 = vpop.xlane.xlu0 %56
  %v58 = vsel %vm29, %v52, 0.0
  %59 = vadd.xlane.f32.xlu0 %v58
  %v60 = vpop.xlane.xlu0 %59
  %v61 = vsel %vm29, %v53, 0.0
  %62 = vadd.xlane.f32.xlu0 %v61
  %v63 = vpop.xlane.xlu0 %62
  %v64 = vsel %vm29, %v54, 0.0
  %65 = vadd.xlane.f32.xlu0 %v64
  %v66 = vpop.xlane.xlu0 %65
  %v67 = vmul.f32 %v57, %v42
  %v68 = vmul.f32 %v60, %v42
  %v69 = vmul.f32 %v63, %v42
  %v70 = vmul.f32 %v66, %v42
  %v71 = vadd.f32 %v67, 1e-05
  %v72 = vadd.f32 %v68, 1e-05
  %v73 = vadd.f32 %v69, 1e-05
  %v74 = vadd.f32 %v70, 1e-05
  %v75 = vrsqrt.pop %v71
  %v76 = vrsqrt.pop %v72
  %v77 = vrsqrt.pop %v73
  %v78 = vrsqrt.pop %v74
  %v79 = vmul.f32 %v47, %v75
  %v80 = vmul.f32 %v48, %v76
  %v81 = vmul.f32 %v49, %v77
  %v82 = vmul.f32 %v50, %v78
  %v83 = vld [vmem:[%s1] sm:$0x1]
  %v85 = vlaneseq
  %v86 = vshrl.u32 %v85, 7
  %v87 = vsub.s32 0, %v86
  %v88 = vrot.slane %v83, %v87
  %v90 = vmul.f32 %v79, %v88
  %v91 = vmul.f32 %v80, %v88
  %v92 = vmul.f32 %v81, %v88
  %v93 = vmul.f32 %v82, %v88
  %v94 = vld [vmem:[%s2] sm:$0x1]
  %v96 = vlaneseq
  %v97 = vshrl.u32 %v96, 7
  %v98 = vsub.s32 0, %v97
  %v99 = vrot.slane %v94, %v98
  %v101 = vadd.f32 %v90, %v99
  %v102 = vadd.f32 %v91, %v99
  %v103 = vadd.f32 %v92, %v99
  %v104 = vadd.f32 %v93, %v99
  %v105 = vpack.c.bf16 %v102, %v101
  %v106 = vpack.c.bf16 %v104, %v103
  %v107 = vld [vmem:[%s3] sm:$0xff]
  %v108 = vld [vmem:[%s3 + $0x8] sm:$0xff]
  %v109 = vld [vmem:[%s3 + $0x10] sm:$0xff]
  %v110 = vld [vmem:[%s3 + $0x18] sm:$0xff]
  %v111 = vld [vmem:[%s3 + $0x20] sm:$0xff]
  %v112 = vld [vmem:[%s3 + $0x28] sm:$0xff]
  %v113 = vld [vmem:[%s3 + $0x30] sm:$0xff]
  %v114 = vld [vmem:[%s3 + $0x38] sm:$0xff]
  %v115 = vld [vmem:[%s4] sm:$0x3]
  %v117 = vlaneseq
  %v118 = vshrl.u32 %v117, 7
  %v119 = vsub.s32 0, %v118
  %v120 = vrot.slane %v115, %v119
  %v121 = vlaneseq
  %v122 = vshrl.u32 %v121, 7
  %v123 = vsub.s32 1, %v122
  %v124 = vrot.slane %v115, %v123
  %v135 = vunpack.c.l.b16 %v107
  %v136 = vunpack.c.h.b16 %v107
  %v137 = vunpack.c.l.b16 %v108
  %v138 = vunpack.c.h.b16 %v108
  %v139 = vunpack.c.l.b16 %v109
  %v140 = vunpack.c.h.b16 %v109
  %v141 = vunpack.c.l.b16 %v110
  %v142 = vunpack.c.h.b16 %v110
  %v143 = vunpack.c.l.b16 %v111
  %v144 = vunpack.c.h.b16 %v111
  %v145 = vunpack.c.l.b16 %v112
  %v146 = vunpack.c.h.b16 %v112
  %v147 = vunpack.c.l.b16 %v113
  %v148 = vunpack.c.h.b16 %v113
  %v149 = vunpack.c.l.b16 %v114
  %v150 = vunpack.c.h.b16 %v114
  %v151 = vpack.c.b16 %v137, %v135
  %v152 = vpack.c.b16 %v138, %v136
  %v153 = vpack.c.b16 %v141, %v139
  %v154 = vpack.c.b16 %v142, %v140
  %v155 = vpack.c.b16 %v145, %v143
  %v156 = vpack.c.b16 %v146, %v144
  %v157 = vpack.c.b16 %v149, %v147
  %v158 = vpack.c.b16 %v150, %v148
  %v168 = vsel %vm29, %v105, 0
  %v171 = vsel %vm29, %v106, 0
  %173 = vmatprep.subr.bf16.mxu0 0
  %174 = vmatpush1.bf16.msra.mxu0 0
  %175 = vmatprep.subr.bf16.mxu0 0
  %176 = vmatpush1.bf16.msra.mxu0 0
  %177 = vmatprep.subr.bf16.mxu0 0
  %178 = vmatpush1.bf16.msra.mxu0 0
  %179 = vmatprep.subr.bf16.mxu0 0
  %180 = vmatpush1.bf16.msra.mxu0 0
  %181 = vmatprep.subr.bf16.mxu0 %v158
  %182 = vmatpush1.bf16.msra.mxu0 %v157
  %183 = vmatprep.subr.bf16.mxu0 %v156
  %184 = vmatpush1.bf16.msra.mxu0 %v155
  %185 = vmatprep.subr.bf16.mxu0 %v154
  %186 = vmatpush1.bf16.msra.mxu0 %v153
  %187 = vmatprep.subr.bf16.mxu0 %v152
  %188 = vmatpush1.bf16.msra.mxu0 %v151
  %189 = vmatprep.subr.bf16.mxu0 0
  %190 = vmatpush2.bf16.msra.mxu0 0
  %191 = vmatprep.subr.bf16.mxu0 0
  %192 = vmatpush2.bf16.msra.mxu0 0
  %193 = vmatprep.subr.bf16.mxu0 0
  %194 = vmatpush2.bf16.msra.mxu0 0
  %195 = vmatprep.subr.bf16.mxu0 0
  %196 = vmatpush2.bf16.msra.mxu0 0
  %197 = vmatprep.subr.bf16.mxu0 0
  %198 = vmatpush2.bf16.msra.mxu0 0
  %199 = vmatprep.subr.bf16.mxu0 0
  %200 = vmatpush2.bf16.msra.mxu0 0
  %201 = vmatprep.subr.bf16.mxu0 0
  %202 = vmatpush2.bf16.msra.mxu0 0
  %203 = vmatprep.subr.bf16.mxu0 0
  %204 = vmatpush2.bf16.msra.mxu0 0
  %205 = vmatprep.mubr.bf16.mxu0 0
  %206 = vmatmul.mubr.bf16.gmra.mxu0 %v168
  %v207 = vpop.f32.mrf.mxu0
  %v208 = vadd.f32 %v120, %v207
  %v209 = vpop.f32.mrf.mxu0
  %v210 = vadd.f32 %v124, %v209
  %v211 = vpop.f32.mrf.mxu0
  %v212 = vadd.f32 %v120, %v211
  %v213 = vpop.f32.mrf.mxu0
  %v214 = vadd.f32 %v124, %v213
  %215 = vmatprep.mubr.bf16.mxu0 0
  %216 = vmatmul.mubr.bf16.gmra.mxu0 %v171
  %v217 = vpop.f32.mrf.mxu0
  %v218 = vadd.f32 %v120, %v217
  %v219 = vpop.f32.mrf.mxu0
  %v220 = vadd.f32 %v124, %v219
  %v221 = vpop.f32.mrf.mxu0
  %v222 = vadd.f32 %v120, %v221
  %v223 = vpop.f32.mrf.mxu0
  %v224 = vadd.f32 %v124, %v223
  %225 = vdwg.mxu0
  %v226 = vmul.f32 %v208, 1.702
  %v227 = vmul.f32 %v210, 1.702
  %v228 = vmul.f32 %v212, 1.702
  %v229 = vmul.f32 %v214, 1.702
  %v230 = vmul.f32 %v218, 1.702
  %v231 = vmul.f32 %v220, 1.702
  %v232 = vmul.f32 %v222, 1.702
  %v233 = vmul.f32 %v224, 1.702
  %v234 = vxor.u32 %v226, 2147483648
  %v235 = vxor.u32 %v227, 2147483648
  %v236 = vxor.u32 %v228, 2147483648
  %v237 = vxor.u32 %v229, 2147483648
  %v238 = vxor.u32 %v230, 2147483648
  %v239 = vxor.u32 %v231, 2147483648
  %v240 = vxor.u32 %v232, 2147483648
  %v241 = vxor.u32 %v233, 2147483648
  %v242 = vmul.f32 %v234, 1.442695
  %v243 = vpow.pop %v242
  %v244 = vmul.f32 %v235, 1.442695
  %v245 = vpow.pop %v244
  %v246 = vmul.f32 %v236, 1.442695
  %v247 = vpow.pop %v246
  %v248 = vmul.f32 %v237, 1.442695
  %v249 = vpow.pop %v248
  %v250 = vmul.f32 %v238, 1.442695
  %v251 = vpow.pop %v250
  %v252 = vmul.f32 %v239, 1.442695
  %v253 = vpow.pop %v252
  %v254 = vmul.f32 %v240, 1.442695
  %v255 = vpow.pop %v254
  %v256 = vmul.f32 %v241, 1.442695
  %v257 = vpow.pop %v256
  %v258 = vadd.f32 %v243, 1.0
  %v259 = vadd.f32 %v245, 1.0
  %v260 = vadd.f32 %v247, 1.0
  %v261 = vadd.f32 %v249, 1.0
  %v262 = vadd.f32 %v251, 1.0
  %v263 = vadd.f32 %v253, 1.0
  %v264 = vadd.f32 %v255, 1.0
  %v265 = vadd.f32 %v257, 1.0
  %v266 = vrcp.pop %v258
  %v267 = vmul.f32 1.0, %v266
  %v268 = vrcp.pop %v259
  %v269 = vmul.f32 1.0, %v268
  %v270 = vrcp.pop %v260
  %v271 = vmul.f32 1.0, %v270
  %v272 = vrcp.pop %v261
  %v273 = vmul.f32 1.0, %v272
  %v274 = vrcp.pop %v262
  %v275 = vmul.f32 1.0, %v274
  %v276 = vrcp.pop %v263
  %v277 = vmul.f32 1.0, %v276
  %v278 = vrcp.pop %v264
  %v279 = vmul.f32 1.0, %v278
  %v280 = vrcp.pop %v265
  %v281 = vmul.f32 1.0, %v280
  %v282 = vmul.f32 %v208, %v267
  %v283 = vmul.f32 %v210, %v269
  %v284 = vmul.f32 %v212, %v271
  %v285 = vmul.f32 %v214, %v273
  %v286 = vmul.f32 %v218, %v275
  %v287 = vmul.f32 %v220, %v277
  %v288 = vmul.f32 %v222, %v279
  %v289 = vmul.f32 %v224, %v281
  %v290 = vpack.c.bf16 %v284, %v282
  %v291 = vpack.c.bf16 %v285, %v283
  %v292 = vpack.c.bf16 %v288, %v286
  %v293 = vpack.c.bf16 %v289, %v287
  %v298 = vunpack.c.l.b16 %v290
  %v299 = vunpack.c.l.b16 %v291
  %v300 = vunpack.c.h.b16 %v290
  %v301 = vunpack.c.h.b16 %v291
  %v302 = vunpack.c.l.b16 %v292
  %v303 = vunpack.c.l.b16 %v293
  %v304 = vunpack.c.h.b16 %v292
  %v305 = vunpack.c.h.b16 %v293
  %v306 = vpack.c.b16 %v299, %v298
  %v307 = vpack.c.b16 %v301, %v300
  %v308 = vpack.c.b16 %v303, %v302
  %v309 = vpack.c.b16 %v305, %v304
  %314 = vst [vmem:[%s5] sm:$0xff] %v306
  %315 = vst [vmem:[%s5 + $0x8] sm:$0xff] %v307
  %316 = vst [vmem:[%s5 + $0x10] sm:$0xff] %v308
  %317 = vst [vmem:[%s5 + $0x18] sm:$0xff] %v309
  // Predicated region
  $region22: #{transformer_forward.25} parent=0 // pred_check
    _
  $region23: #{transformer_forward.25} parent=0 // pred_check_branch
    %319 = sbr.rel (0) target = $region25
  $region24: #{transformer_forward.25} parent=0 // pred_region
    _
  $region25: #{transformer_forward.25} parent=0 // pred_fallthru
    _
  // Predicated region
  $region26: #{transformer_forward.25} parent=0 // pred_check
    _
  $region27: #{transformer_forward.25} parent=0 // pred_check_branch
    %321 = sbr.rel (0) target = $region29
  $region28: #{transformer_forward.25} parent=0 // pred_region
    _
  $region29: #{transformer_forward.25} parent=0 // pred_fallthru
    _

// kernel: transformer_forward.26
$region0: #{transformer_forward.26}
  #allocation0 [shape = 'u32[]', space=smem, size = 0x4, offset = 0x4, fixed_abs, tag = 'smem constant byte address 0x4 - core index']
  #allocation1 [shape = 'u32[144,128]{1,0:T(1,128)}', space=vmem, size = 0x12000, scoped, tag = 'internal scratch']
  #allocation2 [shape = 'f32[32,64]{1,0:T(8,128)}', space=vmem, size = 0x4000, scoped, tag = 'scratch operand']
  %s0 = inlined_call_operand.vmem [shape: bf16[32,256], index: 0, kind: input, shape index: {}]
  %s1 = inlined_call_operand.vmem [shape: bf16[256,64], index: 1, kind: input, shape index: {}]
  %s2 = inlined_call_operand.vmem [shape: f32[1,64], index: 2, kind: input, shape index: {}]
  %s3 = inlined_call_operand.vmem [shape: bf16[32,64], index: 3, kind: input, shape index: {}]
  %s4 = inlined_call_operand.vmem [shape: bf16[32,64], index: 4, kind: output, shape index: {}]
  %s5 = sld [smem:[#allocation0]]
  $region34: #{transformer_forward.26} parent=0
    _
  %s7 = ssub.s32 1, %s5
  %s8 = scalar_select 0, %s7, %s5
  // Predicated region
  $region2: #{transformer_forward.26} parent=0 // pred_check
    _
  $region3: #{transformer_forward.26} parent=0 // pred_check_branch
    %10 = sbr.rel (0) target = $region5
  $region4: #{transformer_forward.26} parent=0 // pred_region
    _
  $region5: #{transformer_forward.26} parent=0 // pred_fallthru
    _
  // Predicated region
  $region6: #{transformer_forward.26} parent=0 // pred_check
    _
  $region7: #{transformer_forward.26} parent=0 // pred_check_branch
    %12 = sbr.rel (0) target = $region9
  $region8: #{transformer_forward.26} parent=0 // pred_region
    _
  $region9: #{transformer_forward.26} parent=0 // pred_fallthru
    _
  // Predicated region
  $region10: #{transformer_forward.26} parent=0 // pred_check
    _
  $region11: #{transformer_forward.26} parent=0 // pred_check_branch
    %14 = sbr.rel (0) target = $region13
  $region12: #{transformer_forward.26} parent=0 // pred_region
    _
  $region13: #{transformer_forward.26} parent=0 // pred_fallthru
    _
  // Predicated region
  $region14: #{transformer_forward.26} parent=0 // pred_check
    _
  $region15: #{transformer_forward.26} parent=0 // pred_check_branch
    %16 = sbr.rel (0) target = $region17
  $region16: #{transformer_forward.26} parent=0 // pred_region
    _
  $region17: #{transformer_forward.26} parent=0 // pred_fallthru
    _
  %p18 = scmp.eq.s32.totalorder 0, 0
  // Predicated region
  $region18: #{transformer_forward.26} parent=0 // pred_check
    %p19 = pneg %p18
  $region19: #{transformer_forward.26} parent=0 // pred_check_branch
    %21 = sbr.rel (%p19) target = $region21
  $region20: #{transformer_forward.26} parent=0 // pred_region
    %vm22 = vcmask 523264
    %23 = vst.msk [vmem:[#allocation2] sm:$0xff] %vm22, 0.0
    %24 = vst.msk [vmem:[#allocation2 + $0x8] sm:$0xff] %vm22, 0.0
    %25 = vst.msk [vmem:[#allocation2 + $0x10] sm:$0xff] %vm22, 0.0
    %26 = vst.msk [vmem:[#allocation2 + $0x18] sm:$0xff] %vm22, 0.0
  $region21: #{transformer_forward.26} parent=0 // pred_fallthru
    _
  %v27 = vld [vmem:[#allocation2] sm:$0xff]
  %v28 = vld [vmem:[#allocation2 + $0x8] sm:$0xff]
  %v29 = vld [vmem:[#allocation2 + $0x10] sm:$0xff]
  %v30 = vld [vmem:[#allocation2 + $0x18] sm:$0xff]
  %v31 = vld [vmem:[%s0] sm:$0xff]
  %v32 = vld [vmem:[%s0 + $0x8] sm:$0xff]
  %v33 = vld [vmem:[%s0 + $0x10] sm:$0xff]
  %v34 = vld [vmem:[%s0 + $0x18] sm:$0xff]
  %v35 = vld [vmem:[%s1] sm:$0xf]
  %v36 = vld [vmem:[%s1 + $0x4] sm:$0xf]
  %v37 = vld [vmem:[%s1 + $0x8] sm:$0xf]
  %v38 = vld [vmem:[%s1 + $0xc] sm:$0xf]
  %v39 = vld [vmem:[%s1 + $0x10] sm:$0xf]
  %v40 = vld [vmem:[%s1 + $0x14] sm:$0xf]
  %v41 = vld [vmem:[%s1 + $0x18] sm:$0xf]
  %v42 = vld [vmem:[%s1 + $0x1c] sm:$0xf]
  %v43 = vld [vmem:[%s1 + $0x20] sm:$0xf]
  %v44 = vld [vmem:[%s1 + $0x24] sm:$0xf]
  %v45 = vld [vmem:[%s1 + $0x28] sm:$0xf]
  %v46 = vld [vmem:[%s1 + $0x2c] sm:$0xf]
  %v47 = vld [vmem:[%s1 + $0x30] sm:$0xf]
  %v48 = vld [vmem:[%s1 + $0x34] sm:$0xf]
  %v49 = vld [vmem:[%s1 + $0x38] sm:$0xf]
  %v50 = vld [vmem:[%s1 + $0x3c] sm:$0xf]
  %v51 = vld [vmem:[%s1 + $0x40] sm:$0xf]
  %v52 = vld [vmem:[%s1 + $0x44] sm:$0xf]
  %v53 = vld [vmem:[%s1 + $0x48] sm:$0xf]
  %v54 = vld [vmem:[%s1 + $0x4c] sm:$0xf]
  %v55 = vld [vmem:[%s1 + $0x50] sm:$0xf]
  %v56 = vld [vmem:[%s1 + $0x54] sm:$0xf]
  %v57 = vld [vmem:[%s1 + $0x58] sm:$0xf]
  %v58 = vld [vmem:[%s1 + $0x5c] sm:$0xf]
  %v59 = vld [vmem:[%s1 + $0x60] sm:$0xf]
  %v60 = vld [vmem:[%s1 + $0x64] sm:$0xf]
  %v61 = vld [vmem:[%s1 + $0x68] sm:$0xf]
  %v62 = vld [vmem:[%s1 + $0x6c] sm:$0xf]
  %v63 = vld [vmem:[%s1 + $0x70] sm:$0xf]
  %v64 = vld [vmem:[%s1 + $0x74] sm:$0xf]
  %v65 = vld [vmem:[%s1 + $0x78] sm:$0xf]
  %v66 = vld [vmem:[%s1 + $0x7c] sm:$0xf]
  %v71 = vunpack.c.l.b16 %v31
  %v72 = vunpack.c.h.b16 %v31
  %v73 = vunpack.c.l.b16 %v32
  %v74 = vunpack.c.h.b16 %v32
  %v75 = vunpack.c.l.b16 %v33
  %v76 = vunpack.c.h.b16 %v33
  %v77 = vunpack.c.l.b16 %v34
  %v78 = vunpack.c.h.b16 %v34
  %v79 = vpack.c.b16 %v73, %v71
  %v80 = vpack.c.b16 %v74, %v72
  %v81 = vpack.c.b16 %v77, %v75
  %v82 = vpack.c.b16 %v78, %v76
  %v119 = vunpack.c.l.b16 %v35
  %v120 = vunpack.c.l.b16 %v36
  %v121 = vunpack.c.l.b16 %v37
  %v122 = vunpack.c.l.b16 %v38
  %v123 = vunpack.c.l.b16 %v39
  %v124 = vunpack.c.l.b16 %v40
  %v125 = vunpack.c.l.b16 %v41
  %v126 = vunpack.c.l.b16 %v42
  %v127 = vunpack.c.l.b16 %v43
  %v128 = vunpack.c.l.b16 %v44
  %v129 = vunpack.c.l.b16 %v45
  %v130 = vunpack.c.l.b16 %v46
  %v131 = vunpack.c.l.b16 %v47
  %v132 = vunpack.c.l.b16 %v48
  %v133 = vunpack.c.l.b16 %v49
  %v134 = vunpack.c.l.b16 %v50
  %v135 = vunpack.c.l.b16 %v51
  %v136 = vunpack.c.l.b16 %v52
  %v137 = vunpack.c.l.b16 %v53
  %v138 = vunpack.c.l.b16 %v54
  %v139 = vunpack.c.l.b16 %v55
  %v140 = vunpack.c.l.b16 %v56
  %v141 = vunpack.c.l.b16 %v57
  %v142 = vunpack.c.l.b16 %v58
  %v143 = vunpack.c.l.b16 %v59
  %v144 = vunpack.c.l.b16 %v60
  %v145 = vunpack.c.l.b16 %v61
  %v146 = vunpack.c.l.b16 %v62
  %v147 = vunpack.c.l.b16 %v63
  %v148 = vunpack.c.l.b16 %v64
  %v149 = vunpack.c.l.b16 %v65
  %v150 = vunpack.c.l.b16 %v66
  %v151 = vpack.c.b16 %v120, %v119
  %v152 = vpack.c.b16 %v122, %v121
  %v153 = vpack.c.b16 %v124, %v123
  %v154 = vpack.c.b16 %v126, %v125
  %v155 = vpack.c.b16 %v128, %v127
  %v156 = vpack.c.b16 %v130, %v129
  %v157 = vpack.c.b16 %v132, %v131
  %v158 = vpack.c.b16 %v134, %v133
  %v159 = vpack.c.b16 %v136, %v135
  %v160 = vpack.c.b16 %v138, %v137
  %v161 = vpack.c.b16 %v140, %v139
  %v162 = vpack.c.b16 %v142, %v141
  %v163 = vpack.c.b16 %v144, %v143
  %v164 = vpack.c.b16 %v146, %v145
  %v165 = vpack.c.b16 %v148, %v147
  %v166 = vpack.c.b16 %v150, %v149
  %183 = vmatprep.subr.bf16.mxu0 0
  %184 = vmatpush1.bf16.msra.mxu0 %v158
  %185 = vmatprep.subr.bf16.mxu0 0
  %186 = vmatpush1.bf16.msra.mxu0 %v157
  %187 = vmatprep.subr.bf16.mxu0 0
  %188 = vmatpush1.bf16.msra.mxu0 %v156
  %189 = vmatprep.subr.bf16.mxu0 0
  %190 = vmatpush1.bf16.msra.mxu0 %v155
  %191 = vmatprep.subr.bf16.mxu0 0
  %192 = vmatpush1.bf16.msra.mxu0 %v154
  %193 = vmatprep.subr.bf16.mxu0 0
  %194 = vmatpush1.bf16.msra.mxu0 %v153
  %195 = vmatprep.subr.bf16.mxu0 0
  %196 = vmatpush1.bf16.msra.mxu0 %v152
  %197 = vmatprep.subr.bf16.mxu0 0
  %198 = vmatpush1.bf16.msra.mxu0 %v151
  %199 = vmatprep.subr.bf16.mxu0 0
  %200 = vmatpush2.bf16.msra.mxu0 %v166
  %201 = vmatprep.subr.bf16.mxu0 0
  %202 = vmatpush2.bf16.msra.mxu0 %v165
  %203 = vmatprep.subr.bf16.mxu0 0
  %204 = vmatpush2.bf16.msra.mxu0 %v164
  %205 = vmatprep.subr.bf16.mxu0 0
  %206 = vmatpush2.bf16.msra.mxu0 %v163
  %207 = vmatprep.subr.bf16.mxu0 0
  %208 = vmatpush2.bf16.msra.mxu0 %v162
  %209 = vmatprep.subr.bf16.mxu0 0
  %210 = vmatpush2.bf16.msra.mxu0 %v161
  %211 = vmatprep.subr.bf16.mxu0 0
  %212 = vmatpush2.bf16.msra.mxu0 %v160
  %213 = vmatprep.subr.bf16.mxu0 0
  %214 = vmatpush2.bf16.msra.mxu0 %v159
  %215 = vmatprep.mubr.bf16.mxu0 %v80
  %216 = vmatmul.mubr.bf16.gmra.mxu0 %v79
  %v217 = vpop.f32.mrf.mxu0
  %v218 = vadd.f32 0.0, %v217
  %v219 = vpop.f32.mrf.mxu0
  %v220 = vpop.f32.mrf.mxu0
  %v221 = vadd.f32 0.0, %v220
  %v222 = vpop.f32.mrf.mxu0
  %223 = vmatprep.mubr.bf16.mxu0 %v82
  %224 = vmatmul.mubr.bf16.gmra.mxu0 %v81
  %v225 = vpop.f32.mrf.mxu0
  %v226 = vadd.f32 0.0, %v225
  %v227 = vpop.f32.mrf.mxu0
  %v228 = vpop.f32.mrf.mxu0
  %v229 = vadd.f32 0.0, %v228
  %v230 = vpop.f32.mrf.mxu0
  %231 = vdwg.mxu0
  %v232 = vadd.f32 %v27, %v218
  %v233 = vadd.f32 %v28, %v221
  %v234 = vadd.f32 %v29, %v226
  %v235 = vadd.f32 %v30, %v229
  %vm236 = vcmask 523264
  %237 = vst.msk [vmem:[#allocation2] sm:$0xff] %vm236, %v232
  %238 = vst.msk [vmem:[#allocation2 + $0x8] sm:$0xff] %vm236, %v233
  %239 = vst.msk [vmem:[#allocation2 + $0x10] sm:$0xff] %vm236, %v234
  %240 = vst.msk [vmem:[#allocation2 + $0x18] sm:$0xff] %vm236, %v235
  // Predicated region
  $region22: #{transformer_forward.26} parent=0 // pred_check
    %p241 = pneg %p18
  $region23: #{transformer_forward.26} parent=0 // pred_check_branch
    %243 = sbr.rel (%p241) target = $region25
  $region24: #{transformer_forward.26} parent=0 // pred_region
    %v244 = vld [vmem:[#allocation2] sm:$0xff]
    %v245 = vld [vmem:[#allocation2 + $0x8] sm:$0xff]
    %v246 = vld [vmem:[#allocation2 + $0x10] sm:$0xff]
    %v247 = vld [vmem:[#allocation2 + $0x18] sm:$0xff]
    %v248 = vld [vmem:[%s2] sm:$0x1]
    %v250 = vlaneseq
    %v251 = vshrl.u32 %v250, 7
    %v252 = vsub.s32 0, %v251
    %v253 = vrot.slane %v248, %v252
    %v255 = vadd.f32 %v244, %v253
    %v256 = vadd.f32 %v245, %v253
    %v257 = vadd.f32 %v246, %v253
    %v258 = vadd.f32 %v247, %v253
    %v259 = vld [vmem:[%s3] sm:$0xf]
    %v260 = vld [vmem:[%s3 + $0x4] sm:$0xf]
    %v261 = vld [vmem:[%s3 + $0x8] sm:$0xf]
    %v262 = vld [vmem:[%s3 + $0xc] sm:$0xf]
    %v263 = vunpack.c.l.bf16 %v259
    %v264 = vunpack.c.l.bf16 %v260
    %v265 = vunpack.c.l.bf16 %v261
    %v266 = vunpack.c.l.bf16 %v262
    %v267 = vadd.f32 %v255, %v263
    %v268 = vadd.f32 %v256, %v264
    %v269 = vadd.f32 %v257, %v265
    %v270 = vadd.f32 %v258, %v266
    %v271 = vpack.c.bf16 %v268, %v267
    %v272 = vpack.c.bf16 %v270, %v269
    %v275 = vunpack.c.l.b16 %v271
    %v276 = vunpack.c.h.b16 %v271
    %v277 = vunpack.c.l.b16 %v272
    %v278 = vunpack.c.h.b16 %v272
    %v279 = vpack.c.b16 %v275, %v275
    %v280 = vpack.c.b16 %v276, %v276
    %v281 = vpack.c.b16 %v277, %v277
    %v282 = vpack.c.b16 %v278, %v278
    %vm287 = vcmask 519168
    %288 = vst.msk [vmem:[%s4] sm:$0xf] %vm287, %v279
    %289 = vst.msk [vmem:[%s4 + $0x4] sm:$0xf] %vm287, %v280
    %290 = vst.msk [vmem:[%s4 + $0x8] sm:$0xf] %vm287, %v281
    %291 = vst.msk [vmem:[%s4 + $0xc] sm:$0xf] %vm287, %v282
  $region25: #{transformer_forward.26} parent=0 // pred_fallthru
    _
  // Predicated region
  $region26: #{transformer_forward.26} parent=0 // pred_check
    _
  $region27: #{transformer_forward.26} parent=0 // pred_check_branch
    %293 = sbr.rel (0) target = $region29
  $region28: #{transformer_forward.26} parent=0 // pred_region
    _
  $region29: #{transformer_forward.26} parent=0 // pred_fallthru
    _
  // Predicated region
  $region30: #{transformer_forward.26} parent=0 // pred_check
    _
  $region31: #{transformer_forward.26} parent=0 // pred_check_branch
    %295 = sbr.rel (0) target = $region33
  $region32: #{transformer_forward.26} parent=0 // pred_region
    _
  $region33: #{transformer_forward.26} parent=0 // pred_fallthru
    _

</llo_original>
